<compile_context>
chip_gen: v6e
topology: v6e:2x2x1
jax: 0.10.0
libtpu: 0.0.40
codegen_flags: <defaults>
</compile_context>

<pallas_src>
import math

import jax
import jax.numpy as jnp
from jax.experimental import pallas as pl
from jax.experimental.pallas import tpu as pltpu

# ---------------------------------------------------------------------------
# Small, forward-consistent hyperparameters (VOCAB has 3 specials + 26 + '_')
# ---------------------------------------------------------------------------
VOCAB_SIZE = 30
SEP_IDX = 1
D_MODEL = 32
NHEAD = 4
HEAD_DIM = D_MODEL // NHEAD
NUM_LAYERS = 2
DIM_FF = 64
MAX_SEQ_LEN = 8                       # total seq = 2*MAX_SEQ_LEN + 1 = 17
SEQ_TOTAL = 2 * MAX_SEQ_LEN + 1
LN_EPS = 1e-5

VPAD = 128                            # lane-dense decoder output width
WBAND = 128                           # 128-aligned column band per weight matrix
W_BANDS_PER_LAYER = 4                 # Wqkv | WoT | W1T | W2
W_COLS = NUM_LAYERS * W_BANDS_PER_LAYER * WBAND + VPAD   # 1152
B_ROWS_PER_LAYER = 8                  # bqkv, bo, ln1w, ln1b, b1, b2, ln2w, ln2b
B_ROWS = NUM_LAYERS * B_ROWS_PER_LAYER + 1               # + decoder bias row


# ---------------------------------------------------------------------------
# Kernel helpers (traced inside the fused Pallas kernel)
# ---------------------------------------------------------------------------
def _layernorm(h, w, b):
    mu = jnp.mean(h, axis=-1, keepdims=True)
    var = jnp.mean(jnp.square(h - mu), axis=-1, keepdims=True)
    return (h - mu) * jax.lax.rsqrt(var + LN_EPS) * w + b


def _mm(a, w):
    """a @ w (2-D), f32 MXU with f32 accumulation."""
    return jnp.dot(a, w, preferred_element_type=jnp.float32)


def _mmT(a, w):
    """a @ w.T (2-D), f32 MXU with f32 accumulation."""
    return jax.lax.dot_general(a, w, (((1,), (1,)), ((), ())),
                               preferred_element_type=jnp.float32)


# ---------------------------------------------------------------------------
# Single fused kernel: embedding + pos-add + NUM_LAYERS encoder layers + decoder
# ---------------------------------------------------------------------------
def hangman_fused_kernel(ids_ref, emb_ref, pos_ref, w_ref, b_ref, out_ref):
    BS = ids_ref.shape[0]             # B * S (stacked batch)
    S = SEQ_TOTAL
    B = BS // S
    D = D_MODEL

    # ---- embedding lookup fused as one-hot matmul (no XLA gather) ----
    ids = ids_ref[...]                                               # (BS,1) i32
    vocab_iota = jax.lax.broadcasted_iota(jnp.int32, (BS, VOCAB_SIZE), 1)
    onehot = (ids == vocab_iota).astype(jnp.float32)                 # (BS,V)
    x = _mm(onehot, emb_ref[...]) + pos_ref[...]                     # (BS,D) f32

    # ---- block-diagonal mask: stacked batch rows never attend across ----
    row = jax.lax.broadcasted_iota(jnp.int32, (BS, BS), 0)
    col = jax.lax.broadcasted_iota(jnp.int32, (BS, BS), 1)
    same = None
    for b in range(B):
        blk = ((row >= b * S) & (row < (b + 1) * S)
               & (col >= b * S) & (col < (b + 1) * S))
        same = blk if same is None else (same | blk)
    mask_bias = jnp.where(same, 0.0, -1e9)                           # (BS,BS)

    b_slab = b_ref[...]                                              # (B_ROWS,128)

    for li in range(NUM_LAYERS):
        wc = li * W_BANDS_PER_LAYER * WBAND
        br = li * B_ROWS_PER_LAYER
        wqkv = w_ref[:, wc:wc + 3 * D]                               # (D,3D)
        woT = w_ref[:, wc + WBAND:wc + WBAND + D]                    # (D,D)
        w1T = w_ref[:, wc + 2 * WBAND:wc + 2 * WBAND + DIM_FF]       # (D,FF)
        w2 = w_ref[:, wc + 3 * WBAND:wc + 3 * WBAND + DIM_FF]        # (D,FF)
        bqkv = b_slab[br + 0:br + 1, :3 * D]
        bo = b_slab[br + 1:br + 2, :D]
        ln1w = b_slab[br + 2:br + 3, :D]
        ln1b = b_slab[br + 3:br + 4, :D]
        b1 = b_slab[br + 4:br + 5, :DIM_FF]
        b2 = b_slab[br + 5:br + 6, :D]
        ln2w = b_slab[br + 6:br + 7, :D]
        ln2b = b_slab[br + 7:br + 8, :D]

        # --- fused QKV projection (1/sqrt(hd) folded into Wq/bq at init) ---
        qkv = _mm(x, wqkv) + bqkv                                    # (BS,3D)
        q, k, v = qkv[:, :D], qkv[:, D:2 * D], qkv[:, 2 * D:]

        # --- per-head attention over the stacked batch, block-diag masked ---
        ctx_heads = []
        for h in range(NHEAD):
            lo = h * HEAD_DIM
            qh = q[:, lo:lo + HEAD_DIM]
            kh = k[:, lo:lo + HEAD_DIM]
            vh = v[:, lo:lo + HEAD_DIM]
            s = _mmT(qh, kh) + mask_bias                             # (BS,BS)
            s = s - jnp.max(s, axis=-1, keepdims=True)
            e = jnp.exp(s)
            p = e * pl.reciprocal(jnp.sum(e, axis=-1, keepdims=True),
                                  approx=True)
            ctx_heads.append(_mm(p, vh))                             # (BS,hd)
        ctx = jnp.concatenate(ctx_heads, axis=-1)                    # (BS,D)

        # --- fused attention out-proj + Add&Norm + FFN + Add&Norm ---
        attn = _mm(ctx, woT) + bo
        h1 = _layernorm(x + attn, ln1w, ln1b)
        f = jnp.maximum(_mm(h1, w1T) + b1, 0.0)
        f = _mmT(f, w2) + b2
        x = _layernorm(h1 + f, ln2w, ln2b)

    # --- decoder on the first MAX_SEQ_LEN tokens of each sequence ---
    wc = NUM_LAYERS * W_BANDS_PER_LAYER * WBAND
    wdecT = w_ref[:, wc:wc + VPAD]                                   # (D,VPAD)
    bdec = b_slab[NUM_LAYERS * B_ROWS_PER_LAYER:
                  NUM_LAYERS * B_ROWS_PER_LAYER + 1, :]              # (1,VPAD)
    dec_in = jnp.concatenate(
        [x[b * S:b * S + MAX_SEQ_LEN] for b in range(B)], axis=0)    # (B*T,D)
    out_ref[...] = _mm(dec_in, wdecT) + bdec                         # (B*T,VPAD)


# ---------------------------------------------------------------------------
# Deterministic parameter construction (PyTorch shapes, packed into 2 slabs)
# ---------------------------------------------------------------------------
def init_params(key):
    D, FF, V = D_MODEL, DIM_FF, VOCAB_SIZE
    k_emb, k_pos, k_dec, k_layers = jax.random.split(key, 4)
    embedding = jax.random.normal(k_emb, (V, D), jnp.float32) * 0.05
    pos_encoder = jax.random.normal(k_pos, (SEQ_TOTAL, D), jnp.float32) * 0.05
    kd = jax.random.split(k_dec, 2)
    dec_w = jax.random.normal(kd[0], (V, D), jnp.float32) * 0.05     # (V,D)
    dec_b = jax.random.normal(kd[1], (V,), jnp.float32) * 0.02

    w_slab = jnp.zeros((D, W_COLS), jnp.float32)
    b_slab = jnp.zeros((B_ROWS, 128), jnp.float32)
    scale = 1.0 / math.sqrt(HEAD_DIM)

    for li, lk in enumerate(jax.random.split(k_layers, NUM_LAYERS)):
        ks = jax.random.split(lk, 8)
        in_proj_w = jax.random.normal(ks[0], (3 * D, D), jnp.float32) * 0.05
        in_proj_b = jax.random.normal(ks[1], (3 * D,), jnp.float32) * 0.02
        wo = jax.random.normal(ks[2], (D, D), jnp.float32) * 0.05
        bo = jax.random.normal(ks[3], (D,), jnp.float32) * 0.02
        w1 = jax.random.normal(ks[4], (FF, D), jnp.float32) * 0.05
        b1 = jax.random.normal(ks[5], (FF,), jnp.float32) * 0.02
        w2 = jax.random.normal(ks[6], (D, FF), jnp.float32) * 0.05
        b2 = jax.random.normal(ks[7], (D,), jnp.float32) * 0.02
        ln1w = jnp.ones((D,), jnp.float32)
        ln1b = jnp.zeros((D,), jnp.float32)
        ln2w = jnp.ones((D,), jnp.float32)
        ln2b = jnp.zeros((D,), jnp.float32)

        # x @ Wqkv form; fold the attention scale into the q columns / bias
        wqkv = in_proj_w.T                                           # (D,3D)
        wqkv = wqkv.at[:, :D].multiply(scale)
        bqkv = in_proj_b.at[:D].multiply(scale)

        wc = li * W_BANDS_PER_LAYER * WBAND
        w_slab = w_slab.at[:, wc:wc + 3 * D].set(wqkv)
        w_slab = w_slab.at[:, wc + WBAND:wc + WBAND + D].set(wo.T)
        w_slab = w_slab.at[:, wc + 2 * WBAND:wc + 2 * WBAND + FF].set(w1.T)
        w_slab = w_slab.at[:, wc + 3 * WBAND:wc + 3 * WBAND + FF].set(w2)

        br = li * B_ROWS_PER_LAYER
        b_slab = b_slab.at[br + 0, :3 * D].set(bqkv)
        b_slab = b_slab.at[br + 1, :D].set(bo)
        b_slab = b_slab.at[br + 2, :D].set(ln1w)
        b_slab = b_slab.at[br + 3, :D].set(ln1b)
        b_slab = b_slab.at[br + 4, :FF].set(b1)
        b_slab = b_slab.at[br + 5, :D].set(b2)
        b_slab = b_slab.at[br + 6, :D].set(ln2w)
        b_slab = b_slab.at[br + 7, :D].set(ln2b)

    wc = NUM_LAYERS * W_BANDS_PER_LAYER * WBAND
    w_slab = w_slab.at[:, wc:wc + V].set(dec_w.T)                    # lane-dense pad
    b_slab = b_slab.at[NUM_LAYERS * B_ROWS_PER_LAYER, :V].set(dec_b)

    return {"embedding": embedding, "pos_encoder": pos_encoder,
            "w_slab": w_slab, "b_slab": b_slab}


# ---------------------------------------------------------------------------
# Full forward: token concat is XLA glue; everything else (embedding gather,
# pos add, both encoder layers, decoder) runs inside ONE Pallas kernel.
# ---------------------------------------------------------------------------
@jax.jit
def hangman_forward(pattern_input, guess_input, params):
    B = pattern_input.shape[0]
    sep = jnp.full((B, 1), SEP_IDX, dtype=pattern_input.dtype)
    ids = jnp.concatenate([pattern_input, sep, guess_input], axis=1)  # (B,S)
    S = ids.shape[1]
    assert S == SEQ_TOTAL, (S, SEQ_TOTAL)
    ids_flat = ids.reshape(B * S, 1).astype(jnp.int32)
    pos = jnp.tile(params["pos_encoder"][:S], (B, 1))                 # (B*S,D)

    vmem = pl.BlockSpec(memory_space=pltpu.MemorySpace.VMEM)
    out = pl.pallas_call(
        hangman_fused_kernel,
        out_shape=jax.ShapeDtypeStruct((B * MAX_SEQ_LEN, VPAD), jnp.float32),
        in_specs=[vmem] * 5,
        out_specs=vmem,
        cost_estimate=pl.CostEstimate(
            flops=2_000_000, transcendentals=10_000, bytes_accessed=200_000),
    )(ids_flat, params["embedding"], pos, params["w_slab"], params["b_slab"])
    return out.reshape(B, MAX_SEQ_LEN, VPAD)[:, :, :VOCAB_SIZE]       # (B,T,V)


if __name__ == "__main__":
    key = jax.random.PRNGKey(0)
    k_pat, k_guess, k_params = jax.random.split(key, 3)

    B = 2
    L_PAT = MAX_SEQ_LEN
    L_GUESS = MAX_SEQ_LEN          # total sequence length = 2*MAX_SEQ_LEN + 1 = 17
    pattern_input = jax.random.randint(
        k_pat, (B, L_PAT), 0, VOCAB_SIZE, dtype=jnp.int32)
    guess_input = jax.random.randint(
        k_guess, (B, L_GUESS), 0, VOCAB_SIZE, dtype=jnp.int32)

    params = init_params(k_params)

    out = hangman_forward(pattern_input, guess_input, params)
    out = jax.block_until_ready(out)

    assert out.shape == (B, MAX_SEQ_LEN, VOCAB_SIZE), out.shape
    assert bool(jnp.all(jnp.isfinite(out)))
    print("KERNEL_OK")
</pallas_src>

<mosaic_0001>
module attributes {stable_mosaic.version = 11 : i64} {
  func.func @hangman_fused_kernel(%arg0: memref<34x1xi32, #tpu.memory_space<vmem>>, %arg1: memref<30x32xf32, #tpu.memory_space<vmem>>, %arg2: memref<34x32xf32, #tpu.memory_space<vmem>>, %arg3: memref<32x1152xf32, #tpu.memory_space<vmem>>, %arg4: memref<17x128xf32, #tpu.memory_space<vmem>>, %arg5: memref<16x128xf32, #tpu.memory_space<vmem>>) attributes {dimension_semantics = [], scalar_prefetch = 0 : i64, scratch_operands = 0 : i64, tpu.core_type = #tpu.core_type<tc>} {
    %c0 = arith.constant 0 : index
    %c0_0 = arith.constant 0 : index
    %0 = vector.load %arg0[%c0, %c0_0] : memref<34x1xi32, #tpu.memory_space<vmem>>, vector<34x1xi32>
    %1 = tpu.iota {dimensions = array<i32: 1>} : vector<34x30xi32>
    %2 = vector.broadcast %0 : vector<34x1xi32> to vector<34x30xi32>
    %3 = arith.cmpi eq, %2, %1 : vector<34x30xi32>
    %4 = arith.extui %3 : vector<34x30xi1> to vector<34x30xi32>
    %5 = arith.sitofp %4 : vector<34x30xi32> to vector<34x30xf32>
    %c0_1 = arith.constant 0 : index
    %c0_2 = arith.constant 0 : index
    %6 = vector.load %arg1[%c0_1, %c0_2] : memref<30x32xf32, #tpu.memory_space<vmem>>, vector<30x32xf32>
    %cst = arith.constant dense<0.000000e+00> : vector<34x32xf32>
    %7 = tpu.matmul %5, %6, %cst {dimension_numbers = #tpu.dot_dimension_numbers<[1], [0], [0], [1], [0, 0, 1, 1], [], []>} : vector<34x30xf32>, vector<30x32xf32>, vector<34x32xf32> -> vector<34x32xf32>
    %c0_3 = arith.constant 0 : index
    %c0_4 = arith.constant 0 : index
    %8 = vector.load %arg2[%c0_3, %c0_4] : memref<34x32xf32, #tpu.memory_space<vmem>>, vector<34x32xf32>
    %9 = arith.addf %7, %8 : vector<34x32xf32>
    %10 = tpu.iota {dimensions = array<i32: 0>} : vector<34x34xi32>
    %11 = tpu.iota {dimensions = array<i32: 1>} : vector<34x34xi32>
    %c0_i32 = arith.constant 0 : i32
    %12 = vector.broadcast %c0_i32 : i32 to vector<34x34xi32>
    %13 = arith.cmpi sge, %10, %12 : vector<34x34xi32>
    %c17_i32 = arith.constant 17 : i32
    %14 = vector.broadcast %c17_i32 : i32 to vector<34x34xi32>
    %15 = arith.cmpi slt, %10, %14 : vector<34x34xi32>
    %16 = arith.andi %13, %15 : vector<34x34xi1>
    %c0_i32_5 = arith.constant 0 : i32
    %17 = vector.broadcast %c0_i32_5 : i32 to vector<34x34xi32>
    %18 = arith.cmpi sge, %11, %17 : vector<34x34xi32>
    %19 = arith.andi %16, %18 : vector<34x34xi1>
    %c17_i32_6 = arith.constant 17 : i32
    %20 = vector.broadcast %c17_i32_6 : i32 to vector<34x34xi32>
    %21 = arith.cmpi slt, %11, %20 : vector<34x34xi32>
    %22 = arith.andi %19, %21 : vector<34x34xi1>
    %c17_i32_7 = arith.constant 17 : i32
    %23 = vector.broadcast %c17_i32_7 : i32 to vector<34x34xi32>
    %24 = arith.cmpi sge, %10, %23 : vector<34x34xi32>
    %c34_i32 = arith.constant 34 : i32
    %25 = vector.broadcast %c34_i32 : i32 to vector<34x34xi32>
    %26 = arith.cmpi slt, %10, %25 : vector<34x34xi32>
    %27 = arith.andi %24, %26 : vector<34x34xi1>
    %c17_i32_8 = arith.constant 17 : i32
    %28 = vector.broadcast %c17_i32_8 : i32 to vector<34x34xi32>
    %29 = arith.cmpi sge, %11, %28 : vector<34x34xi32>
    %30 = arith.andi %27, %29 : vector<34x34xi1>
    %c34_i32_9 = arith.constant 34 : i32
    %31 = vector.broadcast %c34_i32_9 : i32 to vector<34x34xi32>
    %32 = arith.cmpi slt, %11, %31 : vector<34x34xi32>
    %33 = arith.andi %30, %32 : vector<34x34xi1>
    %34 = arith.ori %22, %33 : vector<34x34xi1>
    %cst_10 = arith.constant 0.000000e+00 : f32
    %cst_11 = arith.constant -1.000000e+09 : f32
    %35 = vector.broadcast %cst_10 : f32 to vector<34x34xf32>
    %36 = vector.broadcast %cst_11 : f32 to vector<34x34xf32>
    %37 = arith.select %34, %35, %36 : vector<34x34xi1>, vector<34x34xf32>
    %c0_12 = arith.constant 0 : index
    %c0_13 = arith.constant 0 : index
    %38 = vector.load %arg4[%c0_12, %c0_13] : memref<17x128xf32, #tpu.memory_space<vmem>>, vector<17x128xf32>
    %c0_14 = arith.constant 0 : index
    %c0_15 = arith.constant 0 : index
    %39 = vector.load %arg3[%c0_14, %c0_15] : memref<32x1152xf32, #tpu.memory_space<vmem>>, vector<32x96xf32>
    %c0_16 = arith.constant 0 : index
    %c128 = arith.constant 128 : index
    %40 = vector.load %arg3[%c0_16, %c128] : memref<32x1152xf32, #tpu.memory_space<vmem>>, vector<32x32xf32>
    %c0_17 = arith.constant 0 : index
    %c256 = arith.constant 256 : index
    %41 = vector.load %arg3[%c0_17, %c256] : memref<32x1152xf32, #tpu.memory_space<vmem>>, vector<32x64xf32>
    %c0_18 = arith.constant 0 : index
    %c384 = arith.constant 384 : index
    %42 = vector.load %arg3[%c0_18, %c384] : memref<32x1152xf32, #tpu.memory_space<vmem>>, vector<32x64xf32>
    %43 = vector.extract_strided_slice %38 {offsets = [0, 0], sizes = [1, 96], strides = [1, 1]} : vector<17x128xf32> to vector<1x96xf32>
    %44 = vector.extract_strided_slice %38 {offsets = [1, 0], sizes = [1, 32], strides = [1, 1]} : vector<17x128xf32> to vector<1x32xf32>
    %45 = vector.extract_strided_slice %38 {offsets = [2, 0], sizes = [1, 32], strides = [1, 1]} : vector<17x128xf32> to vector<1x32xf32>
    %46 = vector.extract_strided_slice %38 {offsets = [3, 0], sizes = [1, 32], strides = [1, 1]} : vector<17x128xf32> to vector<1x32xf32>
    %47 = vector.extract_strided_slice %38 {offsets = [4, 0], sizes = [1, 64], strides = [1, 1]} : vector<17x128xf32> to vector<1x64xf32>
    %48 = vector.extract_strided_slice %38 {offsets = [5, 0], sizes = [1, 32], strides = [1, 1]} : vector<17x128xf32> to vector<1x32xf32>
    %49 = vector.extract_strided_slice %38 {offsets = [6, 0], sizes = [1, 32], strides = [1, 1]} : vector<17x128xf32> to vector<1x32xf32>
    %50 = vector.extract_strided_slice %38 {offsets = [7, 0], sizes = [1, 32], strides = [1, 1]} : vector<17x128xf32> to vector<1x32xf32>
    %cst_19 = arith.constant dense<0.000000e+00> : vector<34x96xf32>
    %51 = tpu.matmul %9, %39, %cst_19 {dimension_numbers = #tpu.dot_dimension_numbers<[1], [0], [0], [1], [0, 0, 1, 1], [], []>} : vector<34x32xf32>, vector<32x96xf32>, vector<34x96xf32> -> vector<34x96xf32>
    %52 = vector.broadcast %43 : vector<1x96xf32> to vector<34x96xf32>
    %53 = arith.addf %51, %52 : vector<34x96xf32>
    %54 = vector.extract_strided_slice %53 {offsets = [0, 0], sizes = [34, 32], strides = [1, 1]} : vector<34x96xf32> to vector<34x32xf32>
    %55 = vector.extract_strided_slice %53 {offsets = [0, 32], sizes = [34, 32], strides = [1, 1]} : vector<34x96xf32> to vector<34x32xf32>
    %56 = vector.extract_strided_slice %53 {offsets = [0, 64], sizes = [34, 32], strides = [1, 1]} : vector<34x96xf32> to vector<34x32xf32>
    %57 = vector.extract_strided_slice %54 {offsets = [0, 0], sizes = [34, 8], strides = [1, 1]} : vector<34x32xf32> to vector<34x8xf32>
    %58 = vector.extract_strided_slice %55 {offsets = [0, 0], sizes = [34, 8], strides = [1, 1]} : vector<34x32xf32> to vector<34x8xf32>
    %59 = vector.extract_strided_slice %56 {offsets = [0, 0], sizes = [34, 8], strides = [1, 1]} : vector<34x32xf32> to vector<34x8xf32>
    %cst_20 = arith.constant dense<0.000000e+00> : vector<34x34xf32>
    %60 = tpu.matmul %57, %58, %cst_20 {dimension_numbers = #tpu.dot_dimension_numbers<[1], [1], [0], [0], [0, 0, 1, 0], [], []>} : vector<34x8xf32>, vector<34x8xf32>, vector<34x34xf32> -> vector<34x34xf32>
    %61 = arith.addf %60, %37 : vector<34x34xf32>
    %cst_21 = arith.constant dense<0xFF800000> : vector<34xf32>
    %62 = vector.multi_reduction <maximumf>, %61, %cst_21 [1] : vector<34x34xf32> to vector<34xf32>
    %63 = vector.shape_cast %62 : vector<34xf32> to vector<34x1xf32>
    %64 = vector.broadcast %63 : vector<34x1xf32> to vector<34x34xf32>
    %65 = arith.subf %61, %64 : vector<34x34xf32>
    %66 = math.exp %65 : vector<34x34xf32>
    %cst_22 = arith.constant dense<0.000000e+00> : vector<34xf32>
    %67 = vector.multi_reduction <add>, %66, %cst_22 [1] : vector<34x34xf32> to vector<34xf32>
    %68 = vector.shape_cast %67 : vector<34xf32> to vector<34x1xf32>
    %69 = tpu.reciprocal %68 {approx = true} : vector<34x1xf32> -> vector<34x1xf32>
    %70 = vector.broadcast %69 : vector<34x1xf32> to vector<34x34xf32>
    %71 = arith.mulf %66, %70 : vector<34x34xf32>
    %cst_23 = arith.constant dense<0.000000e+00> : vector<34x8xf32>
    %72 = tpu.matmul %71, %59, %cst_23 {dimension_numbers = #tpu.dot_dimension_numbers<[1], [0], [0], [1], [0, 0, 1, 1], [], []>} : vector<34x34xf32>, vector<34x8xf32>, vector<34x8xf32> -> vector<34x8xf32>
    %73 = vector.extract_strided_slice %54 {offsets = [0, 8], sizes = [34, 8], strides = [1, 1]} : vector<34x32xf32> to vector<34x8xf32>
    %74 = vector.extract_strided_slice %55 {offsets = [0, 8], sizes = [34, 8], strides = [1, 1]} : vector<34x32xf32> to vector<34x8xf32>
    %75 = vector.extract_strided_slice %56 {offsets = [0, 8], sizes = [34, 8], strides = [1, 1]} : vector<34x32xf32> to vector<34x8xf32>
    %cst_24 = arith.constant dense<0.000000e+00> : vector<34x34xf32>
    %76 = tpu.matmul %73, %74, %cst_24 {dimension_numbers = #tpu.dot_dimension_numbers<[1], [1], [0], [0], [0, 0, 1, 0], [], []>} : vector<34x8xf32>, vector<34x8xf32>, vector<34x34xf32> -> vector<34x34xf32>
    %77 = arith.addf %76, %37 : vector<34x34xf32>
    %cst_25 = arith.constant dense<0xFF800000> : vector<34xf32>
    %78 = vector.multi_reduction <maximumf>, %77, %cst_25 [1] : vector<34x34xf32> to vector<34xf32>
    %79 = vector.shape_cast %78 : vector<34xf32> to vector<34x1xf32>
    %80 = vector.broadcast %79 : vector<34x1xf32> to vector<34x34xf32>
    %81 = arith.subf %77, %80 : vector<34x34xf32>
    %82 = math.exp %81 : vector<34x34xf32>
    %cst_26 = arith.constant dense<0.000000e+00> : vector<34xf32>
    %83 = vector.multi_reduction <add>, %82, %cst_26 [1] : vector<34x34xf32> to vector<34xf32>
    %84 = vector.shape_cast %83 : vector<34xf32> to vector<34x1xf32>
    %85 = tpu.reciprocal %84 {approx = true} : vector<34x1xf32> -> vector<34x1xf32>
    %86 = vector.broadcast %85 : vector<34x1xf32> to vector<34x34xf32>
    %87 = arith.mulf %82, %86 : vector<34x34xf32>
    %cst_27 = arith.constant dense<0.000000e+00> : vector<34x8xf32>
    %88 = tpu.matmul %87, %75, %cst_27 {dimension_numbers = #tpu.dot_dimension_numbers<[1], [0], [0], [1], [0, 0, 1, 1], [], []>} : vector<34x34xf32>, vector<34x8xf32>, vector<34x8xf32> -> vector<34x8xf32>
    %89 = vector.extract_strided_slice %54 {offsets = [0, 16], sizes = [34, 8], strides = [1, 1]} : vector<34x32xf32> to vector<34x8xf32>
    %90 = vector.extract_strided_slice %55 {offsets = [0, 16], sizes = [34, 8], strides = [1, 1]} : vector<34x32xf32> to vector<34x8xf32>
    %91 = vector.extract_strided_slice %56 {offsets = [0, 16], sizes = [34, 8], strides = [1, 1]} : vector<34x32xf32> to vector<34x8xf32>
    %cst_28 = arith.constant dense<0.000000e+00> : vector<34x34xf32>
    %92 = tpu.matmul %89, %90, %cst_28 {dimension_numbers = #tpu.dot_dimension_numbers<[1], [1], [0], [0], [0, 0, 1, 0], [], []>} : vector<34x8xf32>, vector<34x8xf32>, vector<34x34xf32> -> vector<34x34xf32>
    %93 = arith.addf %92, %37 : vector<34x34xf32>
    %cst_29 = arith.constant dense<0xFF800000> : vector<34xf32>
    %94 = vector.multi_reduction <maximumf>, %93, %cst_29 [1] : vector<34x34xf32> to vector<34xf32>
    %95 = vector.shape_cast %94 : vector<34xf32> to vector<34x1xf32>
    %96 = vector.broadcast %95 : vector<34x1xf32> to vector<34x34xf32>
    %97 = arith.subf %93, %96 : vector<34x34xf32>
    %98 = math.exp %97 : vector<34x34xf32>
    %cst_30 = arith.constant dense<0.000000e+00> : vector<34xf32>
    %99 = vector.multi_reduction <add>, %98, %cst_30 [1] : vector<34x34xf32> to vector<34xf32>
    %100 = vector.shape_cast %99 : vector<34xf32> to vector<34x1xf32>
    %101 = tpu.reciprocal %100 {approx = true} : vector<34x1xf32> -> vector<34x1xf32>
    %102 = vector.broadcast %101 : vector<34x1xf32> to vector<34x34xf32>
    %103 = arith.mulf %98, %102 : vector<34x34xf32>
    %cst_31 = arith.constant dense<0.000000e+00> : vector<34x8xf32>
    %104 = tpu.matmul %103, %91, %cst_31 {dimension_numbers = #tpu.dot_dimension_numbers<[1], [0], [0], [1], [0, 0, 1, 1], [], []>} : vector<34x34xf32>, vector<34x8xf32>, vector<34x8xf32> -> vector<34x8xf32>
    %105 = vector.extract_strided_slice %54 {offsets = [0, 24], sizes = [34, 8], strides = [1, 1]} : vector<34x32xf32> to vector<34x8xf32>
    %106 = vector.extract_strided_slice %55 {offsets = [0, 24], sizes = [34, 8], strides = [1, 1]} : vector<34x32xf32> to vector<34x8xf32>
    %107 = vector.extract_strided_slice %56 {offsets = [0, 24], sizes = [34, 8], strides = [1, 1]} : vector<34x32xf32> to vector<34x8xf32>
    %cst_32 = arith.constant dense<0.000000e+00> : vector<34x34xf32>
    %108 = tpu.matmul %105, %106, %cst_32 {dimension_numbers = #tpu.dot_dimension_numbers<[1], [1], [0], [0], [0, 0, 1, 0], [], []>} : vector<34x8xf32>, vector<34x8xf32>, vector<34x34xf32> -> vector<34x34xf32>
    %109 = arith.addf %108, %37 : vector<34x34xf32>
    %cst_33 = arith.constant dense<0xFF800000> : vector<34xf32>
    %110 = vector.multi_reduction <maximumf>, %109, %cst_33 [1] : vector<34x34xf32> to vector<34xf32>
    %111 = vector.shape_cast %110 : vector<34xf32> to vector<34x1xf32>
    %112 = vector.broadcast %111 : vector<34x1xf32> to vector<34x34xf32>
    %113 = arith.subf %109, %112 : vector<34x34xf32>
    %114 = math.exp %113 : vector<34x34xf32>
    %cst_34 = arith.constant dense<0.000000e+00> : vector<34xf32>
    %115 = vector.multi_reduction <add>, %114, %cst_34 [1] : vector<34x34xf32> to vector<34xf32>
    %116 = vector.shape_cast %115 : vector<34xf32> to vector<34x1xf32>
    %117 = tpu.reciprocal %116 {approx = true} : vector<34x1xf32> -> vector<34x1xf32>
    %118 = vector.broadcast %117 : vector<34x1xf32> to vector<34x34xf32>
    %119 = arith.mulf %114, %118 : vector<34x34xf32>
    %cst_35 = arith.constant dense<0.000000e+00> : vector<34x8xf32>
    %120 = tpu.matmul %119, %107, %cst_35 {dimension_numbers = #tpu.dot_dimension_numbers<[1], [0], [0], [1], [0, 0, 1, 1], [], []>} : vector<34x34xf32>, vector<34x8xf32>, vector<34x8xf32> -> vector<34x8xf32>
    %121 = tpu.concatenate %72, %88, %104, %120 in 1 : vector<34x8xf32>, vector<34x8xf32>, vector<34x8xf32>, vector<34x8xf32> -> vector<34x32xf32>
    %cst_36 = arith.constant dense<0.000000e+00> : vector<34x32xf32>
    %122 = tpu.matmul %121, %40, %cst_36 {dimension_numbers = #tpu.dot_dimension_numbers<[1], [0], [0], [1], [0, 0, 1, 1], [], []>} : vector<34x32xf32>, vector<32x32xf32>, vector<34x32xf32> -> vector<34x32xf32>
    %123 = vector.broadcast %44 : vector<1x32xf32> to vector<34x32xf32>
    %124 = arith.addf %122, %123 : vector<34x32xf32>
    %125 = arith.addf %9, %124 : vector<34x32xf32>
    %cst_37 = arith.constant dense<0.000000e+00> : vector<34xf32>
    %126 = vector.multi_reduction <add>, %125, %cst_37 [1] : vector<34x32xf32> to vector<34xf32>
    %127 = vector.shape_cast %126 : vector<34xf32> to vector<34x1xf32>
    %cst_38 = arith.constant 3.200000e+01 : f32
    %128 = vector.broadcast %cst_38 : f32 to vector<34x1xf32>
    %129 = arith.divf %127, %128 : vector<34x1xf32>
    %130 = vector.broadcast %129 : vector<34x1xf32> to vector<34x32xf32>
    %131 = arith.subf %125, %130 : vector<34x32xf32>
    %132 = arith.mulf %131, %131 : vector<34x32xf32>
    %cst_39 = arith.constant dense<0.000000e+00> : vector<34xf32>
    %133 = vector.multi_reduction <add>, %132, %cst_39 [1] : vector<34x32xf32> to vector<34xf32>
    %134 = vector.shape_cast %133 : vector<34xf32> to vector<34x1xf32>
    %cst_40 = arith.constant 3.200000e+01 : f32
    %135 = vector.broadcast %cst_40 : f32 to vector<34x1xf32>
    %136 = arith.divf %134, %135 : vector<34x1xf32>
    %137 = vector.broadcast %129 : vector<34x1xf32> to vector<34x32xf32>
    %138 = arith.subf %125, %137 : vector<34x32xf32>
    %cst_41 = arith.constant 9.99999974E-6 : f32
    %139 = vector.broadcast %cst_41 : f32 to vector<34x1xf32>
    %140 = arith.addf %136, %139 : vector<34x1xf32>
    %141 = math.rsqrt %140 : vector<34x1xf32>
    %142 = vector.broadcast %141 : vector<34x1xf32> to vector<34x32xf32>
    %143 = arith.mulf %138, %142 : vector<34x32xf32>
    %144 = vector.broadcast %45 : vector<1x32xf32> to vector<34x32xf32>
    %145 = arith.mulf %143, %144 : vector<34x32xf32>
    %146 = vector.broadcast %46 : vector<1x32xf32> to vector<34x32xf32>
    %147 = arith.addf %145, %146 : vector<34x32xf32>
    %cst_42 = arith.constant dense<0.000000e+00> : vector<34x64xf32>
    %148 = tpu.matmul %147, %41, %cst_42 {dimension_numbers = #tpu.dot_dimension_numbers<[1], [0], [0], [1], [0, 0, 1, 1], [], []>} : vector<34x32xf32>, vector<32x64xf32>, vector<34x64xf32> -> vector<34x64xf32>
    %149 = vector.broadcast %47 : vector<1x64xf32> to vector<34x64xf32>
    %150 = arith.addf %148, %149 : vector<34x64xf32>
    %cst_43 = arith.constant 0.000000e+00 : f32
    %151 = vector.broadcast %cst_43 : f32 to vector<34x64xf32>
    %152 = arith.maximumf %150, %151 : vector<34x64xf32>
    %cst_44 = arith.constant dense<0.000000e+00> : vector<34x32xf32>
    %153 = tpu.matmul %152, %42, %cst_44 {dimension_numbers = #tpu.dot_dimension_numbers<[1], [1], [0], [0], [0, 0, 1, 0], [], []>} : vector<34x64xf32>, vector<32x64xf32>, vector<34x32xf32> -> vector<34x32xf32>
    %154 = vector.broadcast %48 : vector<1x32xf32> to vector<34x32xf32>
    %155 = arith.addf %153, %154 : vector<34x32xf32>
    %156 = arith.addf %147, %155 : vector<34x32xf32>
    %cst_45 = arith.constant dense<0.000000e+00> : vector<34xf32>
    %157 = vector.multi_reduction <add>, %156, %cst_45 [1] : vector<34x32xf32> to vector<34xf32>
    %158 = vector.shape_cast %157 : vector<34xf32> to vector<34x1xf32>
    %cst_46 = arith.constant 3.200000e+01 : f32
    %159 = vector.broadcast %cst_46 : f32 to vector<34x1xf32>
    %160 = arith.divf %158, %159 : vector<34x1xf32>
    %161 = vector.broadcast %160 : vector<34x1xf32> to vector<34x32xf32>
    %162 = arith.subf %156, %161 : vector<34x32xf32>
    %163 = arith.mulf %162, %162 : vector<34x32xf32>
    %cst_47 = arith.constant dense<0.000000e+00> : vector<34xf32>
    %164 = vector.multi_reduction <add>, %163, %cst_47 [1] : vector<34x32xf32> to vector<34xf32>
    %165 = vector.shape_cast %164 : vector<34xf32> to vector<34x1xf32>
    %cst_48 = arith.constant 3.200000e+01 : f32
    %166 = vector.broadcast %cst_48 : f32 to vector<34x1xf32>
    %167 = arith.divf %165, %166 : vector<34x1xf32>
    %168 = vector.broadcast %160 : vector<34x1xf32> to vector<34x32xf32>
    %169 = arith.subf %156, %168 : vector<34x32xf32>
    %cst_49 = arith.constant 9.99999974E-6 : f32
    %170 = vector.broadcast %cst_49 : f32 to vector<34x1xf32>
    %171 = arith.addf %167, %170 : vector<34x1xf32>
    %172 = math.rsqrt %171 : vector<34x1xf32>
    %173 = vector.broadcast %172 : vector<34x1xf32> to vector<34x32xf32>
    %174 = arith.mulf %169, %173 : vector<34x32xf32>
    %175 = vector.broadcast %49 : vector<1x32xf32> to vector<34x32xf32>
    %176 = arith.mulf %174, %175 : vector<34x32xf32>
    %177 = vector.broadcast %50 : vector<1x32xf32> to vector<34x32xf32>
    %178 = arith.addf %176, %177 : vector<34x32xf32>
    %c0_50 = arith.constant 0 : index
    %c512 = arith.constant 512 : index
    %179 = vector.load %arg3[%c0_50, %c512] : memref<32x1152xf32, #tpu.memory_space<vmem>>, vector<32x96xf32>
    %c0_51 = arith.constant 0 : index
    %c640 = arith.constant 640 : index
    %180 = vector.load %arg3[%c0_51, %c640] : memref<32x1152xf32, #tpu.memory_space<vmem>>, vector<32x32xf32>
    %c0_52 = arith.constant 0 : index
    %c768 = arith.constant 768 : index
    %181 = vector.load %arg3[%c0_52, %c768] : memref<32x1152xf32, #tpu.memory_space<vmem>>, vector<32x64xf32>
    %c0_53 = arith.constant 0 : index
    %c896 = arith.constant 896 : index
    %182 = vector.load %arg3[%c0_53, %c896] : memref<32x1152xf32, #tpu.memory_space<vmem>>, vector<32x64xf32>
    %183 = vector.extract_strided_slice %38 {offsets = [8, 0], sizes = [1, 96], strides = [1, 1]} : vector<17x128xf32> to vector<1x96xf32>
    %184 = vector.extract_strided_slice %38 {offsets = [9, 0], sizes = [1, 32], strides = [1, 1]} : vector<17x128xf32> to vector<1x32xf32>
    %185 = vector.extract_strided_slice %38 {offsets = [10, 0], sizes = [1, 32], strides = [1, 1]} : vector<17x128xf32> to vector<1x32xf32>
    %186 = vector.extract_strided_slice %38 {offsets = [11, 0], sizes = [1, 32], strides = [1, 1]} : vector<17x128xf32> to vector<1x32xf32>
    %187 = vector.extract_strided_slice %38 {offsets = [12, 0], sizes = [1, 64], strides = [1, 1]} : vector<17x128xf32> to vector<1x64xf32>
    %188 = vector.extract_strided_slice %38 {offsets = [13, 0], sizes = [1, 32], strides = [1, 1]} : vector<17x128xf32> to vector<1x32xf32>
    %189 = vector.extract_strided_slice %38 {offsets = [14, 0], sizes = [1, 32], strides = [1, 1]} : vector<17x128xf32> to vector<1x32xf32>
    %190 = vector.extract_strided_slice %38 {offsets = [15, 0], sizes = [1, 32], strides = [1, 1]} : vector<17x128xf32> to vector<1x32xf32>
    %cst_54 = arith.constant dense<0.000000e+00> : vector<34x96xf32>
    %191 = tpu.matmul %178, %179, %cst_54 {dimension_numbers = #tpu.dot_dimension_numbers<[1], [0], [0], [1], [0, 0, 1, 1], [], []>} : vector<34x32xf32>, vector<32x96xf32>, vector<34x96xf32> -> vector<34x96xf32>
    %192 = vector.broadcast %183 : vector<1x96xf32> to vector<34x96xf32>
    %193 = arith.addf %191, %192 : vector<34x96xf32>
    %194 = vector.extract_strided_slice %193 {offsets = [0, 0], sizes = [34, 32], strides = [1, 1]} : vector<34x96xf32> to vector<34x32xf32>
    %195 = vector.extract_strided_slice %193 {offsets = [0, 32], sizes = [34, 32], strides = [1, 1]} : vector<34x96xf32> to vector<34x32xf32>
    %196 = vector.extract_strided_slice %193 {offsets = [0, 64], sizes = [34, 32], strides = [1, 1]} : vector<34x96xf32> to vector<34x32xf32>
    %197 = vector.extract_strided_slice %194 {offsets = [0, 0], sizes = [34, 8], strides = [1, 1]} : vector<34x32xf32> to vector<34x8xf32>
    %198 = vector.extract_strided_slice %195 {offsets = [0, 0], sizes = [34, 8], strides = [1, 1]} : vector<34x32xf32> to vector<34x8xf32>
    %199 = vector.extract_strided_slice %196 {offsets = [0, 0], sizes = [34, 8], strides = [1, 1]} : vector<34x32xf32> to vector<34x8xf32>
    %cst_55 = arith.constant dense<0.000000e+00> : vector<34x34xf32>
    %200 = tpu.matmul %197, %198, %cst_55 {dimension_numbers = #tpu.dot_dimension_numbers<[1], [1], [0], [0], [0, 0, 1, 0], [], []>} : vector<34x8xf32>, vector<34x8xf32>, vector<34x34xf32> -> vector<34x34xf32>
    %201 = arith.addf %200, %37 : vector<34x34xf32>
    %cst_56 = arith.constant dense<0xFF800000> : vector<34xf32>
    %202 = vector.multi_reduction <maximumf>, %201, %cst_56 [1] : vector<34x34xf32> to vector<34xf32>
    %203 = vector.shape_cast %202 : vector<34xf32> to vector<34x1xf32>
    %204 = vector.broadcast %203 : vector<34x1xf32> to vector<34x34xf32>
    %205 = arith.subf %201, %204 : vector<34x34xf32>
    %206 = math.exp %205 : vector<34x34xf32>
    %cst_57 = arith.constant dense<0.000000e+00> : vector<34xf32>
    %207 = vector.multi_reduction <add>, %206, %cst_57 [1] : vector<34x34xf32> to vector<34xf32>
    %208 = vector.shape_cast %207 : vector<34xf32> to vector<34x1xf32>
    %209 = tpu.reciprocal %208 {approx = true} : vector<34x1xf32> -> vector<34x1xf32>
    %210 = vector.broadcast %209 : vector<34x1xf32> to vector<34x34xf32>
    %211 = arith.mulf %206, %210 : vector<34x34xf32>
    %cst_58 = arith.constant dense<0.000000e+00> : vector<34x8xf32>
    %212 = tpu.matmul %211, %199, %cst_58 {dimension_numbers = #tpu.dot_dimension_numbers<[1], [0], [0], [1], [0, 0, 1, 1], [], []>} : vector<34x34xf32>, vector<34x8xf32>, vector<34x8xf32> -> vector<34x8xf32>
    %213 = vector.extract_strided_slice %194 {offsets = [0, 8], sizes = [34, 8], strides = [1, 1]} : vector<34x32xf32> to vector<34x8xf32>
    %214 = vector.extract_strided_slice %195 {offsets = [0, 8], sizes = [34, 8], strides = [1, 1]} : vector<34x32xf32> to vector<34x8xf32>
    %215 = vector.extract_strided_slice %196 {offsets = [0, 8], sizes = [34, 8], strides = [1, 1]} : vector<34x32xf32> to vector<34x8xf32>
    %cst_59 = arith.constant dense<0.000000e+00> : vector<34x34xf32>
    %216 = tpu.matmul %213, %214, %cst_59 {dimension_numbers = #tpu.dot_dimension_numbers<[1], [1], [0], [0], [0, 0, 1, 0], [], []>} : vector<34x8xf32>, vector<34x8xf32>, vector<34x34xf32> -> vector<34x34xf32>
    %217 = arith.addf %216, %37 : vector<34x34xf32>
    %cst_60 = arith.constant dense<0xFF800000> : vector<34xf32>
    %218 = vector.multi_reduction <maximumf>, %217, %cst_60 [1] : vector<34x34xf32> to vector<34xf32>
    %219 = vector.shape_cast %218 : vector<34xf32> to vector<34x1xf32>
    %220 = vector.broadcast %219 : vector<34x1xf32> to vector<34x34xf32>
    %221 = arith.subf %217, %220 : vector<34x34xf32>
    %222 = math.exp %221 : vector<34x34xf32>
    %cst_61 = arith.constant dense<0.000000e+00> : vector<34xf32>
    %223 = vector.multi_reduction <add>, %222, %cst_61 [1] : vector<34x34xf32> to vector<34xf32>
    %224 = vector.shape_cast %223 : vector<34xf32> to vector<34x1xf32>
    %225 = tpu.reciprocal %224 {approx = true} : vector<34x1xf32> -> vector<34x1xf32>
    %226 = vector.broadcast %225 : vector<34x1xf32> to vector<34x34xf32>
    %227 = arith.mulf %222, %226 : vector<34x34xf32>
    %cst_62 = arith.constant dense<0.000000e+00> : vector<34x8xf32>
    %228 = tpu.matmul %227, %215, %cst_62 {dimension_numbers = #tpu.dot_dimension_numbers<[1], [0], [0], [1], [0, 0, 1, 1], [], []>} : vector<34x34xf32>, vector<34x8xf32>, vector<34x8xf32> -> vector<34x8xf32>
    %229 = vector.extract_strided_slice %194 {offsets = [0, 16], sizes = [34, 8], strides = [1, 1]} : vector<34x32xf32> to vector<34x8xf32>
    %230 = vector.extract_strided_slice %195 {offsets = [0, 16], sizes = [34, 8], strides = [1, 1]} : vector<34x32xf32> to vector<34x8xf32>
    %231 = vector.extract_strided_slice %196 {offsets = [0, 16], sizes = [34, 8], strides = [1, 1]} : vector<34x32xf32> to vector<34x8xf32>
    %cst_63 = arith.constant dense<0.000000e+00> : vector<34x34xf32>
    %232 = tpu.matmul %229, %230, %cst_63 {dimension_numbers = #tpu.dot_dimension_numbers<[1], [1], [0], [0], [0, 0, 1, 0], [], []>} : vector<34x8xf32>, vector<34x8xf32>, vector<34x34xf32> -> vector<34x34xf32>
    %233 = arith.addf %232, %37 : vector<34x34xf32>
    %cst_64 = arith.constant dense<0xFF800000> : vector<34xf32>
    %234 = vector.multi_reduction <maximumf>, %233, %cst_64 [1] : vector<34x34xf32> to vector<34xf32>
    %235 = vector.shape_cast %234 : vector<34xf32> to vector<34x1xf32>
    %236 = vector.broadcast %235 : vector<34x1xf32> to vector<34x34xf32>
    %237 = arith.subf %233, %236 : vector<34x34xf32>
    %238 = math.exp %237 : vector<34x34xf32>
    %cst_65 = arith.constant dense<0.000000e+00> : vector<34xf32>
    %239 = vector.multi_reduction <add>, %238, %cst_65 [1] : vector<34x34xf32> to vector<34xf32>
    %240 = vector.shape_cast %239 : vector<34xf32> to vector<34x1xf32>
    %241 = tpu.reciprocal %240 {approx = true} : vector<34x1xf32> -> vector<34x1xf32>
    %242 = vector.broadcast %241 : vector<34x1xf32> to vector<34x34xf32>
    %243 = arith.mulf %238, %242 : vector<34x34xf32>
    %cst_66 = arith.constant dense<0.000000e+00> : vector<34x8xf32>
    %244 = tpu.matmul %243, %231, %cst_66 {dimension_numbers = #tpu.dot_dimension_numbers<[1], [0], [0], [1], [0, 0, 1, 1], [], []>} : vector<34x34xf32>, vector<34x8xf32>, vector<34x8xf32> -> vector<34x8xf32>
    %245 = vector.extract_strided_slice %194 {offsets = [0, 24], sizes = [34, 8], strides = [1, 1]} : vector<34x32xf32> to vector<34x8xf32>
    %246 = vector.extract_strided_slice %195 {offsets = [0, 24], sizes = [34, 8], strides = [1, 1]} : vector<34x32xf32> to vector<34x8xf32>
    %247 = vector.extract_strided_slice %196 {offsets = [0, 24], sizes = [34, 8], strides = [1, 1]} : vector<34x32xf32> to vector<34x8xf32>
    %cst_67 = arith.constant dense<0.000000e+00> : vector<34x34xf32>
    %248 = tpu.matmul %245, %246, %cst_67 {dimension_numbers = #tpu.dot_dimension_numbers<[1], [1], [0], [0], [0, 0, 1, 0], [], []>} : vector<34x8xf32>, vector<34x8xf32>, vector<34x34xf32> -> vector<34x34xf32>
    %249 = arith.addf %248, %37 : vector<34x34xf32>
    %cst_68 = arith.constant dense<0xFF800000> : vector<34xf32>
    %250 = vector.multi_reduction <maximumf>, %249, %cst_68 [1] : vector<34x34xf32> to vector<34xf32>
    %251 = vector.shape_cast %250 : vector<34xf32> to vector<34x1xf32>
    %252 = vector.broadcast %251 : vector<34x1xf32> to vector<34x34xf32>
    %253 = arith.subf %249, %252 : vector<34x34xf32>
    %254 = math.exp %253 : vector<34x34xf32>
    %cst_69 = arith.constant dense<0.000000e+00> : vector<34xf32>
    %255 = vector.multi_reduction <add>, %254, %cst_69 [1] : vector<34x34xf32> to vector<34xf32>
    %256 = vector.shape_cast %255 : vector<34xf32> to vector<34x1xf32>
    %257 = tpu.reciprocal %256 {approx = true} : vector<34x1xf32> -> vector<34x1xf32>
    %258 = vector.broadcast %257 : vector<34x1xf32> to vector<34x34xf32>
    %259 = arith.mulf %254, %258 : vector<34x34xf32>
    %cst_70 = arith.constant dense<0.000000e+00> : vector<34x8xf32>
    %260 = tpu.matmul %259, %247, %cst_70 {dimension_numbers = #tpu.dot_dimension_numbers<[1], [0], [0], [1], [0, 0, 1, 1], [], []>} : vector<34x34xf32>, vector<34x8xf32>, vector<34x8xf32> -> vector<34x8xf32>
    %261 = tpu.concatenate %212, %228, %244, %260 in 1 : vector<34x8xf32>, vector<34x8xf32>, vector<34x8xf32>, vector<34x8xf32> -> vector<34x32xf32>
    %cst_71 = arith.constant dense<0.000000e+00> : vector<34x32xf32>
    %262 = tpu.matmul %261, %180, %cst_71 {dimension_numbers = #tpu.dot_dimension_numbers<[1], [0], [0], [1], [0, 0, 1, 1], [], []>} : vector<34x32xf32>, vector<32x32xf32>, vector<34x32xf32> -> vector<34x32xf32>
    %263 = vector.broadcast %184 : vector<1x32xf32> to vector<34x32xf32>
    %264 = arith.addf %262, %263 : vector<34x32xf32>
    %265 = arith.addf %178, %264 : vector<34x32xf32>
    %cst_72 = arith.constant dense<0.000000e+00> : vector<34xf32>
    %266 = vector.multi_reduction <add>, %265, %cst_72 [1] : vector<34x32xf32> to vector<34xf32>
    %267 = vector.shape_cast %266 : vector<34xf32> to vector<34x1xf32>
    %cst_73 = arith.constant 3.200000e+01 : f32
    %268 = vector.broadcast %cst_73 : f32 to vector<34x1xf32>
    %269 = arith.divf %267, %268 : vector<34x1xf32>
    %270 = vector.broadcast %269 : vector<34x1xf32> to vector<34x32xf32>
    %271 = arith.subf %265, %270 : vector<34x32xf32>
    %272 = arith.mulf %271, %271 : vector<34x32xf32>
    %cst_74 = arith.constant dense<0.000000e+00> : vector<34xf32>
    %273 = vector.multi_reduction <add>, %272, %cst_74 [1] : vector<34x32xf32> to vector<34xf32>
    %274 = vector.shape_cast %273 : vector<34xf32> to vector<34x1xf32>
    %cst_75 = arith.constant 3.200000e+01 : f32
    %275 = vector.broadcast %cst_75 : f32 to vector<34x1xf32>
    %276 = arith.divf %274, %275 : vector<34x1xf32>
    %277 = vector.broadcast %269 : vector<34x1xf32> to vector<34x32xf32>
    %278 = arith.subf %265, %277 : vector<34x32xf32>
    %cst_76 = arith.constant 9.99999974E-6 : f32
    %279 = vector.broadcast %cst_76 : f32 to vector<34x1xf32>
    %280 = arith.addf %276, %279 : vector<34x1xf32>
    %281 = math.rsqrt %280 : vector<34x1xf32>
    %282 = vector.broadcast %281 : vector<34x1xf32> to vector<34x32xf32>
    %283 = arith.mulf %278, %282 : vector<34x32xf32>
    %284 = vector.broadcast %185 : vector<1x32xf32> to vector<34x32xf32>
    %285 = arith.mulf %283, %284 : vector<34x32xf32>
    %286 = vector.broadcast %186 : vector<1x32xf32> to vector<34x32xf32>
    %287 = arith.addf %285, %286 : vector<34x32xf32>
    %cst_77 = arith.constant dense<0.000000e+00> : vector<34x64xf32>
    %288 = tpu.matmul %287, %181, %cst_77 {dimension_numbers = #tpu.dot_dimension_numbers<[1], [0], [0], [1], [0, 0, 1, 1], [], []>} : vector<34x32xf32>, vector<32x64xf32>, vector<34x64xf32> -> vector<34x64xf32>
    %289 = vector.broadcast %187 : vector<1x64xf32> to vector<34x64xf32>
    %290 = arith.addf %288, %289 : vector<34x64xf32>
    %cst_78 = arith.constant 0.000000e+00 : f32
    %291 = vector.broadcast %cst_78 : f32 to vector<34x64xf32>
    %292 = arith.maximumf %290, %291 : vector<34x64xf32>
    %cst_79 = arith.constant dense<0.000000e+00> : vector<34x32xf32>
    %293 = tpu.matmul %292, %182, %cst_79 {dimension_numbers = #tpu.dot_dimension_numbers<[1], [1], [0], [0], [0, 0, 1, 0], [], []>} : vector<34x64xf32>, vector<32x64xf32>, vector<34x32xf32> -> vector<34x32xf32>
    %294 = vector.broadcast %188 : vector<1x32xf32> to vector<34x32xf32>
    %295 = arith.addf %293, %294 : vector<34x32xf32>
    %296 = arith.addf %287, %295 : vector<34x32xf32>
    %cst_80 = arith.constant dense<0.000000e+00> : vector<34xf32>
    %297 = vector.multi_reduction <add>, %296, %cst_80 [1] : vector<34x32xf32> to vector<34xf32>
    %298 = vector.shape_cast %297 : vector<34xf32> to vector<34x1xf32>
    %cst_81 = arith.constant 3.200000e+01 : f32
    %299 = vector.broadcast %cst_81 : f32 to vector<34x1xf32>
    %300 = arith.divf %298, %299 : vector<34x1xf32>
    %301 = vector.broadcast %300 : vector<34x1xf32> to vector<34x32xf32>
    %302 = arith.subf %296, %301 : vector<34x32xf32>
    %303 = arith.mulf %302, %302 : vector<34x32xf32>
    %cst_82 = arith.constant dense<0.000000e+00> : vector<34xf32>
    %304 = vector.multi_reduction <add>, %303, %cst_82 [1] : vector<34x32xf32> to vector<34xf32>
    %305 = vector.shape_cast %304 : vector<34xf32> to vector<34x1xf32>
    %cst_83 = arith.constant 3.200000e+01 : f32
    %306 = vector.broadcast %cst_83 : f32 to vector<34x1xf32>
    %307 = arith.divf %305, %306 : vector<34x1xf32>
    %308 = vector.broadcast %300 : vector<34x1xf32> to vector<34x32xf32>
    %309 = arith.subf %296, %308 : vector<34x32xf32>
    %cst_84 = arith.constant 9.99999974E-6 : f32
    %310 = vector.broadcast %cst_84 : f32 to vector<34x1xf32>
    %311 = arith.addf %307, %310 : vector<34x1xf32>
    %312 = math.rsqrt %311 : vector<34x1xf32>
    %313 = vector.broadcast %312 : vector<34x1xf32> to vector<34x32xf32>
    %314 = arith.mulf %309, %313 : vector<34x32xf32>
    %315 = vector.broadcast %189 : vector<1x32xf32> to vector<34x32xf32>
    %316 = arith.mulf %314, %315 : vector<34x32xf32>
    %317 = vector.broadcast %190 : vector<1x32xf32> to vector<34x32xf32>
    %318 = arith.addf %316, %317 : vector<34x32xf32>
    %c0_85 = arith.constant 0 : index
    %c1024 = arith.constant 1024 : index
    %319 = vector.load %arg3[%c0_85, %c1024] : memref<32x1152xf32, #tpu.memory_space<vmem>>, vector<32x128xf32>
    %320 = vector.extract_strided_slice %38 {offsets = [16, 0], sizes = [1, 128], strides = [1, 1]} : vector<17x128xf32> to vector<1x128xf32>
    %321 = vector.extract_strided_slice %318 {offsets = [0, 0], sizes = [8, 32], strides = [1, 1]} : vector<34x32xf32> to vector<8x32xf32>
    %322 = vector.extract_strided_slice %318 {offsets = [17, 0], sizes = [8, 32], strides = [1, 1]} : vector<34x32xf32> to vector<8x32xf32>
    %323 = tpu.concatenate %321, %322 in 0 : vector<8x32xf32>, vector<8x32xf32> -> vector<16x32xf32>
    %cst_86 = arith.constant dense<0.000000e+00> : vector<16x128xf32>
    %324 = tpu.matmul %323, %319, %cst_86 {dimension_numbers = #tpu.dot_dimension_numbers<[1], [0], [0], [1], [0, 0, 1, 1], [], []>} : vector<16x32xf32>, vector<32x128xf32>, vector<16x128xf32> -> vector<16x128xf32>
    %325 = vector.broadcast %320 : vector<1x128xf32> to vector<16x128xf32>
    %326 = arith.addf %324, %325 : vector<16x128xf32>
    %c0_87 = arith.constant 0 : index
    %c0_88 = arith.constant 0 : index
    %327 = vector.load %arg5[%c0_87, %c0_88] : memref<16x128xf32, #tpu.memory_space<vmem>>, vector<16x128xf32>
    tpu.vector_store %arg5[%c0_87, %c0_88], %326 {strides = array<i32>} : memref<16x128xf32, #tpu.memory_space<vmem>>, vector<16x128xf32>,
    return
  }
}

</mosaic_0001>

<llo_original>
// kernel: tile.9
$region0: #{tile.9}
  %s0 = inlined_call_operand.vmem [shape: f32[2,17,32], index: 0, kind: input, shape index: {}]
  %s1 = inlined_call_operand.vmem [shape: f32[34,32], index: 1, kind: output, shape index: {}]
  %v2 = vld [vmem:[%s0] sm:$0xff]
  %vm3 = vcmask 261120
  %4 = vst.msk [vmem:[%s1] sm:$0xff] %vm3, %v2
  %s5 = scalar_lea.vmem %s0, 8
  %v6 = vld [vmem:[%s5] sm:$0xff]
  %vm7 = vcmask 261120
  %s8 = scalar_lea.vmem %s1, 8
  %9 = vst.msk [vmem:[%s8] sm:$0xff] %vm7, %v6
  %s10 = scalar_lea.vmem %s0, 16
  %s11 = smov 3
  %v12 = vld [vmem:[%s10] ss:$8 sm:%s11]
  %vm13 = vcmask 261120
  %s14 = scalar_lea.vmem %s1, 16
  %15 = vst.msk [vmem:[%s14] sm:$0x3] %vm13, %v12
  %s16 = scalar_lea.vmem %s0, 25
  %v17 = vld [vmem:[%s16] sm:$0xff]
  %vm18 = vcmask 261120
  %s19 = scalar_lea.vmem %s1, 18
  %20 = vst.msk [vmem:[%s19] sm:$0xff] %vm18, %v17
  %s21 = scalar_lea.vmem %s0, 33
  %v22 = vld [vmem:[%s21] sm:$0xff]
  %vm23 = vcmask 261120
  %s24 = scalar_lea.vmem %s1, 26
  %25 = vst.msk [vmem:[%s24] sm:$0xff] %vm23, %v22

// kernel: hangman_forward.1
$region0: #{hangman_forward.1}
  #allocation0 [shape = 'u32[]', space=smem, size = 0x4, offset = 0x4, fixed_abs, tag = 'smem constant byte address 0x4 - core index']
  #allocation1 [shape = 'u32[144,128]{1,0:T(1,128)}', space=vmem, size = 0x12000, scoped, tag = 'internal scratch']
  %s0 = inlined_call_operand.vmem [shape: s32[34,1], index: 0, kind: input, shape index: {}]
  %s1 = inlined_call_operand.vmem [shape: f32[30,32], index: 1, kind: input, shape index: {}]
  %s2 = inlined_call_operand.vmem [shape: f32[34,32], index: 2, kind: input, shape index: {}]
  %s3 = inlined_call_operand.hbm [shape: f32[32,1152], index: 3, kind: input, shape index: {}]
  %s4 = inlined_call_operand.vmem [shape: f32[17,128], index: 4, kind: input, shape index: {}]
  %s5 = inlined_call_operand.hbm [shape: f32[16,128], index: 5, kind: output, shape index: {}]
  %s6 = sld [smem:[#allocation0]]
  $region34: #{hangman_forward.1} parent=0
    _
  %s8 = ssub.s32 1, %s6
  %s9 = scalar_select 0, %s8, %s6
  $region1: #{hangman_forward.1} parent=0
    #allocation2 [shape = 'u8[147456]{0}', space=vmem, size = 0x24000, scoped, tag = 'input window, operand 3, single buffered']
    #allocation3 [shape = 's32[1]{0}', space=sflag, size = 0x4, scoped, tag = 'scoped memory for hangman_forward.1']
    #allocation4 [shape = 's32[1]{0}', space=sflag, size = 0x4, scoped, tag = 'scoped memory for hangman_forward.1']
    #allocation5 [shape = 'u8[8192]{0}', space=vmem, size = 0x2000, scoped, tag = 'output window, operand 0, single buffered']
    %10 = vsyncpa [#allocation3], 0
    %11 = vsyncpa [#allocation4], 0
    // Predicated region
    $region2: #{hangman_forward.1} parent=1 // pred_check
      _
    $region3: #{hangman_forward.1} parent=1 // pred_check_branch
      %13 = sbr.rel (0) target = $region5
    $region4: #{hangman_forward.1} parent=1 // pred_region
      _
    $region5: #{hangman_forward.1} parent=1 // pred_fallthru
      _
    // Predicated region
    $region6: #{hangman_forward.1} parent=1 // pred_check
      _
    $region7: #{hangman_forward.1} parent=1 // pred_check_branch
      %15 = sbr.rel (0) target = $region9
    $region8: #{hangman_forward.1} parent=1 // pred_region
      _
    $region9: #{hangman_forward.1} parent=1 // pred_fallthru
      _
    // Predicated region
    $region10: #{hangman_forward.1} parent=1 // pred_check
      _
    $region11: #{hangman_forward.1} parent=1 // pred_check_branch
      %17 = sbr.rel (0) target = $region13
    $region12: #{hangman_forward.1} parent=1 // pred_region
      _
    $region13: #{hangman_forward.1} parent=1 // pred_fallthru
      _
    // Predicated region
    $region14: #{hangman_forward.1} parent=1 // pred_check
      _
    $region15: #{hangman_forward.1} parent=1 // pred_check_branch
      %19 = sbr.rel (0) target = $region17
    $region16: #{hangman_forward.1} parent=1 // pred_region
      %s21 = ssub.s32 4608, 4608
      %22 = vsyncadd [#allocation3], %s21
      %s23 = sshll.u32 [#allocation2], 4
      %s24 = int_to_ptr.vmem [resolvable:$true] %s23
      %29 = dma.hbm_to_vmem [thread:$0]  %s3, 4608, %s24, [#allocation3], 1152, 1152, 72
    $region17: #{hangman_forward.1} parent=1 // pred_fallthru
      _
    // Predicated region
    $region18: #{hangman_forward.1} parent=1 // pred_check
      _
    $region19: #{hangman_forward.1} parent=1 // pred_check_branch
      %31 = sbr.rel (0) target = $region21
    $region20: #{hangman_forward.1} parent=1 // pred_region
      _
    $region21: #{hangman_forward.1} parent=1 // pred_fallthru
      _
    // Predicated region
    $region22: #{hangman_forward.1} parent=1 // pred_check
      _
    $region23: #{hangman_forward.1} parent=1 // pred_check_branch
      %33 = sbr.rel (0) target = $region25
    $region24: #{hangman_forward.1} parent=1 // pred_region
      %34 = dma.done [#allocation3], 4608
    $region25: #{hangman_forward.1} parent=1 // pred_fallthru
      _
    %v35 = vld [vmem:[%s0] sm:$0xff]
    %v36 = vld [vmem:[%s0 + $0x8] sm:$0xff]
    %v37 = vld [vmem:[%s0 + $0x10] sm:$0xff]
    %v38 = vld [vmem:[%s0 + $0x18] sm:$0xff]
    %v39 = vld [vmem:[%s0 + $0x20] sm:$0x3]
    %v40 = vlaneseq
    %v41 = vand.u32 %v40, 127
    %42 = vset.pattern.permute.xlu0 0
    %43 = vperm.xlu0 %42, %v35
    %v44 = vpop.permute.xlu0 %43
    %45 = vset.pattern.permute.xlu0 0
    %46 = vperm.xlu0 %45, %v36
    %v47 = vpop.permute.xlu0 %46
    %48 = vset.pattern.permute.xlu0 0
    %49 = vperm.xlu0 %48, %v37
    %v50 = vpop.permute.xlu0 %49
    %51 = vset.pattern.permute.xlu0 0
    %52 = vperm.xlu0 %51, %v38
    %v53 = vpop.permute.xlu0 %52
    %54 = vset.pattern.permute.xlu0 0
    %55 = vperm.xlu0 %54, %v39
    %v56 = vpop.permute.xlu0 %55
    %vm57 = vcmp.eq.s32.totalorder %v44, %v41
    %vm58 = vcmp.eq.s32.totalorder %v47, %v41
    %vm59 = vcmp.eq.s32.totalorder %v50, %v41
    %vm60 = vcmp.eq.s32.totalorder %v53, %v41
    %vm61 = vcmp.eq.s32.totalorder %v56, %v41
    %v62 = vsel %vm57, 1, 0
    %v63 = vsel %vm58, 1, 0
    %v64 = vsel %vm59, 1, 0
    %v65 = vsel %vm60, 1, 0
    %v66 = vsel %vm61, 1, 0
    %v67 = vcvt.s32.f32 %v62
    %v68 = vcvt.s32.f32 %v63
    %v69 = vcvt.s32.f32 %v64
    %v70 = vcvt.s32.f32 %v65
    %v71 = vcvt.s32.f32 %v66
    %v72 = vld [vmem:[%s1] sm:$0xff]
    %v73 = vld [vmem:[%s1 + $0x8] sm:$0xff]
    %v74 = vld [vmem:[%s1 + $0x10] sm:$0xff]
    %v75 = vld [vmem:[%s1 + $0x18] sm:$0x3f]
    %v76 = vld [vmem:[%s2] sm:$0xff]
    %v77 = vld [vmem:[%s2 + $0x8] sm:$0xff]
    %v78 = vld [vmem:[%s2 + $0x10] sm:$0xff]
    %v79 = vld [vmem:[%s2 + $0x18] sm:$0xff]
    %v80 = vld [vmem:[%s2 + $0x20] sm:$0x3]
    %vm81 = vcmask 244736
    %v83 = vsel %vm81, %v67, 0
    %v86 = vsel %vm81, %v68, 0
    %v89 = vsel %vm81, %v69, 0
    %v92 = vsel %vm81, %v70, 0
    %v95 = vsel %vm81, %v71, 0
    %vm97 = vcmask 1045504
    %v99 = vsel %vm97, %v75, 0
    %101 = vmatprep.subr.mxu0 0.0
    %102 = vmatpush1.msra.mxu0 0.0
    %103 = vmatprep.subr.mxu0 0.0
    %104 = vmatpush1.msra.mxu0 0.0
    %105 = vmatprep.subr.mxu0 0.0
    %106 = vmatpush1.msra.mxu0 0.0
    %107 = vmatprep.subr.mxu0 0.0
    %108 = vmatpush1.msra.mxu0 0.0
    %109 = vmatprep.subr.mxu0 0.0
    %110 = vmatpush1.msra.mxu0 0.0
    %111 = vmatprep.subr.mxu0 0.0
    %112 = vmatpush1.msra.mxu0 0.0
    %113 = vmatprep.subr.mxu0 0.0
    %114 = vmatpush1.msra.mxu0 0.0
    %115 = vmatprep.subr.mxu0 0.0
    %116 = vmatpush1.msra.mxu0 0.0
    %117 = vmatprep.subr.mxu0 0.0
    %118 = vmatpush1.msra.mxu0 0.0
    %119 = vmatprep.subr.mxu0 0.0
    %120 = vmatpush1.msra.mxu0 0.0
    %121 = vmatprep.subr.mxu0 0.0
    %122 = vmatpush1.msra.mxu0 0.0
    %123 = vmatprep.subr.mxu0 0.0
    %124 = vmatpush1.msra.mxu0 0.0
    %125 = vmatprep.subr.mxu0 0.0
    %126 = vmatpush1.msra.mxu0 %v99
    %127 = vmatprep.subr.mxu0 0.0
    %128 = vmatpush1.msra.mxu0 %v74
    %129 = vmatprep.subr.mxu0 0.0
    %130 = vmatpush1.msra.mxu0 %v73
    %131 = vmatprep.subr.mxu0 0.0
    %132 = vmatpush1.msra.mxu0 %v72
    %133 = vmatprep.subr.mxu0 0.0
    %134 = vmatpush2.msra.mxu0 0.0
    %135 = vmatprep.subr.mxu0 0.0
    %136 = vmatpush2.msra.mxu0 0.0
    %137 = vmatprep.subr.mxu0 0.0
    %138 = vmatpush2.msra.mxu0 0.0
    %139 = vmatprep.subr.mxu0 0.0
    %140 = vmatpush2.msra.mxu0 0.0
    %141 = vmatprep.subr.mxu0 0.0
    %142 = vmatpush2.msra.mxu0 0.0
    %143 = vmatprep.subr.mxu0 0.0
    %144 = vmatpush2.msra.mxu0 0.0
    %145 = vmatprep.subr.mxu0 0.0
    %146 = vmatpush2.msra.mxu0 0.0
    %147 = vmatprep.subr.mxu0 0.0
    %148 = vmatpush2.msra.mxu0 0.0
    %149 = vmatprep.subr.mxu0 0.0
    %150 = vmatpush2.msra.mxu0 0.0
    %151 = vmatprep.subr.mxu0 0.0
    %152 = vmatpush2.msra.mxu0 0.0
    %153 = vmatprep.subr.mxu0 0.0
    %154 = vmatpush2.msra.mxu0 0.0
    %155 = vmatprep.subr.mxu0 0.0
    %156 = vmatpush2.msra.mxu0 0.0
    %157 = vmatprep.subr.mxu0 0.0
    %158 = vmatpush2.msra.mxu0 0.0
    %159 = vmatprep.subr.mxu0 0.0
    %160 = vmatpush2.msra.mxu0 0.0
    %161 = vmatprep.subr.mxu0 0.0
    %162 = vmatpush2.msra.mxu0 0.0
    %163 = vmatprep.subr.mxu0 0.0
    %164 = vmatpush2.msra.mxu0 0.0
    %165 = vmatprep.mubr.f32.mxu0 0.0
    %166 = vmatmul.mubr.f32.gmra.mxu0 %v83
    %v167 = vpop.f32.mrf.mxu0
    %v168 = vadd.f32 %v76, %v167
    %v169 = vpop.f32.mrf.mxu0
    %170 = vmatprep.mubr.f32.mxu0 0.0
    %171 = vmatmul.mubr.f32.gmra.mxu0 %v86
    %v172 = vpop.f32.mrf.mxu0
    %v173 = vadd.f32 %v77, %v172
    %v174 = vpop.f32.mrf.mxu0
    %175 = vmatprep.mubr.f32.mxu0 0.0
    %176 = vmatmul.mubr.f32.gmra.mxu0 %v89
    %v177 = vpop.f32.mrf.mxu0
    %v178 = vadd.f32 %v78, %v177
    %v179 = vpop.f32.mrf.mxu0
    %180 = vmatprep.mubr.f32.mxu0 0.0
    %181 = vmatmul.mubr.f32.gmra.mxu0 %v92
    %v182 = vpop.f32.mrf.mxu0
    %v183 = vadd.f32 %v79, %v182
    %v184 = vpop.f32.mrf.mxu0
    %185 = vmatprep.mubr.f32.mxu0 0.0
    %186 = vmatmul.mubr.f32.gmra.mxu0 %v95
    %v187 = vpop.f32.mrf.mxu0
    %v188 = vadd.f32 %v80, %v187
    %v189 = vpop.f32.mrf.mxu0
    %190 = vdwg.mxu0
    %v191 = vlaneseq
    %v192 = vshrl.u32 %v191, 7
    %v193 = vadd.s32 %v192, 8
    %v194 = vadd.s32 %v192, 16
    %v195 = vadd.s32 %v192, 24
    %v196 = vadd.s32 %v192, 32
    %vm197 = vcmp.ge.s32.totalorder %v192, 0
    %vm198 = vcmp.ge.s32.totalorder %v193, 0
    %vm199 = vcmp.ge.s32.totalorder %v194, 0
    %vm200 = vcmp.ge.s32.totalorder %v195, 0
    %vm201 = vcmp.ge.s32.totalorder %v196, 0
    %vm202 = vcmp.lt.s32.totalorder %v192, 17
    %vm203 = vcmp.lt.s32.totalorder %v193, 17
    %vm204 = vcmp.lt.s32.totalorder %v194, 17
    %vm205 = vcmp.lt.s32.totalorder %v195, 17
    %vm206 = vcmp.lt.s32.totalorder %v196, 17
    %vm207 = vmand %vm197, %vm202
    %vm208 = vmand %vm198, %vm203
    %vm209 = vmand %vm199, %vm204
    %vm210 = vmand %vm200, %vm205
    %vm211 = vmand %vm201, %vm206
    %vm212 = vcmp.ge.s32.totalorder %v41, 0
    %vm213 = vmand %vm207, %vm212
    %vm214 = vmand %vm208, %vm212
    %vm215 = vmand %vm209, %vm212
    %vm216 = vmand %vm210, %vm212
    %vm217 = vmand %vm211, %vm212
    %vm218 = vcmp.lt.s32.totalorder %v41, 17
    %vm219 = vmand %vm213, %vm218
    %vm220 = vmand %vm214, %vm218
    %vm221 = vmand %vm215, %vm218
    %vm222 = vmand %vm216, %vm218
    %vm223 = vmand %vm217, %vm218
    %vm224 = vcmp.ge.s32.totalorder %v192, 17
    %vm225 = vcmp.ge.s32.totalorder %v193, 17
    %vm226 = vcmp.ge.s32.totalorder %v194, 17
    %vm227 = vcmp.ge.s32.totalorder %v195, 17
    %vm228 = vcmp.ge.s32.totalorder %v196, 17
    %vm229 = vcmp.lt.s32.totalorder %v192, 34
    %vm230 = vcmp.lt.s32.totalorder %v193, 34
    %vm231 = vcmp.lt.s32.totalorder %v194, 34
    %vm232 = vcmp.lt.s32.totalorder %v195, 34
    %vm233 = vcmp.lt.s32.totalorder %v196, 34
    %vm234 = vmand %vm224, %vm229
    %vm235 = vmand %vm225, %vm230
    %vm236 = vmand %vm226, %vm231
    %vm237 = vmand %vm227, %vm232
    %vm238 = vmand %vm228, %vm233
    %vm239 = vcmp.ge.s32.totalorder %v41, 17
    %vm240 = vmand %vm234, %vm239
    %vm241 = vmand %vm235, %vm239
    %vm242 = vmand %vm236, %vm239
    %vm243 = vmand %vm237, %vm239
    %vm244 = vmand %vm238, %vm239
    %vm245 = vcmp.lt.s32.totalorder %v41, 34
    %vm246 = vmand %vm240, %vm245
    %vm247 = vmand %vm241, %vm245
    %vm248 = vmand %vm242, %vm245
    %vm249 = vmand %vm243, %vm245
    %vm250 = vmand %vm244, %vm245
    %vm251 = vmor %vm219, %vm246
    %vm252 = vmor %vm220, %vm247
    %vm253 = vmor %vm221, %vm248
    %vm254 = vmor %vm222, %vm249
    %vm255 = vmor %vm223, %vm250
    %v256 = vsel %vm251, 0.0, -1e+09
    %v257 = vsel %vm252, 0.0, -1e+09
    %v258 = vsel %vm253, 0.0, -1e+09
    %v259 = vsel %vm254, 0.0, -1e+09
    %v260 = vsel %vm255, 0.0, -1e+09
    %v261 = vld [vmem:[%s4] sm:$0xff]
    %v262 = vld [vmem:[%s4 + $0x8] sm:$0xff]
    %v263 = vld [vmem:[%s4 + $0x10] sm:$0x1]
    %v264 = vld [vmem:[#allocation2] sm:$0xff]
    %v265 = vld [vmem:[#allocation2 + $0x48] sm:$0xff]
    %v266 = vld [vmem:[#allocation2 + $0x90] sm:$0xff]
    %v267 = vld [vmem:[#allocation2 + $0xd8] sm:$0xff]
    %v268 = vld [vmem:[#allocation2 + $0x8] sm:$0xff]
    %v269 = vld [vmem:[#allocation2 + $0x50] sm:$0xff]
    %v270 = vld [vmem:[#allocation2 + $0x98] sm:$0xff]
    %v271 = vld [vmem:[#allocation2 + $0xe0] sm:$0xff]
    %v272 = vld [vmem:[#allocation2 + $0x10] sm:$0xff]
    %v273 = vld [vmem:[#allocation2 + $0x58] sm:$0xff]
    %v274 = vld [vmem:[#allocation2 + $0xa0] sm:$0xff]
    %v275 = vld [vmem:[#allocation2 + $0xe8] sm:$0xff]
    %v276 = vld [vmem:[#allocation2 + $0x18] sm:$0xff]
    %v277 = vld [vmem:[#allocation2 + $0x60] sm:$0xff]
    %v278 = vld [vmem:[#allocation2 + $0xa8] sm:$0xff]
    %v279 = vld [vmem:[#allocation2 + $0xf0] sm:$0xff]
    %v280 = vlaneseq
    %v281 = vshrl.u32 %v280, 7
    %v282 = vsub.s32 0, %v281
    %v283 = vrot.slane %v261, %v282
    %vm284 = vcmask 261120
    %v286 = vsel %vm284, %v168, 0
    %v289 = vsel %vm284, %v173, 0
    %v292 = vsel %vm284, %v178, 0
    %v295 = vsel %vm284, %v183, 0
    %v298 = vsel %vm284, %v188, 0
    %300 = vmatprep.subr.mxu0 0.0
    %301 = vmatpush1.msra.mxu0 0.0
    %302 = vmatprep.subr.mxu0 0.0
    %303 = vmatpush1.msra.mxu0 0.0
    %304 = vmatprep.subr.mxu0 0.0
    %305 = vmatpush1.msra.mxu0 0.0
    %306 = vmatprep.subr.mxu0 0.0
    %307 = vmatpush1.msra.mxu0 0.0
    %308 = vmatprep.subr.mxu0 0.0
    %309 = vmatpush1.msra.mxu0 0.0
    %310 = vmatprep.subr.mxu0 0.0
    %311 = vmatpush1.msra.mxu0 0.0
    %312 = vmatprep.subr.mxu0 0.0
    %313 = vmatpush1.msra.mxu0 0.0
    %314 = vmatprep.subr.mxu0 0.0
    %315 = vmatpush1.msra.mxu0 0.0
    %316 = vmatprep.subr.mxu0 0.0
    %317 = vmatpush1.msra.mxu0 0.0
    %318 = vmatprep.subr.mxu0 0.0
    %319 = vmatpush1.msra.mxu0 0.0
    %320 = vmatprep.subr.mxu0 0.0
    %321 = vmatpush1.msra.mxu0 0.0
    %322 = vmatprep.subr.mxu0 0.0
    %323 = vmatpush1.msra.mxu0 0.0
    %324 = vmatprep.subr.mxu0 0.0
    %325 = vmatpush1.msra.mxu0 %v267
    %326 = vmatprep.subr.mxu0 0.0
    %327 = vmatpush1.msra.mxu0 %v266
    %328 = vmatprep.subr.mxu0 0.0
    %329 = vmatpush1.msra.mxu0 %v265
    %330 = vmatprep.subr.mxu0 0.0
    %331 = vmatpush1.msra.mxu0 %v264
    %332 = vmatprep.subr.mxu0 0.0
    %333 = vmatpush2.msra.mxu0 0.0
    %334 = vmatprep.subr.mxu0 0.0
    %335 = vmatpush2.msra.mxu0 0.0
    %336 = vmatprep.subr.mxu0 0.0
    %337 = vmatpush2.msra.mxu0 0.0
    %338 = vmatprep.subr.mxu0 0.0
    %339 = vmatpush2.msra.mxu0 0.0
    %340 = vmatprep.subr.mxu0 0.0
    %341 = vmatpush2.msra.mxu0 0.0
    %342 = vmatprep.subr.mxu0 0.0
    %343 = vmatpush2.msra.mxu0 0.0
    %344 = vmatprep.subr.mxu0 0.0
    %345 = vmatpush2.msra.mxu0 0.0
    %346 = vmatprep.subr.mxu0 0.0
    %347 = vmatpush2.msra.mxu0 0.0
    %348 = vmatprep.subr.mxu0 0.0
    %349 = vmatpush2.msra.mxu0 0.0
    %350 = vmatprep.subr.mxu0 0.0
    %351 = vmatpush2.msra.mxu0 0.0
    %352 = vmatprep.subr.mxu0 0.0
    %353 = vmatpush2.msra.mxu0 0.0
    %354 = vmatprep.subr.mxu0 0.0
    %355 = vmatpush2.msra.mxu0 0.0
    %356 = vmatprep.subr.mxu0 0.0
    %357 = vmatpush2.msra.mxu0 0.0
    %358 = vmatprep.subr.mxu0 0.0
    %359 = vmatpush2.msra.mxu0 0.0
    %360 = vmatprep.subr.mxu0 0.0
    %361 = vmatpush2.msra.mxu0 0.0
    %362 = vmatprep.subr.mxu0 0.0
    %363 = vmatpush2.msra.mxu0 0.0
    %364 = vmatprep.mubr.f32.mxu0 0.0
    %365 = vmatmul.mubr.f32.gmra.mxu0 %v286
    %v366 = vpop.f32.mrf.mxu0
    %v367 = vadd.f32 %v283, %v366
    %v368 = vpop.f32.mrf.mxu0
    %369 = vmatprep.mubr.f32.mxu0 0.0
    %370 = vmatmul.mubr.f32.gmra.mxu0 %v289
    %v371 = vpop.f32.mrf.mxu0
    %v372 = vadd.f32 %v283, %v371
    %v373 = vpop.f32.mrf.mxu0
    %374 = vmatprep.mubr.f32.mxu0 0.0
    %375 = vmatmul.mubr.f32.gmra.mxu0 %v292
    %v376 = vpop.f32.mrf.mxu0
    %v377 = vadd.f32 %v283, %v376
    %v378 = vpop.f32.mrf.mxu0
    %379 = vmatprep.mubr.f32.mxu0 0.0
    %380 = vmatmul.mubr.f32.gmra.mxu0 %v295
    %v381 = vpop.f32.mrf.mxu0
    %v382 = vadd.f32 %v283, %v381
    %v383 = vpop.f32.mrf.mxu0
    %384 = vmatprep.mubr.f32.mxu0 0.0
    %385 = vmatmul.mubr.f32.gmra.mxu0 %v298
    %v386 = vpop.f32.mrf.mxu0
    %v387 = vadd.f32 %v283, %v386
    %v388 = vpop.f32.mrf.mxu0
    %389 = vdwg.mxu0
    %395 = vrot.lane.b32.xlu0 %v367, 96
    %v396 = vpop.permute.xlu0 %395
    %397 = vrot.lane.b32.xlu0 %v372, 96
    %v398 = vpop.permute.xlu0 %397
    %399 = vrot.lane.b32.xlu0 %v377, 96
    %v400 = vpop.permute.xlu0 %399
    %401 = vrot.lane.b32.xlu0 %v382, 96
    %v402 = vpop.permute.xlu0 %401
    %403 = vrot.lane.b32.xlu0 %v387, 96
    %v404 = vpop.permute.xlu0 %403
    %vm405 = vcmask 64512
    %v406 = vsel %vm405, %v367, 0
    %v408 = vsel %vm405, %v372, 0
    %v410 = vsel %vm405, %v377, 0
    %v412 = vsel %vm405, %v382, 0
    %v414 = vsel %vm405, %v387, 0
    %v416 = vsel %vm405, %v396, 0
    %v418 = vsel %vm405, %v398, 0
    %v420 = vsel %vm405, %v400, 0
    %v422 = vsel %vm405, %v402, 0
    %v424 = vsel %vm405, %v404, 0
    %426 = vmatprep.subr.mxu0 0.0
    %427 = vmatpush1.xpose.msra.mxu0 0.0
    %428 = vmatprep.subr.mxu0 0.0
    %429 = vmatpush1.xpose.msra.mxu0 0.0
    %430 = vmatprep.subr.mxu0 0.0
    %431 = vmatpush1.xpose.msra.mxu0 0.0
    %432 = vmatprep.subr.mxu0 0.0
    %433 = vmatpush1.xpose.msra.mxu0 0.0
    %434 = vmatprep.subr.mxu0 0.0
    %435 = vmatpush1.xpose.msra.mxu0 0.0
    %436 = vmatprep.subr.mxu0 0.0
    %437 = vmatpush1.xpose.msra.mxu0 0.0
    %438 = vmatprep.subr.mxu0 0.0
    %439 = vmatpush1.xpose.msra.mxu0 0.0
    %440 = vmatprep.subr.mxu0 0.0
    %441 = vmatpush1.xpose.msra.mxu0 0.0
    %442 = vmatprep.subr.mxu0 0.0
    %443 = vmatpush1.xpose.msra.mxu0 0.0
    %444 = vmatprep.subr.mxu0 0.0
    %445 = vmatpush1.xpose.msra.mxu0 0.0
    %446 = vmatprep.subr.mxu0 0.0
    %447 = vmatpush1.xpose.msra.mxu0 0.0
    %448 = vmatprep.subr.mxu0 0.0
    %449 = vmatpush1.xpose.msra.mxu0 %v424
    %450 = vmatprep.subr.mxu0 0.0
    %451 = vmatpush1.xpose.msra.mxu0 %v422
    %452 = vmatprep.subr.mxu0 0.0
    %453 = vmatpush1.xpose.msra.mxu0 %v420
    %454 = vmatprep.subr.mxu0 0.0
    %455 = vmatpush1.xpose.msra.mxu0 %v418
    %456 = vmatprep.subr.mxu0 0.0
    %457 = vmatpush1.xpose.msra.mxu0 %v416
    %458 = vmatprep.subr.mxu0 0.0
    %459 = vmatpush2.xpose.msra.mxu0 0.0
    %460 = vmatprep.subr.mxu0 0.0
    %461 = vmatpush2.xpose.msra.mxu0 0.0
    %462 = vmatprep.subr.mxu0 0.0
    %463 = vmatpush2.xpose.msra.mxu0 0.0
    %464 = vmatprep.subr.mxu0 0.0
    %465 = vmatpush2.xpose.msra.mxu0 0.0
    %466 = vmatprep.subr.mxu0 0.0
    %467 = vmatpush2.xpose.msra.mxu0 0.0
    %468 = vmatprep.subr.mxu0 0.0
    %469 = vmatpush2.xpose.msra.mxu0 0.0
    %470 = vmatprep.subr.mxu0 0.0
    %471 = vmatpush2.xpose.msra.mxu0 0.0
    %472 = vmatprep.subr.mxu0 0.0
    %473 = vmatpush2.xpose.msra.mxu0 0.0
    %474 = vmatprep.subr.mxu0 0.0
    %475 = vmatpush2.xpose.msra.mxu0 0.0
    %476 = vmatprep.subr.mxu0 0.0
    %477 = vmatpush2.xpose.msra.mxu0 0.0
    %478 = vmatprep.subr.mxu0 0.0
    %479 = vmatpush2.xpose.msra.mxu0 0.0
    %480 = vmatprep.subr.mxu0 0.0
    %481 = vmatpush2.xpose.msra.mxu0 0.0
    %482 = vmatprep.subr.mxu0 0.0
    %483 = vmatpush2.xpose.msra.mxu0 0.0
    %484 = vmatprep.subr.mxu0 0.0
    %485 = vmatpush2.xpose.msra.mxu0 0.0
    %486 = vmatprep.subr.mxu0 0.0
    %487 = vmatpush2.xpose.msra.mxu0 0.0
    %488 = vmatprep.subr.mxu0 0.0
    %489 = vmatpush2.xpose.msra.mxu0 0.0
    %490 = vmatprep.mubr.f32.mxu0 0.0
    %491 = vmatmul.mubr.f32.gmra.mxu0 %v406
    %v492 = vpop.f32.mrf.mxu0
    %v493 = vadd.f32 %v256, %v492
    %v494 = vpop.f32.mrf.mxu0
    %495 = vmatprep.mubr.f32.mxu0 0.0
    %496 = vmatmul.mubr.f32.gmra.mxu0 %v408
    %v497 = vpop.f32.mrf.mxu0
    %v498 = vadd.f32 %v257, %v497
    %v499 = vpop.f32.mrf.mxu0
    %500 = vmatprep.mubr.f32.mxu0 0.0
    %501 = vmatmul.mubr.f32.gmra.mxu0 %v410
    %v502 = vpop.f32.mrf.mxu0
    %v503 = vadd.f32 %v258, %v502
    %v504 = vpop.f32.mrf.mxu0
    %505 = vmatprep.mubr.f32.mxu0 0.0
    %506 = vmatmul.mubr.f32.gmra.mxu0 %v412
    %v507 = vpop.f32.mrf.mxu0
    %v508 = vadd.f32 %v259, %v507
    %v509 = vpop.f32.mrf.mxu0
    %510 = vmatprep.mubr.f32.mxu0 0.0
    %511 = vmatmul.mubr.f32.gmra.mxu0 %v414
    %v512 = vpop.f32.mrf.mxu0
    %v513 = vadd.f32 %v260, %v512
    %v514 = vpop.f32.mrf.mxu0
    %515 = vdwg.mxu0
    %vm516 = vcmask 277504
    %v517 = vsel %vm516, %v493, -inf
    %518 = vmax.xlane.f32.xlu0 %v517
    %v519 = vpop.xlane.xlu0 %518
    %v520 = vsel %vm516, %v498, -inf
    %521 = vmax.xlane.f32.xlu0 %v520
    %v522 = vpop.xlane.xlu0 %521
    %v523 = vsel %vm516, %v503, -inf
    %524 = vmax.xlane.f32.xlu0 %v523
    %v525 = vpop.xlane.xlu0 %524
    %v526 = vsel %vm516, %v508, -inf
    %527 = vmax.xlane.f32.xlu0 %v526
    %v528 = vpop.xlane.xlu0 %527
    %vm529 = vcmask 271360
    %v530 = vsel %vm529, %v513, -inf
    %531 = vmax.xlane.f32.xlu0 %v530
    %v532 = vpop.xlane.xlu0 %531
    %v533 = vsub.f32 %v493, %v519
    %v534 = vsub.f32 %v498, %v522
    %v535 = vsub.f32 %v503, %v525
    %v536 = vsub.f32 %v508, %v528
    %v537 = vsub.f32 %v513, %v532
    %v538 = vmul.f32 %v533, 1.442695
    %v539 = vpow.pop %v538
    %v540 = vmul.f32 %v534, 1.442695
    %v541 = vpow.pop %v540
    %v542 = vmul.f32 %v535, 1.442695
    %v543 = vpow.pop %v542
    %v544 = vmul.f32 %v536, 1.442695
    %v545 = vpow.pop %v544
    %v546 = vmul.f32 %v537, 1.442695
    %v547 = vpow.pop %v546
    %v548 = vsel %vm516, %v539, 0.0
    %549 = vadd.xlane.f32.xlu0 %v548
    %v550 = vpop.xlane.xlu0 %549
    %v551 = vsel %vm516, %v541, 0.0
    %552 = vadd.xlane.f32.xlu0 %v551
    %v553 = vpop.xlane.xlu0 %552
    %v554 = vsel %vm516, %v543, 0.0
    %555 = vadd.xlane.f32.xlu0 %v554
    %v556 = vpop.xlane.xlu0 %555
    %v557 = vsel %vm516, %v545, 0.0
    %558 = vadd.xlane.f32.xlu0 %v557
    %v559 = vpop.xlane.xlu0 %558
    %v560 = vsel %vm529, %v547, 0.0
    %561 = vadd.xlane.f32.xlu0 %v560
    %v562 = vpop.xlane.xlu0 %561
    %v563 = vrcp.pop %v550
    %v564 = vrcp.pop %v553
    %v565 = vrcp.pop %v556
    %v566 = vrcp.pop %v559
    %v567 = vrcp.pop %v562
    %v568 = vmul.f32 %v539, %v563
    %v569 = vmul.f32 %v541, %v564
    %v570 = vmul.f32 %v543, %v565
    %v571 = vmul.f32 %v545, %v566
    %v572 = vmul.f32 %v547, %v567
    %573 = vrot.lane.b32.xlu0 %v367, 64
    %v574 = vpop.permute.xlu0 %573
    %575 = vrot.lane.b32.xlu0 %v372, 64
    %v576 = vpop.permute.xlu0 %575
    %577 = vrot.lane.b32.xlu0 %v377, 64
    %v578 = vpop.permute.xlu0 %577
    %579 = vrot.lane.b32.xlu0 %v382, 64
    %v580 = vpop.permute.xlu0 %579
    %581 = vrot.lane.b32.xlu0 %v387, 64
    %v582 = vpop.permute.xlu0 %581
    %v588 = vsel %vm516, %v568, 0
    %v591 = vsel %vm516, %v569, 0
    %v594 = vsel %vm516, %v570, 0
    %v597 = vsel %vm516, %v571, 0
    %v600 = vsel %vm516, %v572, 0
    %vm602 = vcmask 1041408
    %v603 = vsel %vm602, %v582, 0
    %605 = vmatprep.subr.mxu0 0.0
    %606 = vmatpush1.msra.mxu0 0.0
    %607 = vmatprep.subr.mxu0 0.0
    %608 = vmatpush1.msra.mxu0 0.0
    %609 = vmatprep.subr.mxu0 0.0
    %610 = vmatpush1.msra.mxu0 0.0
    %611 = vmatprep.subr.mxu0 0.0
    %612 = vmatpush1.msra.mxu0 0.0
    %613 = vmatprep.subr.mxu0 0.0
    %614 = vmatpush1.msra.mxu0 0.0
    %615 = vmatprep.subr.mxu0 0.0
    %616 = vmatpush1.msra.mxu0 0.0
    %617 = vmatprep.subr.mxu0 0.0
    %618 = vmatpush1.msra.mxu0 0.0
    %619 = vmatprep.subr.mxu0 0.0
    %620 = vmatpush1.msra.mxu0 0.0
    %621 = vmatprep.subr.mxu0 0.0
    %622 = vmatpush1.msra.mxu0 0.0
    %623 = vmatprep.subr.mxu0 0.0
    %624 = vmatpush1.msra.mxu0 0.0
    %625 = vmatprep.subr.mxu0 0.0
    %626 = vmatpush1.msra.mxu0 0.0
    %627 = vmatprep.subr.mxu0 0.0
    %628 = vmatpush1.msra.mxu0 %v603
    %629 = vmatprep.subr.mxu0 0.0
    %630 = vmatpush1.msra.mxu0 %v580
    %631 = vmatprep.subr.mxu0 0.0
    %632 = vmatpush1.msra.mxu0 %v578
    %633 = vmatprep.subr.mxu0 0.0
    %634 = vmatpush1.msra.mxu0 %v576
    %635 = vmatprep.subr.mxu0 0.0
    %636 = vmatpush1.msra.mxu0 %v574
    %637 = vmatprep.subr.mxu0 0.0
    %638 = vmatpush2.msra.mxu0 0.0
    %639 = vmatprep.subr.mxu0 0.0
    %640 = vmatpush2.msra.mxu0 0.0
    %641 = vmatprep.subr.mxu0 0.0
    %642 = vmatpush2.msra.mxu0 0.0
    %643 = vmatprep.subr.mxu0 0.0
    %644 = vmatpush2.msra.mxu0 0.0
    %645 = vmatprep.subr.mxu0 0.0
    %646 = vmatpush2.msra.mxu0 0.0
    %647 = vmatprep.subr.mxu0 0.0
    %648 = vmatpush2.msra.mxu0 0.0
    %649 = vmatprep.subr.mxu0 0.0
    %650 = vmatpush2.msra.mxu0 0.0
    %651 = vmatprep.subr.mxu0 0.0
    %652 = vmatpush2.msra.mxu0 0.0
    %653 = vmatprep.subr.mxu0 0.0
    %654 = vmatpush2.msra.mxu0 0.0
    %655 = vmatprep.subr.mxu0 0.0
    %656 = vmatpush2.msra.mxu0 0.0
    %657 = vmatprep.subr.mxu0 0.0
    %658 = vmatpush2.msra.mxu0 0.0
    %659 = vmatprep.subr.mxu0 0.0
    %660 = vmatpush2.msra.mxu0 0.0
    %661 = vmatprep.subr.mxu0 0.0
    %662 = vmatpush2.msra.mxu0 0.0
    %663 = vmatprep.subr.mxu0 0.0
    %664 = vmatpush2.msra.mxu0 0.0
    %665 = vmatprep.subr.mxu0 0.0
    %666 = vmatpush2.msra.mxu0 0.0
    %667 = vmatprep.subr.mxu0 0.0
    %668 = vmatpush2.msra.mxu0 0.0
    %669 = vmatprep.mubr.f32.mxu0 0.0
    %670 = vmatmul.mubr.f32.gmra.mxu0 %v588
    %v671 = vpop.f32.mrf.mxu0
    %v672 = vadd.f32 0.0, %v671
    %v673 = vpop.f32.mrf.mxu0
    %674 = vmatprep.mubr.f32.mxu0 0.0
    %675 = vmatmul.mubr.f32.gmra.mxu0 %v591
    %v676 = vpop.f32.mrf.mxu0
    %v677 = vadd.f32 0.0, %v676
    %v678 = vpop.f32.mrf.mxu0
    %679 = vmatprep.mubr.f32.mxu0 0.0
    %680 = vmatmul.mubr.f32.gmra.mxu0 %v594
    %v681 = vpop.f32.mrf.mxu0
    %v682 = vadd.f32 0.0, %v681
    %v683 = vpop.f32.mrf.mxu0
    %684 = vmatprep.mubr.f32.mxu0 0.0
    %685 = vmatmul.mubr.f32.gmra.mxu0 %v597
    %v686 = vpop.f32.mrf.mxu0
    %v687 = vadd.f32 0.0, %v686
    %v688 = vpop.f32.mrf.mxu0
    %689 = vmatprep.mubr.f32.mxu0 0.0
    %690 = vmatmul.mubr.f32.gmra.mxu0 %v600
    %v691 = vpop.f32.mrf.mxu0
    %v692 = vadd.f32 0.0, %v691
    %v693 = vpop.f32.mrf.mxu0
    %694 = vdwg.mxu0
    %695 = vrot.lane.b32.xlu0 %v367, 120
    %v696 = vpop.permute.xlu0 %695
    %697 = vrot.lane.b32.xlu0 %v372, 120
    %v698 = vpop.permute.xlu0 %697
    %699 = vrot.lane.b32.xlu0 %v377, 120
    %v700 = vpop.permute.xlu0 %699
    %701 = vrot.lane.b32.xlu0 %v382, 120
    %v702 = vpop.permute.xlu0 %701
    %703 = vrot.lane.b32.xlu0 %v387, 120
    %v704 = vpop.permute.xlu0 %703
    %705 = vrot.lane.b32.xlu0 %v367, 88
    %v706 = vpop.permute.xlu0 %705
    %707 = vrot.lane.b32.xlu0 %v372, 88
    %v708 = vpop.permute.xlu0 %707
    %709 = vrot.lane.b32.xlu0 %v377, 88
    %v710 = vpop.permute.xlu0 %709
    %711 = vrot.lane.b32.xlu0 %v382, 88
    %v712 = vpop.permute.xlu0 %711
    %713 = vrot.lane.b32.xlu0 %v387, 88
    %v714 = vpop.permute.xlu0 %713
    %v715 = vsel %vm405, %v696, 0
    %v717 = vsel %vm405, %v698, 0
    %v719 = vsel %vm405, %v700, 0
    %v721 = vsel %vm405, %v702, 0
    %v723 = vsel %vm405, %v704, 0
    %v725 = vsel %vm405, %v706, 0
    %v727 = vsel %vm405, %v708, 0
    %v729 = vsel %vm405, %v710, 0
    %v731 = vsel %vm405, %v712, 0
    %v733 = vsel %vm405, %v714, 0
    %735 = vmatprep.subr.mxu0 0.0
    %736 = vmatpush1.xpose.msra.mxu0 0.0
    %737 = vmatprep.subr.mxu0 0.0
    %738 = vmatpush1.xpose.msra.mxu0 0.0
    %739 = vmatprep.subr.mxu0 0.0
    %740 = vmatpush1.xpose.msra.mxu0 0.0
    %741 = vmatprep.subr.mxu0 0.0
    %742 = vmatpush1.xpose.msra.mxu0 0.0
    %743 = vmatprep.subr.mxu0 0.0
    %744 = vmatpush1.xpose.msra.mxu0 0.0
    %745 = vmatprep.subr.mxu0 0.0
    %746 = vmatpush1.xpose.msra.mxu0 0.0
    %747 = vmatprep.subr.mxu0 0.0
    %748 = vmatpush1.xpose.msra.mxu0 0.0
    %749 = vmatprep.subr.mxu0 0.0
    %750 = vmatpush1.xpose.msra.mxu0 0.0
    %751 = vmatprep.subr.mxu0 0.0
    %752 = vmatpush1.xpose.msra.mxu0 0.0
    %753 = vmatprep.subr.mxu0 0.0
    %754 = vmatpush1.xpose.msra.mxu0 0.0
    %755 = vmatprep.subr.mxu0 0.0
    %756 = vmatpush1.xpose.msra.mxu0 0.0
    %757 = vmatprep.subr.mxu0 0.0
    %758 = vmatpush1.xpose.msra.mxu0 %v733
    %759 = vmatprep.subr.mxu0 0.0
    %760 = vmatpush1.xpose.msra.mxu0 %v731
    %761 = vmatprep.subr.mxu0 0.0
    %762 = vmatpush1.xpose.msra.mxu0 %v729
    %763 = vmatprep.subr.mxu0 0.0
    %764 = vmatpush1.xpose.msra.mxu0 %v727
    %765 = vmatprep.subr.mxu0 0.0
    %766 = vmatpush1.xpose.msra.mxu0 %v725
    %767 = vmatprep.subr.mxu0 0.0
    %768 = vmatpush2.xpose.msra.mxu0 0.0
    %769 = vmatprep.subr.mxu0 0.0
    %770 = vmatpush2.xpose.msra.mxu0 0.0
    %771 = vmatprep.subr.mxu0 0.0
    %772 = vmatpush2.xpose.msra.mxu0 0.0
    %773 = vmatprep.subr.mxu0 0.0
    %774 = vmatpush2.xpose.msra.mxu0 0.0
    %775 = vmatprep.subr.mxu0 0.0
    %776 = vmatpush2.xpose.msra.mxu0 0.0
    %777 = vmatprep.subr.mxu0 0.0
    %778 = vmatpush2.xpose.msra.mxu0 0.0
    %779 = vmatprep.subr.mxu0 0.0
    %780 = vmatpush2.xpose.msra.mxu0 0.0
    %781 = vmatprep.subr.mxu0 0.0
    %782 = vmatpush2.xpose.msra.mxu0 0.0
    %783 = vmatprep.subr.mxu0 0.0
    %784 = vmatpush2.xpose.msra.mxu0 0.0
    %785 = vmatprep.subr.mxu0 0.0
    %786 = vmatpush2.xpose.msra.mxu0 0.0
    %787 = vmatprep.subr.mxu0 0.0
    %788 = vmatpush2.xpose.msra.mxu0 0.0
    %789 = vmatprep.subr.mxu0 0.0
    %790 = vmatpush2.xpose.msra.mxu0 0.0
    %791 = vmatprep.subr.mxu0 0.0
    %792 = vmatpush2.xpose.msra.mxu0 0.0
    %793 = vmatprep.subr.mxu0 0.0
    %794 = vmatpush2.xpose.msra.mxu0 0.0
    %795 = vmatprep.subr.mxu0 0.0
    %796 = vmatpush2.xpose.msra.mxu0 0.0
    %797 = vmatprep.subr.mxu0 0.0
    %798 = vmatpush2.xpose.msra.mxu0 0.0
    %799 = vmatprep.mubr.f32.mxu0 0.0
    %800 = vmatmul.mubr.f32.gmra.mxu0 %v715
    %v801 = vpop.f32.mrf.mxu0
    %v802 = vadd.f32 %v256, %v801
    %v803 = vpop.f32.mrf.mxu0
    %804 = vmatprep.mubr.f32.mxu0 0.0
    %805 = vmatmul.mubr.f32.gmra.mxu0 %v717
    %v806 = vpop.f32.mrf.mxu0
    %v807 = vadd.f32 %v257, %v806
    %v808 = vpop.f32.mrf.mxu0
    %809 = vmatprep.mubr.f32.mxu0 0.0
    %810 = vmatmul.mubr.f32.gmra.mxu0 %v719
    %v811 = vpop.f32.mrf.mxu0
    %v812 = vadd.f32 %v258, %v811
    %v813 = vpop.f32.mrf.mxu0
    %814 = vmatprep.mubr.f32.mxu0 0.0
    %815 = vmatmul.mubr.f32.gmra.mxu0 %v721
    %v816 = vpop.f32.mrf.mxu0
    %v817 = vadd.f32 %v259, %v816
    %v818 = vpop.f32.mrf.mxu0
    %819 = vmatprep.mubr.f32.mxu0 0.0
    %820 = vmatmul.mubr.f32.gmra.mxu0 %v723
    %v821 = vpop.f32.mrf.mxu0
    %v822 = vadd.f32 %v260, %v821
    %v823 = vpop.f32.mrf.mxu0
    %824 = vdwg.mxu0
    %v825 = vsel %vm516, %v802, -inf
    %826 = vmax.xlane.f32.xlu0 %v825
    %v827 = vpop.xlane.xlu0 %826
    %v828 = vsel %vm516, %v807, -inf
    %829 = vmax.xlane.f32.xlu0 %v828
    %v830 = vpop.xlane.xlu0 %829
    %v831 = vsel %vm516, %v812, -inf
    %832 = vmax.xlane.f32.xlu0 %v831
    %v833 = vpop.xlane.xlu0 %832
    %v834 = vsel %vm516, %v817, -inf
    %835 = vmax.xlane.f32.xlu0 %v834
    %v836 = vpop.xlane.xlu0 %835
    %v837 = vsel %vm529, %v822, -inf
    %838 = vmax.xlane.f32.xlu0 %v837
    %v839 = vpop.xlane.xlu0 %838
    %v840 = vsub.f32 %v802, %v827
    %v841 = vsub.f32 %v807, %v830
    %v842 = vsub.f32 %v812, %v833
    %v843 = vsub.f32 %v817, %v836
    %v844 = vsub.f32 %v822, %v839
    %v845 = vmul.f32 %v840, 1.442695
    %v846 = vpow.pop %v845
    %v847 = vmul.f32 %v841, 1.442695
    %v848 = vpow.pop %v847
    %v849 = vmul.f32 %v842, 1.442695
    %v850 = vpow.pop %v849
    %v851 = vmul.f32 %v843, 1.442695
    %v852 = vpow.pop %v851
    %v853 = vmul.f32 %v844, 1.442695
    %v854 = vpow.pop %v853
    %v855 = vsel %vm516, %v846, 0.0
    %856 = vadd.xlane.f32.xlu0 %v855
    %v857 = vpop.xlane.xlu0 %856
    %v858 = vsel %vm516, %v848, 0.0
    %859 = vadd.xlane.f32.xlu0 %v858
    %v860 = vpop.xlane.xlu0 %859
    %v861 = vsel %vm516, %v850, 0.0
    %862 = vadd.xlane.f32.xlu0 %v861
    %v863 = vpop.xlane.xlu0 %862
    %v864 = vsel %vm516, %v852, 0.0
    %865 = vadd.xlane.f32.xlu0 %v864
    %v866 = vpop.xlane.xlu0 %865
    %v867 = vsel %vm529, %v854, 0.0
    %868 = vadd.xlane.f32.xlu0 %v867
    %v869 = vpop.xlane.xlu0 %868
    %v870 = vrcp.pop %v857
    %v871 = vrcp.pop %v860
    %v872 = vrcp.pop %v863
    %v873 = vrcp.pop %v866
    %v874 = vrcp.pop %v869
    %v875 = vmul.f32 %v846, %v870
    %v876 = vmul.f32 %v848, %v871
    %v877 = vmul.f32 %v850, %v872
    %v878 = vmul.f32 %v852, %v873
    %v879 = vmul.f32 %v854, %v874
    %880 = vrot.lane.b32.xlu0 %v367, 56
    %v881 = vpop.permute.xlu0 %880
    %882 = vrot.lane.b32.xlu0 %v372, 56
    %v883 = vpop.permute.xlu0 %882
    %884 = vrot.lane.b32.xlu0 %v377, 56
    %v885 = vpop.permute.xlu0 %884
    %886 = vrot.lane.b32.xlu0 %v382, 56
    %v887 = vpop.permute.xlu0 %886
    %888 = vrot.lane.b32.xlu0 %v387, 56
    %v889 = vpop.permute.xlu0 %888
    %v895 = vsel %vm516, %v875, 0
    %v898 = vsel %vm516, %v876, 0
    %v901 = vsel %vm516, %v877, 0
    %v904 = vsel %vm516, %v878, 0
    %v907 = vsel %vm516, %v879, 0
    %v909 = vsel %vm602, %v889, 0
    %911 = vmatprep.subr.mxu0 0.0
    %912 = vmatpush1.msra.mxu0 0.0
    %913 = vmatprep.subr.mxu0 0.0
    %914 = vmatpush1.msra.mxu0 0.0
    %915 = vmatprep.subr.mxu0 0.0
    %916 = vmatpush1.msra.mxu0 0.0
    %917 = vmatprep.subr.mxu0 0.0
    %918 = vmatpush1.msra.mxu0 0.0
    %919 = vmatprep.subr.mxu0 0.0
    %920 = vmatpush1.msra.mxu0 0.0
    %921 = vmatprep.subr.mxu0 0.0
    %922 = vmatpush1.msra.mxu0 0.0
    %923 = vmatprep.subr.mxu0 0.0
    %924 = vmatpush1.msra.mxu0 0.0
    %925 = vmatprep.subr.mxu0 0.0
    %926 = vmatpush1.msra.mxu0 0.0
    %927 = vmatprep.subr.mxu0 0.0
    %928 = vmatpush1.msra.mxu0 0.0
    %929 = vmatprep.subr.mxu0 0.0
    %930 = vmatpush1.msra.mxu0 0.0
    %931 = vmatprep.subr.mxu0 0.0
    %932 = vmatpush1.msra.mxu0 0.0
    %933 = vmatprep.subr.mxu0 0.0
    %934 = vmatpush1.msra.mxu0 %v909
    %935 = vmatprep.subr.mxu0 0.0
    %936 = vmatpush1.msra.mxu0 %v887
    %937 = vmatprep.subr.mxu0 0.0
    %938 = vmatpush1.msra.mxu0 %v885
    %939 = vmatprep.subr.mxu0 0.0
    %940 = vmatpush1.msra.mxu0 %v883
    %941 = vmatprep.subr.mxu0 0.0
    %942 = vmatpush1.msra.mxu0 %v881
    %943 = vmatprep.subr.mxu0 0.0
    %944 = vmatpush2.msra.mxu0 0.0
    %945 = vmatprep.subr.mxu0 0.0
    %946 = vmatpush2.msra.mxu0 0.0
    %947 = vmatprep.subr.mxu0 0.0
    %948 = vmatpush2.msra.mxu0 0.0
    %949 = vmatprep.subr.mxu0 0.0
    %950 = vmatpush2.msra.mxu0 0.0
    %951 = vmatprep.subr.mxu0 0.0
    %952 = vmatpush2.msra.mxu0 0.0
    %953 = vmatprep.subr.mxu0 0.0
    %954 = vmatpush2.msra.mxu0 0.0
    %955 = vmatprep.subr.mxu0 0.0
    %956 = vmatpush2.msra.mxu0 0.0
    %957 = vmatprep.subr.mxu0 0.0
    %958 = vmatpush2.msra.mxu0 0.0
    %959 = vmatprep.subr.mxu0 0.0
    %960 = vmatpush2.msra.mxu0 0.0
    %961 = vmatprep.subr.mxu0 0.0
    %962 = vmatpush2.msra.mxu0 0.0
    %963 = vmatprep.subr.mxu0 0.0
    %964 = vmatpush2.msra.mxu0 0.0
    %965 = vmatprep.subr.mxu0 0.0
    %966 = vmatpush2.msra.mxu0 0.0
    %967 = vmatprep.subr.mxu0 0.0
    %968 = vmatpush2.msra.mxu0 0.0
    %969 = vmatprep.subr.mxu0 0.0
    %970 = vmatpush2.msra.mxu0 0.0
    %971 = vmatprep.subr.mxu0 0.0
    %972 = vmatpush2.msra.mxu0 0.0
    %973 = vmatprep.subr.mxu0 0.0
    %974 = vmatpush2.msra.mxu0 0.0
    %975 = vmatprep.mubr.f32.mxu0 0.0
    %976 = vmatmul.mubr.f32.gmra.mxu0 %v895
    %v977 = vpop.f32.mrf.mxu0
    %v978 = vadd.f32 0.0, %v977
    %v979 = vpop.f32.mrf.mxu0
    %980 = vmatprep.mubr.f32.mxu0 0.0
    %981 = vmatmul.mubr.f32.gmra.mxu0 %v898
    %v982 = vpop.f32.mrf.mxu0
    %v983 = vadd.f32 0.0, %v982
    %v984 = vpop.f32.mrf.mxu0
    %985 = vmatprep.mubr.f32.mxu0 0.0
    %986 = vmatmul.mubr.f32.gmra.mxu0 %v901
    %v987 = vpop.f32.mrf.mxu0
    %v988 = vadd.f32 0.0, %v987
    %v989 = vpop.f32.mrf.mxu0
    %990 = vmatprep.mubr.f32.mxu0 0.0
    %991 = vmatmul.mubr.f32.gmra.mxu0 %v904
    %v992 = vpop.f32.mrf.mxu0
    %v993 = vadd.f32 0.0, %v992
    %v994 = vpop.f32.mrf.mxu0
    %995 = vmatprep.mubr.f32.mxu0 0.0
    %996 = vmatmul.mubr.f32.gmra.mxu0 %v907
    %v997 = vpop.f32.mrf.mxu0
    %v998 = vadd.f32 0.0, %v997
    %v999 = vpop.f32.mrf.mxu0
    %1000 = vdwg.mxu0
    %1001 = vrot.lane.b32.xlu0 %v367, 112
    %v1002 = vpop.permute.xlu0 %1001
    %1003 = vrot.lane.b32.xlu0 %v372, 112
    %v1004 = vpop.permute.xlu0 %1003
    %1005 = vrot.lane.b32.xlu0 %v377, 112
    %v1006 = vpop.permute.xlu0 %1005
    %1007 = vrot.lane.b32.xlu0 %v382, 112
    %v1008 = vpop.permute.xlu0 %1007
    %1009 = vrot.lane.b32.xlu0 %v387, 112
    %v1010 = vpop.permute.xlu0 %1009
    %1011 = vrot.lane.b32.xlu0 %v367, 80
    %v1012 = vpop.permute.xlu0 %1011
    %1013 = vrot.lane.b32.xlu0 %v372, 80
    %v1014 = vpop.permute.xlu0 %1013
    %1015 = vrot.lane.b32.xlu0 %v377, 80
    %v1016 = vpop.permute.xlu0 %1015
    %1017 = vrot.lane.b32.xlu0 %v382, 80
    %v1018 = vpop.permute.xlu0 %1017
    %1019 = vrot.lane.b32.xlu0 %v387, 80
    %v1020 = vpop.permute.xlu0 %1019
    %v1021 = vsel %vm405, %v1002, 0
    %v1023 = vsel %vm405, %v1004, 0
    %v1025 = vsel %vm405, %v1006, 0
    %v1027 = vsel %vm405, %v1008, 0
    %v1029 = vsel %vm405, %v1010, 0
    %v1031 = vsel %vm405, %v1012, 0
    %v1033 = vsel %vm405, %v1014, 0
    %v1035 = vsel %vm405, %v1016, 0
    %v1037 = vsel %vm405, %v1018, 0
    %v1039 = vsel %vm405, %v1020, 0
    %1041 = vmatprep.subr.mxu0 0.0
    %1042 = vmatpush1.xpose.msra.mxu0 0.0
    %1043 = vmatprep.subr.mxu0 0.0
    %1044 = vmatpush1.xpose.msra.mxu0 0.0
    %1045 = vmatprep.subr.mxu0 0.0
    %1046 = vmatpush1.xpose.msra.mxu0 0.0
    %1047 = vmatprep.subr.mxu0 0.0
    %1048 = vmatpush1.xpose.msra.mxu0 0.0
    %1049 = vmatprep.subr.mxu0 0.0
    %1050 = vmatpush1.xpose.msra.mxu0 0.0
    %1051 = vmatprep.subr.mxu0 0.0
    %1052 = vmatpush1.xpose.msra.mxu0 0.0
    %1053 = vmatprep.subr.mxu0 0.0
    %1054 = vmatpush1.xpose.msra.mxu0 0.0
    %1055 = vmatprep.subr.mxu0 0.0
    %1056 = vmatpush1.xpose.msra.mxu0 0.0
    %1057 = vmatprep.subr.mxu0 0.0
    %1058 = vmatpush1.xpose.msra.mxu0 0.0
    %1059 = vmatprep.subr.mxu0 0.0
    %1060 = vmatpush1.xpose.msra.mxu0 0.0
    %1061 = vmatprep.subr.mxu0 0.0
    %1062 = vmatpush1.xpose.msra.mxu0 0.0
    %1063 = vmatprep.subr.mxu0 0.0
    %1064 = vmatpush1.xpose.msra.mxu0 %v1039
    %1065 = vmatprep.subr.mxu0 0.0
    %1066 = vmatpush1.xpose.msra.mxu0 %v1037
    %1067 = vmatprep.subr.mxu0 0.0
    %1068 = vmatpush1.xpose.msra.mxu0 %v1035
    %1069 = vmatprep.subr.mxu0 0.0
    %1070 = vmatpush1.xpose.msra.mxu0 %v1033
    %1071 = vmatprep.subr.mxu0 0.0
    %1072 = vmatpush1.xpose.msra.mxu0 %v1031
    %1073 = vmatprep.subr.mxu0 0.0
    %1074 = vmatpush2.xpose.msra.mxu0 0.0
    %1075 = vmatprep.subr.mxu0 0.0
    %1076 = vmatpush2.xpose.msra.mxu0 0.0
    %1077 = vmatprep.subr.mxu0 0.0
    %1078 = vmatpush2.xpose.msra.mxu0 0.0
    %1079 = vmatprep.subr.mxu0 0.0
    %1080 = vmatpush2.xpose.msra.mxu0 0.0
    %1081 = vmatprep.subr.mxu0 0.0
    %1082 = vmatpush2.xpose.msra.mxu0 0.0
    %1083 = vmatprep.subr.mxu0 0.0
    %1084 = vmatpush2.xpose.msra.mxu0 0.0
    %1085 = vmatprep.subr.mxu0 0.0
    %1086 = vmatpush2.xpose.msra.mxu0 0.0
    %1087 = vmatprep.subr.mxu0 0.0
    %1088 = vmatpush2.xpose.msra.mxu0 0.0
    %1089 = vmatprep.subr.mxu0 0.0
    %1090 = vmatpush2.xpose.msra.mxu0 0.0
    %1091 = vmatprep.subr.mxu0 0.0
    %1092 = vmatpush2.xpose.msra.mxu0 0.0
    %1093 = vmatprep.subr.mxu0 0.0
    %1094 = vmatpush2.xpose.msra.mxu0 0.0
    %1095 = vmatprep.subr.mxu0 0.0
    %1096 = vmatpush2.xpose.msra.mxu0 0.0
    %1097 = vmatprep.subr.mxu0 0.0
    %1098 = vmatpush2.xpose.msra.mxu0 0.0
    %1099 = vmatprep.subr.mxu0 0.0
    %1100 = vmatpush2.xpose.msra.mxu0 0.0
    %1101 = vmatprep.subr.mxu0 0.0
    %1102 = vmatpush2.xpose.msra.mxu0 0.0
    %1103 = vmatprep.subr.mxu0 0.0
    %1104 = vmatpush2.xpose.msra.mxu0 0.0
    %1105 = vmatprep.mubr.f32.mxu0 0.0
    %1106 = vmatmul.mubr.f32.gmra.mxu0 %v1021
    %v1107 = vpop.f32.mrf.mxu0
    %v1108 = vadd.f32 %v256, %v1107
    %v1109 = vpop.f32.mrf.mxu0
    %1110 = vmatprep.mubr.f32.mxu0 0.0
    %1111 = vmatmul.mubr.f32.gmra.mxu0 %v1023
    %v1112 = vpop.f32.mrf.mxu0
    %v1113 = vadd.f32 %v257, %v1112
    %v1114 = vpop.f32.mrf.mxu0
    %1115 = vmatprep.mubr.f32.mxu0 0.0
    %1116 = vmatmul.mubr.f32.gmra.mxu0 %v1025
    %v1117 = vpop.f32.mrf.mxu0
    %v1118 = vadd.f32 %v258, %v1117
    %v1119 = vpop.f32.mrf.mxu0
    %1120 = vmatprep.mubr.f32.mxu0 0.0
    %1121 = vmatmul.mubr.f32.gmra.mxu0 %v1027
    %v1122 = vpop.f32.mrf.mxu0
    %v1123 = vadd.f32 %v259, %v1122
    %v1124 = vpop.f32.mrf.mxu0
    %1125 = vmatprep.mubr.f32.mxu0 0.0
    %1126 = vmatmul.mubr.f32.gmra.mxu0 %v1029
    %v1127 = vpop.f32.mrf.mxu0
    %v1128 = vadd.f32 %v260, %v1127
    %v1129 = vpop.f32.mrf.mxu0
    %1130 = vdwg.mxu0
    %v1131 = vsel %vm516, %v1108, -inf
    %1132 = vmax.xlane.f32.xlu0 %v1131
    %v1133 = vpop.xlane.xlu0 %1132
    %v1134 = vsel %vm516, %v1113, -inf
    %1135 = vmax.xlane.f32.xlu0 %v1134
    %v1136 = vpop.xlane.xlu0 %1135
    %v1137 = vsel %vm516, %v1118, -inf
    %1138 = vmax.xlane.f32.xlu0 %v1137
    %v1139 = vpop.xlane.xlu0 %1138
    %v1140 = vsel %vm516, %v1123, -inf
    %1141 = vmax.xlane.f32.xlu0 %v1140
    %v1142 = vpop.xlane.xlu0 %1141
    %v1143 = vsel %vm529, %v1128, -inf
    %1144 = vmax.xlane.f32.xlu0 %v1143
    %v1145 = vpop.xlane.xlu0 %1144
    %v1146 = vsub.f32 %v1108, %v1133
    %v1147 = vsub.f32 %v1113, %v1136
    %v1148 = vsub.f32 %v1118, %v1139
    %v1149 = vsub.f32 %v1123, %v1142
    %v1150 = vsub.f32 %v1128, %v1145
    %v1151 = vmul.f32 %v1146, 1.442695
    %v1152 = vpow.pop %v1151
    %v1153 = vmul.f32 %v1147, 1.442695
    %v1154 = vpow.pop %v1153
    %v1155 = vmul.f32 %v1148, 1.442695
    %v1156 = vpow.pop %v1155
    %v1157 = vmul.f32 %v1149, 1.442695
    %v1158 = vpow.pop %v1157
    %v1159 = vmul.f32 %v1150, 1.442695
    %v1160 = vpow.pop %v1159
    %v1161 = vsel %vm516, %v1152, 0.0
    %1162 = vadd.xlane.f32.xlu0 %v1161
    %v1163 = vpop.xlane.xlu0 %1162
    %v1164 = vsel %vm516, %v1154, 0.0
    %1165 = vadd.xlane.f32.xlu0 %v1164
    %v1166 = vpop.xlane.xlu0 %1165
    %v1167 = vsel %vm516, %v1156, 0.0
    %1168 = vadd.xlane.f32.xlu0 %v1167
    %v1169 = vpop.xlane.xlu0 %1168
    %v1170 = vsel %vm516, %v1158, 0.0
    %1171 = vadd.xlane.f32.xlu0 %v1170
    %v1172 = vpop.xlane.xlu0 %1171
    %v1173 = vsel %vm529, %v1160, 0.0
    %1174 = vadd.xlane.f32.xlu0 %v1173
    %v1175 = vpop.xlane.xlu0 %1174
    %v1176 = vrcp.pop %v1163
    %v1177 = vrcp.pop %v1166
    %v1178 = vrcp.pop %v1169
    %v1179 = vrcp.pop %v1172
    %v1180 = vrcp.pop %v1175
    %v1181 = vmul.f32 %v1152, %v1176
    %v1182 = vmul.f32 %v1154, %v1177
    %v1183 = vmul.f32 %v1156, %v1178
    %v1184 = vmul.f32 %v1158, %v1179
    %v1185 = vmul.f32 %v1160, %v1180
    %1186 = vrot.lane.b32.xlu0 %v367, 48
    %v1187 = vpop.permute.xlu0 %1186
    %1188 = vrot.lane.b32.xlu0 %v372, 48
    %v1189 = vpop.permute.xlu0 %1188
    %1190 = vrot.lane.b32.xlu0 %v377, 48
    %v1191 = vpop.permute.xlu0 %1190
    %1192 = vrot.lane.b32.xlu0 %v382, 48
    %v1193 = vpop.permute.xlu0 %1192
    %1194 = vrot.lane.b32.xlu0 %v387, 48
    %v1195 = vpop.permute.xlu0 %1194
    %v1201 = vsel %vm516, %v1181, 0
    %v1204 = vsel %vm516, %v1182, 0
    %v1207 = vsel %vm516, %v1183, 0
    %v1210 = vsel %vm516, %v1184, 0
    %v1213 = vsel %vm516, %v1185, 0
    %v1215 = vsel %vm602, %v1195, 0
    %1217 = vmatprep.subr.mxu0 0.0
    %1218 = vmatpush1.msra.mxu0 0.0
    %1219 = vmatprep.subr.mxu0 0.0
    %1220 = vmatpush1.msra.mxu0 0.0
    %1221 = vmatprep.subr.mxu0 0.0
    %1222 = vmatpush1.msra.mxu0 0.0
    %1223 = vmatprep.subr.mxu0 0.0
    %1224 = vmatpush1.msra.mxu0 0.0
    %1225 = vmatprep.subr.mxu0 0.0
    %1226 = vmatpush1.msra.mxu0 0.0
    %1227 = vmatprep.subr.mxu0 0.0
    %1228 = vmatpush1.msra.mxu0 0.0
    %1229 = vmatprep.subr.mxu0 0.0
    %1230 = vmatpush1.msra.mxu0 0.0
    %1231 = vmatprep.subr.mxu0 0.0
    %1232 = vmatpush1.msra.mxu0 0.0
    %1233 = vmatprep.subr.mxu0 0.0
    %1234 = vmatpush1.msra.mxu0 0.0
    %1235 = vmatprep.subr.mxu0 0.0
    %1236 = vmatpush1.msra.mxu0 0.0
    %1237 = vmatprep.subr.mxu0 0.0
    %1238 = vmatpush1.msra.mxu0 0.0
    %1239 = vmatprep.subr.mxu0 0.0
    %1240 = vmatpush1.msra.mxu0 %v1215
    %1241 = vmatprep.subr.mxu0 0.0
    %1242 = vmatpush1.msra.mxu0 %v1193
    %1243 = vmatprep.subr.mxu0 0.0
    %1244 = vmatpush1.msra.mxu0 %v1191
    %1245 = vmatprep.subr.mxu0 0.0
    %1246 = vmatpush1.msra.mxu0 %v1189
    %1247 = vmatprep.subr.mxu0 0.0
    %1248 = vmatpush1.msra.mxu0 %v1187
    %1249 = vmatprep.subr.mxu0 0.0
    %1250 = vmatpush2.msra.mxu0 0.0
    %1251 = vmatprep.subr.mxu0 0.0
    %1252 = vmatpush2.msra.mxu0 0.0
    %1253 = vmatprep.subr.mxu0 0.0
    %1254 = vmatpush2.msra.mxu0 0.0
    %1255 = vmatprep.subr.mxu0 0.0
    %1256 = vmatpush2.msra.mxu0 0.0
    %1257 = vmatprep.subr.mxu0 0.0
    %1258 = vmatpush2.msra.mxu0 0.0
    %1259 = vmatprep.subr.mxu0 0.0
    %1260 = vmatpush2.msra.mxu0 0.0
    %1261 = vmatprep.subr.mxu0 0.0
    %1262 = vmatpush2.msra.mxu0 0.0
    %1263 = vmatprep.subr.mxu0 0.0
    %1264 = vmatpush2.msra.mxu0 0.0
    %1265 = vmatprep.subr.mxu0 0.0
    %1266 = vmatpush2.msra.mxu0 0.0
    %1267 = vmatprep.subr.mxu0 0.0
    %1268 = vmatpush2.msra.mxu0 0.0
    %1269 = vmatprep.subr.mxu0 0.0
    %1270 = vmatpush2.msra.mxu0 0.0
    %1271 = vmatprep.subr.mxu0 0.0
    %1272 = vmatpush2.msra.mxu0 0.0
    %1273 = vmatprep.subr.mxu0 0.0
    %1274 = vmatpush2.msra.mxu0 0.0
    %1275 = vmatprep.subr.mxu0 0.0
    %1276 = vmatpush2.msra.mxu0 0.0
    %1277 = vmatprep.subr.mxu0 0.0
    %1278 = vmatpush2.msra.mxu0 0.0
    %1279 = vmatprep.subr.mxu0 0.0
    %1280 = vmatpush2.msra.mxu0 0.0
    %1281 = vmatprep.mubr.f32.mxu0 0.0
    %1282 = vmatmul.mubr.f32.gmra.mxu0 %v1201
    %v1283 = vpop.f32.mrf.mxu0
    %v1284 = vadd.f32 0.0, %v1283
    %v1285 = vpop.f32.mrf.mxu0
    %1286 = vmatprep.mubr.f32.mxu0 0.0
    %1287 = vmatmul.mubr.f32.gmra.mxu0 %v1204
    %v1288 = vpop.f32.mrf.mxu0
    %v1289 = vadd.f32 0.0, %v1288
    %v1290 = vpop.f32.mrf.mxu0
    %1291 = vmatprep.mubr.f32.mxu0 0.0
    %1292 = vmatmul.mubr.f32.gmra.mxu0 %v1207
    %v1293 = vpop.f32.mrf.mxu0
    %v1294 = vadd.f32 0.0, %v1293
    %v1295 = vpop.f32.mrf.mxu0
    %1296 = vmatprep.mubr.f32.mxu0 0.0
    %1297 = vmatmul.mubr.f32.gmra.mxu0 %v1210
    %v1298 = vpop.f32.mrf.mxu0
    %v1299 = vadd.f32 0.0, %v1298
    %v1300 = vpop.f32.mrf.mxu0
    %1301 = vmatprep.mubr.f32.mxu0 0.0
    %1302 = vmatmul.mubr.f32.gmra.mxu0 %v1213
    %v1303 = vpop.f32.mrf.mxu0
    %v1304 = vadd.f32 0.0, %v1303
    %v1305 = vpop.f32.mrf.mxu0
    %1306 = vdwg.mxu0
    %1307 = vrot.lane.b32.xlu0 %v367, 104
    %v1308 = vpop.permute.xlu0 %1307
    %1309 = vrot.lane.b32.xlu0 %v372, 104
    %v1310 = vpop.permute.xlu0 %1309
    %1311 = vrot.lane.b32.xlu0 %v377, 104
    %v1312 = vpop.permute.xlu0 %1311
    %1313 = vrot.lane.b32.xlu0 %v382, 104
    %v1314 = vpop.permute.xlu0 %1313
    %1315 = vrot.lane.b32.xlu0 %v387, 104
    %v1316 = vpop.permute.xlu0 %1315
    %1317 = vrot.lane.b32.xlu0 %v367, 72
    %v1318 = vpop.permute.xlu0 %1317
    %1319 = vrot.lane.b32.xlu0 %v372, 72
    %v1320 = vpop.permute.xlu0 %1319
    %1321 = vrot.lane.b32.xlu0 %v377, 72
    %v1322 = vpop.permute.xlu0 %1321
    %1323 = vrot.lane.b32.xlu0 %v382, 72
    %v1324 = vpop.permute.xlu0 %1323
    %1325 = vrot.lane.b32.xlu0 %v387, 72
    %v1326 = vpop.permute.xlu0 %1325
    %v1327 = vsel %vm405, %v1308, 0
    %v1329 = vsel %vm405, %v1310, 0
    %v1331 = vsel %vm405, %v1312, 0
    %v1333 = vsel %vm405, %v1314, 0
    %v1335 = vsel %vm405, %v1316, 0
    %v1337 = vsel %vm405, %v1318, 0
    %v1339 = vsel %vm405, %v1320, 0
    %v1341 = vsel %vm405, %v1322, 0
    %v1343 = vsel %vm405, %v1324, 0
    %v1345 = vsel %vm405, %v1326, 0
    %1347 = vmatprep.subr.mxu0 0.0
    %1348 = vmatpush1.xpose.msra.mxu0 0.0
    %1349 = vmatprep.subr.mxu0 0.0
    %1350 = vmatpush1.xpose.msra.mxu0 0.0
    %1351 = vmatprep.subr.mxu0 0.0
    %1352 = vmatpush1.xpose.msra.mxu0 0.0
    %1353 = vmatprep.subr.mxu0 0.0
    %1354 = vmatpush1.xpose.msra.mxu0 0.0
    %1355 = vmatprep.subr.mxu0 0.0
    %1356 = vmatpush1.xpose.msra.mxu0 0.0
    %1357 = vmatprep.subr.mxu0 0.0
    %1358 = vmatpush1.xpose.msra.mxu0 0.0
    %1359 = vmatprep.subr.mxu0 0.0
    %1360 = vmatpush1.xpose.msra.mxu0 0.0
    %1361 = vmatprep.subr.mxu0 0.0
    %1362 = vmatpush1.xpose.msra.mxu0 0.0
    %1363 = vmatprep.subr.mxu0 0.0
    %1364 = vmatpush1.xpose.msra.mxu0 0.0
    %1365 = vmatprep.subr.mxu0 0.0
    %1366 = vmatpush1.xpose.msra.mxu0 0.0
    %1367 = vmatprep.subr.mxu0 0.0
    %1368 = vmatpush1.xpose.msra.mxu0 0.0
    %1369 = vmatprep.subr.mxu0 0.0
    %1370 = vmatpush1.xpose.msra.mxu0 %v1345
    %1371 = vmatprep.subr.mxu0 0.0
    %1372 = vmatpush1.xpose.msra.mxu0 %v1343
    %1373 = vmatprep.subr.mxu0 0.0
    %1374 = vmatpush1.xpose.msra.mxu0 %v1341
    %1375 = vmatprep.subr.mxu0 0.0
    %1376 = vmatpush1.xpose.msra.mxu0 %v1339
    %1377 = vmatprep.subr.mxu0 0.0
    %1378 = vmatpush1.xpose.msra.mxu0 %v1337
    %1379 = vmatprep.subr.mxu0 0.0
    %1380 = vmatpush2.xpose.msra.mxu0 0.0
    %1381 = vmatprep.subr.mxu0 0.0
    %1382 = vmatpush2.xpose.msra.mxu0 0.0
    %1383 = vmatprep.subr.mxu0 0.0
    %1384 = vmatpush2.xpose.msra.mxu0 0.0
    %1385 = vmatprep.subr.mxu0 0.0
    %1386 = vmatpush2.xpose.msra.mxu0 0.0
    %1387 = vmatprep.subr.mxu0 0.0
    %1388 = vmatpush2.xpose.msra.mxu0 0.0
    %1389 = vmatprep.subr.mxu0 0.0
    %1390 = vmatpush2.xpose.msra.mxu0 0.0
    %1391 = vmatprep.subr.mxu0 0.0
    %1392 = vmatpush2.xpose.msra.mxu0 0.0
    %1393 = vmatprep.subr.mxu0 0.0
    %1394 = vmatpush2.xpose.msra.mxu0 0.0
    %1395 = vmatprep.subr.mxu0 0.0
    %1396 = vmatpush2.xpose.msra.mxu0 0.0
    %1397 = vmatprep.subr.mxu0 0.0
    %1398 = vmatpush2.xpose.msra.mxu0 0.0
    %1399 = vmatprep.subr.mxu0 0.0
    %1400 = vmatpush2.xpose.msra.mxu0 0.0
    %1401 = vmatprep.subr.mxu0 0.0
    %1402 = vmatpush2.xpose.msra.mxu0 0.0
    %1403 = vmatprep.subr.mxu0 0.0
    %1404 = vmatpush2.xpose.msra.mxu0 0.0
    %1405 = vmatprep.subr.mxu0 0.0
    %1406 = vmatpush2.xpose.msra.mxu0 0.0
    %1407 = vmatprep.subr.mxu0 0.0
    %1408 = vmatpush2.xpose.msra.mxu0 0.0
    %1409 = vmatprep.subr.mxu0 0.0
    %1410 = vmatpush2.xpose.msra.mxu0 0.0
    %1411 = vmatprep.mubr.f32.mxu0 0.0
    %1412 = vmatmul.mubr.f32.gmra.mxu0 %v1327
    %v1413 = vpop.f32.mrf.mxu0
    %v1414 = vadd.f32 %v256, %v1413
    %v1415 = vpop.f32.mrf.mxu0
    %1416 = vmatprep.mubr.f32.mxu0 0.0
    %1417 = vmatmul.mubr.f32.gmra.mxu0 %v1329
    %v1418 = vpop.f32.mrf.mxu0
    %v1419 = vadd.f32 %v257, %v1418
    %v1420 = vpop.f32.mrf.mxu0
    %1421 = vmatprep.mubr.f32.mxu0 0.0
    %1422 = vmatmul.mubr.f32.gmra.mxu0 %v1331
    %v1423 = vpop.f32.mrf.mxu0
    %v1424 = vadd.f32 %v258, %v1423
    %v1425 = vpop.f32.mrf.mxu0
    %1426 = vmatprep.mubr.f32.mxu0 0.0
    %1427 = vmatmul.mubr.f32.gmra.mxu0 %v1333
    %v1428 = vpop.f32.mrf.mxu0
    %v1429 = vadd.f32 %v259, %v1428
    %v1430 = vpop.f32.mrf.mxu0
    %1431 = vmatprep.mubr.f32.mxu0 0.0
    %1432 = vmatmul.mubr.f32.gmra.mxu0 %v1335
    %v1433 = vpop.f32.mrf.mxu0
    %v1434 = vadd.f32 %v260, %v1433
    %v1435 = vpop.f32.mrf.mxu0
    %1436 = vdwg.mxu0
    %v1437 = vsel %vm516, %v1414, -inf
    %1438 = vmax.xlane.f32.xlu0 %v1437
    %v1439 = vpop.xlane.xlu0 %1438
    %v1440 = vsel %vm516, %v1419, -inf
    %1441 = vmax.xlane.f32.xlu0 %v1440
    %v1442 = vpop.xlane.xlu0 %1441
    %v1443 = vsel %vm516, %v1424, -inf
    %1444 = vmax.xlane.f32.xlu0 %v1443
    %v1445 = vpop.xlane.xlu0 %1444
    %v1446 = vsel %vm516, %v1429, -inf
    %1447 = vmax.xlane.f32.xlu0 %v1446
    %v1448 = vpop.xlane.xlu0 %1447
    %v1449 = vsel %vm529, %v1434, -inf
    %1450 = vmax.xlane.f32.xlu0 %v1449
    %v1451 = vpop.xlane.xlu0 %1450
    %v1452 = vsub.f32 %v1414, %v1439
    %v1453 = vsub.f32 %v1419, %v1442
    %v1454 = vsub.f32 %v1424, %v1445
    %v1455 = vsub.f32 %v1429, %v1448
    %v1456 = vsub.f32 %v1434, %v1451
    %v1457 = vmul.f32 %v1452, 1.442695
    %v1458 = vpow.pop %v1457
    %v1459 = vmul.f32 %v1453, 1.442695
    %v1460 = vpow.pop %v1459
    %v1461 = vmul.f32 %v1454, 1.442695
    %v1462 = vpow.pop %v1461
    %v1463 = vmul.f32 %v1455, 1.442695
    %v1464 = vpow.pop %v1463
    %v1465 = vmul.f32 %v1456, 1.442695
    %v1466 = vpow.pop %v1465
    %v1467 = vsel %vm516, %v1458, 0.0
    %1468 = vadd.xlane.f32.xlu0 %v1467
    %v1469 = vpop.xlane.xlu0 %1468
    %v1470 = vsel %vm516, %v1460, 0.0
    %1471 = vadd.xlane.f32.xlu0 %v1470
    %v1472 = vpop.xlane.xlu0 %1471
    %v1473 = vsel %vm516, %v1462, 0.0
    %1474 = vadd.xlane.f32.xlu0 %v1473
    %v1475 = vpop.xlane.xlu0 %1474
    %v1476 = vsel %vm516, %v1464, 0.0
    %1477 = vadd.xlane.f32.xlu0 %v1476
    %v1478 = vpop.xlane.xlu0 %1477
    %v1479 = vsel %vm529, %v1466, 0.0
    %1480 = vadd.xlane.f32.xlu0 %v1479
    %v1481 = vpop.xlane.xlu0 %1480
    %v1482 = vrcp.pop %v1469
    %v1483 = vrcp.pop %v1472
    %v1484 = vrcp.pop %v1475
    %v1485 = vrcp.pop %v1478
    %v1486 = vrcp.pop %v1481
    %v1487 = vmul.f32 %v1458, %v1482
    %v1488 = vmul.f32 %v1460, %v1483
    %v1489 = vmul.f32 %v1462, %v1484
    %v1490 = vmul.f32 %v1464, %v1485
    %v1491 = vmul.f32 %v1466, %v1486
    %1492 = vrot.lane.b32.xlu0 %v367, 40
    %v1493 = vpop.permute.xlu0 %1492
    %1494 = vrot.lane.b32.xlu0 %v372, 40
    %v1495 = vpop.permute.xlu0 %1494
    %1496 = vrot.lane.b32.xlu0 %v377, 40
    %v1497 = vpop.permute.xlu0 %1496
    %1498 = vrot.lane.b32.xlu0 %v382, 40
    %v1499 = vpop.permute.xlu0 %1498
    %1500 = vrot.lane.b32.xlu0 %v387, 40
    %v1501 = vpop.permute.xlu0 %1500
    %v1507 = vsel %vm516, %v1487, 0
    %v1510 = vsel %vm516, %v1488, 0
    %v1513 = vsel %vm516, %v1489, 0
    %v1516 = vsel %vm516, %v1490, 0
    %v1519 = vsel %vm516, %v1491, 0
    %v1521 = vsel %vm602, %v1501, 0
    %1523 = vmatprep.subr.mxu0 0.0
    %1524 = vmatpush1.msra.mxu0 0.0
    %1525 = vmatprep.subr.mxu0 0.0
    %1526 = vmatpush1.msra.mxu0 0.0
    %1527 = vmatprep.subr.mxu0 0.0
    %1528 = vmatpush1.msra.mxu0 0.0
    %1529 = vmatprep.subr.mxu0 0.0
    %1530 = vmatpush1.msra.mxu0 0.0
    %1531 = vmatprep.subr.mxu0 0.0
    %1532 = vmatpush1.msra.mxu0 0.0
    %1533 = vmatprep.subr.mxu0 0.0
    %1534 = vmatpush1.msra.mxu0 0.0
    %1535 = vmatprep.subr.mxu0 0.0
    %1536 = vmatpush1.msra.mxu0 0.0
    %1537 = vmatprep.subr.mxu0 0.0
    %1538 = vmatpush1.msra.mxu0 0.0
    %1539 = vmatprep.subr.mxu0 0.0
    %1540 = vmatpush1.msra.mxu0 0.0
    %1541 = vmatprep.subr.mxu0 0.0
    %1542 = vmatpush1.msra.mxu0 0.0
    %1543 = vmatprep.subr.mxu0 0.0
    %1544 = vmatpush1.msra.mxu0 0.0
    %1545 = vmatprep.subr.mxu0 0.0
    %1546 = vmatpush1.msra.mxu0 %v1521
    %1547 = vmatprep.subr.mxu0 0.0
    %1548 = vmatpush1.msra.mxu0 %v1499
    %1549 = vmatprep.subr.mxu0 0.0
    %1550 = vmatpush1.msra.mxu0 %v1497
    %1551 = vmatprep.subr.mxu0 0.0
    %1552 = vmatpush1.msra.mxu0 %v1495
    %1553 = vmatprep.subr.mxu0 0.0
    %1554 = vmatpush1.msra.mxu0 %v1493
    %1555 = vmatprep.subr.mxu0 0.0
    %1556 = vmatpush2.msra.mxu0 0.0
    %1557 = vmatprep.subr.mxu0 0.0
    %1558 = vmatpush2.msra.mxu0 0.0
    %1559 = vmatprep.subr.mxu0 0.0
    %1560 = vmatpush2.msra.mxu0 0.0
    %1561 = vmatprep.subr.mxu0 0.0
    %1562 = vmatpush2.msra.mxu0 0.0
    %1563 = vmatprep.subr.mxu0 0.0
    %1564 = vmatpush2.msra.mxu0 0.0
    %1565 = vmatprep.subr.mxu0 0.0
    %1566 = vmatpush2.msra.mxu0 0.0
    %1567 = vmatprep.subr.mxu0 0.0
    %1568 = vmatpush2.msra.mxu0 0.0
    %1569 = vmatprep.subr.mxu0 0.0
    %1570 = vmatpush2.msra.mxu0 0.0
    %1571 = vmatprep.subr.mxu0 0.0
    %1572 = vmatpush2.msra.mxu0 0.0
    %1573 = vmatprep.subr.mxu0 0.0
    %1574 = vmatpush2.msra.mxu0 0.0
    %1575 = vmatprep.subr.mxu0 0.0
    %1576 = vmatpush2.msra.mxu0 0.0
    %1577 = vmatprep.subr.mxu0 0.0
    %1578 = vmatpush2.msra.mxu0 0.0
    %1579 = vmatprep.subr.mxu0 0.0
    %1580 = vmatpush2.msra.mxu0 0.0
    %1581 = vmatprep.subr.mxu0 0.0
    %1582 = vmatpush2.msra.mxu0 0.0
    %1583 = vmatprep.subr.mxu0 0.0
    %1584 = vmatpush2.msra.mxu0 0.0
    %1585 = vmatprep.subr.mxu0 0.0
    %1586 = vmatpush2.msra.mxu0 0.0
    %1587 = vmatprep.mubr.f32.mxu0 0.0
    %1588 = vmatmul.mubr.f32.gmra.mxu0 %v1507
    %v1589 = vpop.f32.mrf.mxu0
    %v1590 = vadd.f32 0.0, %v1589
    %v1591 = vpop.f32.mrf.mxu0
    %1592 = vmatprep.mubr.f32.mxu0 0.0
    %1593 = vmatmul.mubr.f32.gmra.mxu0 %v1510
    %v1594 = vpop.f32.mrf.mxu0
    %v1595 = vadd.f32 0.0, %v1594
    %v1596 = vpop.f32.mrf.mxu0
    %1597 = vmatprep.mubr.f32.mxu0 0.0
    %1598 = vmatmul.mubr.f32.gmra.mxu0 %v1513
    %v1599 = vpop.f32.mrf.mxu0
    %v1600 = vadd.f32 0.0, %v1599
    %v1601 = vpop.f32.mrf.mxu0
    %1602 = vmatprep.mubr.f32.mxu0 0.0
    %1603 = vmatmul.mubr.f32.gmra.mxu0 %v1516
    %v1604 = vpop.f32.mrf.mxu0
    %v1605 = vadd.f32 0.0, %v1604
    %v1606 = vpop.f32.mrf.mxu0
    %1607 = vmatprep.mubr.f32.mxu0 0.0
    %1608 = vmatmul.mubr.f32.gmra.mxu0 %v1519
    %v1609 = vpop.f32.mrf.mxu0
    %v1610 = vadd.f32 0.0, %v1609
    %v1611 = vpop.f32.mrf.mxu0
    %1612 = vdwg.mxu0
    %1618 = vrot.lane.b32.xlu0 %v978, 8
    %v1619 = vpop.permute.xlu0 %1618
    %1620 = vrot.lane.b32.xlu0 %v983, 8
    %v1621 = vpop.permute.xlu0 %1620
    %1622 = vrot.lane.b32.xlu0 %v988, 8
    %v1623 = vpop.permute.xlu0 %1622
    %1624 = vrot.lane.b32.xlu0 %v993, 8
    %v1625 = vpop.permute.xlu0 %1624
    %1626 = vrot.lane.b32.xlu0 %v998, 8
    %v1627 = vpop.permute.xlu0 %1626
    %1638 = vrot.lane.b32.xlu0 %v1284, 16
    %v1639 = vpop.permute.xlu0 %1638
    %1640 = vrot.lane.b32.xlu0 %v1289, 16
    %v1641 = vpop.permute.xlu0 %1640
    %1642 = vrot.lane.b32.xlu0 %v1294, 16
    %v1643 = vpop.permute.xlu0 %1642
    %1644 = vrot.lane.b32.xlu0 %v1299, 16
    %v1645 = vpop.permute.xlu0 %1644
    %1646 = vrot.lane.b32.xlu0 %v1304, 16
    %v1647 = vpop.permute.xlu0 %1646
    %1658 = vrot.lane.b32.xlu0 %v1590, 24
    %v1659 = vpop.permute.xlu0 %1658
    %1660 = vrot.lane.b32.xlu0 %v1595, 24
    %v1661 = vpop.permute.xlu0 %1660
    %1662 = vrot.lane.b32.xlu0 %v1600, 24
    %v1663 = vpop.permute.xlu0 %1662
    %1664 = vrot.lane.b32.xlu0 %v1605, 24
    %v1665 = vpop.permute.xlu0 %1664
    %1666 = vrot.lane.b32.xlu0 %v1610, 24
    %v1667 = vpop.permute.xlu0 %1666
    %v1673 = vsel %vm405, %v672, %v1619
    %v1674 = vsel %vm405, %v677, %v1621
    %v1675 = vsel %vm405, %v682, %v1623
    %v1676 = vsel %vm405, %v687, %v1625
    %v1677 = vsel %vm405, %v692, %v1627
    %vm1678 = vcmask 130048
    %v1679 = vsel %vm1678, %v1673, %v1639
    %v1680 = vsel %vm1678, %v1674, %v1641
    %v1681 = vsel %vm1678, %v1675, %v1643
    %v1682 = vsel %vm1678, %v1676, %v1645
    %v1683 = vsel %vm1678, %v1677, %v1647
    %vm1684 = vcmask 195584
    %v1685 = vsel %vm1684, %v1679, %v1659
    %v1686 = vsel %vm1684, %v1680, %v1661
    %v1687 = vsel %vm1684, %v1681, %v1663
    %v1688 = vsel %vm1684, %v1682, %v1665
    %v1689 = vsel %vm1684, %v1683, %v1667
    %v1690 = vlaneseq
    %v1691 = vshrl.u32 %v1690, 7
    %v1692 = vsub.s32 1, %v1691
    %v1693 = vrot.slane %v261, %v1692
    %v1695 = vsel %vm284, %v1685, 0
    %v1698 = vsel %vm284, %v1686, 0
    %v1701 = vsel %vm284, %v1687, 0
    %v1704 = vsel %vm284, %v1688, 0
    %v1707 = vsel %vm284, %v1689, 0
    %1709 = vmatprep.subr.mxu0 0.0
    %1710 = vmatpush1.msra.mxu0 0.0
    %1711 = vmatprep.subr.mxu0 0.0
    %1712 = vmatpush1.msra.mxu0 0.0
    %1713 = vmatprep.subr.mxu0 0.0
    %1714 = vmatpush1.msra.mxu0 0.0
    %1715 = vmatprep.subr.mxu0 0.0
    %1716 = vmatpush1.msra.mxu0 0.0
    %1717 = vmatprep.subr.mxu0 0.0
    %1718 = vmatpush1.msra.mxu0 0.0
    %1719 = vmatprep.subr.mxu0 0.0
    %1720 = vmatpush1.msra.mxu0 0.0
    %1721 = vmatprep.subr.mxu0 0.0
    %1722 = vmatpush1.msra.mxu0 0.0
    %1723 = vmatprep.subr.mxu0 0.0
    %1724 = vmatpush1.msra.mxu0 0.0
    %1725 = vmatprep.subr.mxu0 0.0
    %1726 = vmatpush1.msra.mxu0 0.0
    %1727 = vmatprep.subr.mxu0 0.0
    %1728 = vmatpush1.msra.mxu0 0.0
    %1729 = vmatprep.subr.mxu0 0.0
    %1730 = vmatpush1.msra.mxu0 0.0
    %1731 = vmatprep.subr.mxu0 0.0
    %1732 = vmatpush1.msra.mxu0 0.0
    %1733 = vmatprep.subr.mxu0 0.0
    %1734 = vmatpush1.msra.mxu0 %v271
    %1735 = vmatprep.subr.mxu0 0.0
    %1736 = vmatpush1.msra.mxu0 %v270
    %1737 = vmatprep.subr.mxu0 0.0
    %1738 = vmatpush1.msra.mxu0 %v269
    %1739 = vmatprep.subr.mxu0 0.0
    %1740 = vmatpush1.msra.mxu0 %v268
    %1741 = vmatprep.subr.mxu0 0.0
    %1742 = vmatpush2.msra.mxu0 0.0
    %1743 = vmatprep.subr.mxu0 0.0
    %1744 = vmatpush2.msra.mxu0 0.0
    %1745 = vmatprep.subr.mxu0 0.0
    %1746 = vmatpush2.msra.mxu0 0.0
    %1747 = vmatprep.subr.mxu0 0.0
    %1748 = vmatpush2.msra.mxu0 0.0
    %1749 = vmatprep.subr.mxu0 0.0
    %1750 = vmatpush2.msra.mxu0 0.0
    %1751 = vmatprep.subr.mxu0 0.0
    %1752 = vmatpush2.msra.mxu0 0.0
    %1753 = vmatprep.subr.mxu0 0.0
    %1754 = vmatpush2.msra.mxu0 0.0
    %1755 = vmatprep.subr.mxu0 0.0
    %1756 = vmatpush2.msra.mxu0 0.0
    %1757 = vmatprep.subr.mxu0 0.0
    %1758 = vmatpush2.msra.mxu0 0.0
    %1759 = vmatprep.subr.mxu0 0.0
    %1760 = vmatpush2.msra.mxu0 0.0
    %1761 = vmatprep.subr.mxu0 0.0
    %1762 = vmatpush2.msra.mxu0 0.0
    %1763 = vmatprep.subr.mxu0 0.0
    %1764 = vmatpush2.msra.mxu0 0.0
    %1765 = vmatprep.subr.mxu0 0.0
    %1766 = vmatpush2.msra.mxu0 0.0
    %1767 = vmatprep.subr.mxu0 0.0
    %1768 = vmatpush2.msra.mxu0 0.0
    %1769 = vmatprep.subr.mxu0 0.0
    %1770 = vmatpush2.msra.mxu0 0.0
    %1771 = vmatprep.subr.mxu0 0.0
    %1772 = vmatpush2.msra.mxu0 0.0
    %1773 = vmatprep.mubr.f32.mxu0 0.0
    %1774 = vmatmul.mubr.f32.gmra.mxu0 %v1695
    %v1775 = vpop.f32.mrf.mxu0
    %v1776 = vadd.f32 %v1693, %v1775
    %v1777 = vpop.f32.mrf.mxu0
    %1778 = vmatprep.mubr.f32.mxu0 0.0
    %1779 = vmatmul.mubr.f32.gmra.mxu0 %v1698
    %v1780 = vpop.f32.mrf.mxu0
    %v1781 = vadd.f32 %v1693, %v1780
    %v1782 = vpop.f32.mrf.mxu0
    %1783 = vmatprep.mubr.f32.mxu0 0.0
    %1784 = vmatmul.mubr.f32.gmra.mxu0 %v1701
    %v1785 = vpop.f32.mrf.mxu0
    %v1786 = vadd.f32 %v1693, %v1785
    %v1787 = vpop.f32.mrf.mxu0
    %1788 = vmatprep.mubr.f32.mxu0 0.0
    %1789 = vmatmul.mubr.f32.gmra.mxu0 %v1704
    %v1790 = vpop.f32.mrf.mxu0
    %v1791 = vadd.f32 %v1693, %v1790
    %v1792 = vpop.f32.mrf.mxu0
    %1793 = vmatprep.mubr.f32.mxu0 0.0
    %1794 = vmatmul.mubr.f32.gmra.mxu0 %v1707
    %v1795 = vpop.f32.mrf.mxu0
    %v1796 = vadd.f32 %v1693, %v1795
    %v1797 = vpop.f32.mrf.mxu0
    %1798 = vdwg.mxu0
    %v1799 = vadd.f32 %v168, %v1776
    %v1800 = vadd.f32 %v173, %v1781
    %v1801 = vadd.f32 %v178, %v1786
    %v1802 = vadd.f32 %v183, %v1791
    %v1803 = vadd.f32 %v188, %v1796
    %v1804 = vsel %vm284, %v1799, 0.0
    %1805 = vadd.xlane.f32.xlu0 %v1804
    %v1806 = vpop.xlane.xlu0 %1805
    %v1807 = vsel %vm284, %v1800, 0.0
    %1808 = vadd.xlane.f32.xlu0 %v1807
    %v1809 = vpop.xlane.xlu0 %1808
    %v1810 = vsel %vm284, %v1801, 0.0
    %1811 = vadd.xlane.f32.xlu0 %v1810
    %v1812 = vpop.xlane.xlu0 %1811
    %v1813 = vsel %vm284, %v1802, 0.0
    %1814 = vadd.xlane.f32.xlu0 %v1813
    %v1815 = vpop.xlane.xlu0 %1814
    %vm1816 = vcmask 254976
    %v1817 = vsel %vm1816, %v1803, 0.0
    %1818 = vadd.xlane.f32.xlu0 %v1817
    %v1819 = vpop.xlane.xlu0 %1818
    %v1820 = vrcp.pop 32.0
    %v1821 = vmul.f32 %v1806, %v1820
    %v1822 = vmul.f32 %v1809, %v1820
    %v1823 = vmul.f32 %v1812, %v1820
    %v1824 = vmul.f32 %v1815, %v1820
    %v1825 = vmul.f32 %v1819, %v1820
    %v1826 = vsub.f32 %v1799, %v1821
    %v1827 = vsub.f32 %v1800, %v1822
    %v1828 = vsub.f32 %v1801, %v1823
    %v1829 = vsub.f32 %v1802, %v1824
    %v1830 = vsub.f32 %v1803, %v1825
    %v1831 = vmul.f32 %v1826, %v1826
    %v1832 = vmul.f32 %v1827, %v1827
    %v1833 = vmul.f32 %v1828, %v1828
    %v1834 = vmul.f32 %v1829, %v1829
    %v1835 = vmul.f32 %v1830, %v1830
    %v1836 = vsel %vm284, %v1831, 0.0
    %1837 = vadd.xlane.f32.xlu0 %v1836
    %v1838 = vpop.xlane.xlu0 %1837
    %v1839 = vsel %vm284, %v1832, 0.0
    %1840 = vadd.xlane.f32.xlu0 %v1839
    %v1841 = vpop.xlane.xlu0 %1840
    %v1842 = vsel %vm284, %v1833, 0.0
    %1843 = vadd.xlane.f32.xlu0 %v1842
    %v1844 = vpop.xlane.xlu0 %1843
    %v1845 = vsel %vm284, %v1834, 0.0
    %1846 = vadd.xlane.f32.xlu0 %v1845
    %v1847 = vpop.xlane.xlu0 %1846
    %v1848 = vsel %vm1816, %v1835, 0.0
    %1849 = vadd.xlane.f32.xlu0 %v1848
    %v1850 = vpop.xlane.xlu0 %1849
    %v1851 = vmul.f32 %v1838, %v1820
    %v1852 = vmul.f32 %v1841, %v1820
    %v1853 = vmul.f32 %v1844, %v1820
    %v1854 = vmul.f32 %v1847, %v1820
    %v1855 = vmul.f32 %v1850, %v1820
    %v1856 = vadd.f32 %v1851, 1e-05
    %v1857 = vadd.f32 %v1852, 1e-05
    %v1858 = vadd.f32 %v1853, 1e-05
    %v1859 = vadd.f32 %v1854, 1e-05
    %v1860 = vadd.f32 %v1855, 1e-05
    %v1861 = vrsqrt.pop %v1856
    %v1862 = vrsqrt.pop %v1857
    %v1863 = vrsqrt.pop %v1858
    %v1864 = vrsqrt.pop %v1859
    %v1865 = vrsqrt.pop %v1860
    %v1866 = vmul.f32 %v1826, %v1861
    %v1867 = vmul.f32 %v1827, %v1862
    %v1868 = vmul.f32 %v1828, %v1863
    %v1869 = vmul.f32 %v1829, %v1864
    %v1870 = vmul.f32 %v1830, %v1865
    %v1871 = vlaneseq
    %v1872 = vshrl.u32 %v1871, 7
    %v1873 = vsub.s32 2, %v1872
    %v1874 = vrot.slane %v261, %v1873
    %v1875 = vmul.f32 %v1866, %v1874
    %v1876 = vmul.f32 %v1867, %v1874
    %v1877 = vmul.f32 %v1868, %v1874
    %v1878 = vmul.f32 %v1869, %v1874
    %v1879 = vmul.f32 %v1870, %v1874
    %v1880 = vlaneseq
    %v1881 = vshrl.u32 %v1880, 7
    %v1882 = vsub.s32 3, %v1881
    %v1883 = vrot.slane %v261, %v1882
    %v1884 = vadd.f32 %v1875, %v1883
    %v1885 = vadd.f32 %v1876, %v1883
    %v1886 = vadd.f32 %v1877, %v1883
    %v1887 = vadd.f32 %v1878, %v1883
    %v1888 = vadd.f32 %v1879, %v1883
    %v1889 = vlaneseq
    %v1890 = vshrl.u32 %v1889, 7
    %v1891 = vsub.s32 4, %v1890
    %v1892 = vrot.slane %v261, %v1891
    %v1894 = vsel %vm284, %v1884, 0
    %v1897 = vsel %vm284, %v1885, 0
    %v1900 = vsel %vm284, %v1886, 0
    %v1903 = vsel %vm284, %v1887, 0
    %v1906 = vsel %vm284, %v1888, 0
    %1908 = vmatprep.subr.mxu0 0.0
    %1909 = vmatpush1.msra.mxu0 0.0
    %1910 = vmatprep.subr.mxu0 0.0
    %1911 = vmatpush1.msra.mxu0 0.0
    %1912 = vmatprep.subr.mxu0 0.0
    %1913 = vmatpush1.msra.mxu0 0.0
    %1914 = vmatprep.subr.mxu0 0.0
    %1915 = vmatpush1.msra.mxu0 0.0
    %1916 = vmatprep.subr.mxu0 0.0
    %1917 = vmatpush1.msra.mxu0 0.0
    %1918 = vmatprep.subr.mxu0 0.0
    %1919 = vmatpush1.msra.mxu0 0.0
    %1920 = vmatprep.subr.mxu0 0.0
    %1921 = vmatpush1.msra.mxu0 0.0
    %1922 = vmatprep.subr.mxu0 0.0
    %1923 = vmatpush1.msra.mxu0 0.0
    %1924 = vmatprep.subr.mxu0 0.0
    %1925 = vmatpush1.msra.mxu0 0.0
    %1926 = vmatprep.subr.mxu0 0.0
    %1927 = vmatpush1.msra.mxu0 0.0
    %1928 = vmatprep.subr.mxu0 0.0
    %1929 = vmatpush1.msra.mxu0 0.0
    %1930 = vmatprep.subr.mxu0 0.0
    %1931 = vmatpush1.msra.mxu0 0.0
    %1932 = vmatprep.subr.mxu0 0.0
    %1933 = vmatpush1.msra.mxu0 %v275
    %1934 = vmatprep.subr.mxu0 0.0
    %1935 = vmatpush1.msra.mxu0 %v274
    %1936 = vmatprep.subr.mxu0 0.0
    %1937 = vmatpush1.msra.mxu0 %v273
    %1938 = vmatprep.subr.mxu0 0.0
    %1939 = vmatpush1.msra.mxu0 %v272
    %1940 = vmatprep.subr.mxu0 0.0
    %1941 = vmatpush2.msra.mxu0 0.0
    %1942 = vmatprep.subr.mxu0 0.0
    %1943 = vmatpush2.msra.mxu0 0.0
    %1944 = vmatprep.subr.mxu0 0.0
    %1945 = vmatpush2.msra.mxu0 0.0
    %1946 = vmatprep.subr.mxu0 0.0
    %1947 = vmatpush2.msra.mxu0 0.0
    %1948 = vmatprep.subr.mxu0 0.0
    %1949 = vmatpush2.msra.mxu0 0.0
    %1950 = vmatprep.subr.mxu0 0.0
    %1951 = vmatpush2.msra.mxu0 0.0
    %1952 = vmatprep.subr.mxu0 0.0
    %1953 = vmatpush2.msra.mxu0 0.0
    %1954 = vmatprep.subr.mxu0 0.0
    %1955 = vmatpush2.msra.mxu0 0.0
    %1956 = vmatprep.subr.mxu0 0.0
    %1957 = vmatpush2.msra.mxu0 0.0
    %1958 = vmatprep.subr.mxu0 0.0
    %1959 = vmatpush2.msra.mxu0 0.0
    %1960 = vmatprep.subr.mxu0 0.0
    %1961 = vmatpush2.msra.mxu0 0.0
    %1962 = vmatprep.subr.mxu0 0.0
    %1963 = vmatpush2.msra.mxu0 0.0
    %1964 = vmatprep.subr.mxu0 0.0
    %1965 = vmatpush2.msra.mxu0 0.0
    %1966 = vmatprep.subr.mxu0 0.0
    %1967 = vmatpush2.msra.mxu0 0.0
    %1968 = vmatprep.subr.mxu0 0.0
    %1969 = vmatpush2.msra.mxu0 0.0
    %1970 = vmatprep.subr.mxu0 0.0
    %1971 = vmatpush2.msra.mxu0 0.0
    %1972 = vmatprep.mubr.f32.mxu0 0.0
    %1973 = vmatmul.mubr.f32.gmra.mxu0 %v1894
    %v1974 = vpop.f32.mrf.mxu0
    %v1975 = vadd.f32 %v1892, %v1974
    %v1976 = vpop.f32.mrf.mxu0
    %1977 = vmatprep.mubr.f32.mxu0 0.0
    %1978 = vmatmul.mubr.f32.gmra.mxu0 %v1897
    %v1979 = vpop.f32.mrf.mxu0
    %v1980 = vadd.f32 %v1892, %v1979
    %v1981 = vpop.f32.mrf.mxu0
    %1982 = vmatprep.mubr.f32.mxu0 0.0
    %1983 = vmatmul.mubr.f32.gmra.mxu0 %v1900
    %v1984 = vpop.f32.mrf.mxu0
    %v1985 = vadd.f32 %v1892, %v1984
    %v1986 = vpop.f32.mrf.mxu0
    %1987 = vmatprep.mubr.f32.mxu0 0.0
    %1988 = vmatmul.mubr.f32.gmra.mxu0 %v1903
    %v1989 = vpop.f32.mrf.mxu0
    %v1990 = vadd.f32 %v1892, %v1989
    %v1991 = vpop.f32.mrf.mxu0
    %1992 = vmatprep.mubr.f32.mxu0 0.0
    %1993 = vmatmul.mubr.f32.gmra.mxu0 %v1906
    %v1994 = vpop.f32.mrf.mxu0
    %v1995 = vadd.f32 %v1892, %v1994
    %v1996 = vpop.f32.mrf.mxu0
    %1997 = vdwg.mxu0
    %v1998 = vmax.f32 %v1975, 0.0
    %v1999 = vmax.f32 %v1980, 0.0
    %v2000 = vmax.f32 %v1985, 0.0
    %v2001 = vmax.f32 %v1990, 0.0
    %v2002 = vmax.f32 %v1995, 0.0
    %v2003 = vlaneseq
    %v2004 = vshrl.u32 %v2003, 7
    %v2005 = vsub.s32 5, %v2004
    %v2006 = vrot.slane %v261, %v2005
    %vm2007 = vcmask 523264
    %v2009 = vsel %vm2007, %v1998, 0
    %v2012 = vsel %vm2007, %v1999, 0
    %v2015 = vsel %vm2007, %v2000, 0
    %v2018 = vsel %vm2007, %v2001, 0
    %v2021 = vsel %vm2007, %v2002, 0
    %v2024 = vsel %vm2007, %v276, 0
    %v2027 = vsel %vm2007, %v277, 0
    %v2030 = vsel %vm2007, %v278, 0
    %v2033 = vsel %vm2007, %v279, 0
    %2035 = vmatprep.subr.mxu0 0.0
    %2036 = vmatpush1.xpose.msra.mxu0 0.0
    %2037 = vmatprep.subr.mxu0 0.0
    %2038 = vmatpush1.xpose.msra.mxu0 0.0
    %2039 = vmatprep.subr.mxu0 0.0
    %2040 = vmatpush1.xpose.msra.mxu0 0.0
    %2041 = vmatprep.subr.mxu0 0.0
    %2042 = vmatpush1.xpose.msra.mxu0 0.0
    %2043 = vmatprep.subr.mxu0 0.0
    %2044 = vmatpush1.xpose.msra.mxu0 0.0
    %2045 = vmatprep.subr.mxu0 0.0
    %2046 = vmatpush1.xpose.msra.mxu0 0.0
    %2047 = vmatprep.subr.mxu0 0.0
    %2048 = vmatpush1.xpose.msra.mxu0 0.0
    %2049 = vmatprep.subr.mxu0 0.0
    %2050 = vmatpush1.xpose.msra.mxu0 0.0
    %2051 = vmatprep.subr.mxu0 0.0
    %2052 = vmatpush1.xpose.msra.mxu0 0.0
    %2053 = vmatprep.subr.mxu0 0.0
    %2054 = vmatpush1.xpose.msra.mxu0 0.0
    %2055 = vmatprep.subr.mxu0 0.0
    %2056 = vmatpush1.xpose.msra.mxu0 0.0
    %2057 = vmatprep.subr.mxu0 0.0
    %2058 = vmatpush1.xpose.msra.mxu0 0.0
    %2059 = vmatprep.subr.mxu0 0.0
    %2060 = vmatpush1.xpose.msra.mxu0 %v2033
    %2061 = vmatprep.subr.mxu0 0.0
    %2062 = vmatpush1.xpose.msra.mxu0 %v2030
    %2063 = vmatprep.subr.mxu0 0.0
    %2064 = vmatpush1.xpose.msra.mxu0 %v2027
    %2065 = vmatprep.subr.mxu0 0.0
    %2066 = vmatpush1.xpose.msra.mxu0 %v2024
    %2067 = vmatprep.subr.mxu0 0.0
    %2068 = vmatpush2.xpose.msra.mxu0 0.0
    %2069 = vmatprep.subr.mxu0 0.0
    %2070 = vmatpush2.xpose.msra.mxu0 0.0
    %2071 = vmatprep.subr.mxu0 0.0
    %2072 = vmatpush2.xpose.msra.mxu0 0.0
    %2073 = vmatprep.subr.mxu0 0.0
    %2074 = vmatpush2.xpose.msra.mxu0 0.0
    %2075 = vmatprep.subr.mxu0 0.0
    %2076 = vmatpush2.xpose.msra.mxu0 0.0
    %2077 = vmatprep.subr.mxu0 0.0
    %2078 = vmatpush2.xpose.msra.mxu0 0.0
    %2079 = vmatprep.subr.mxu0 0.0
    %2080 = vmatpush2.xpose.msra.mxu0 0.0
    %2081 = vmatprep.subr.mxu0 0.0
    %2082 = vmatpush2.xpose.msra.mxu0 0.0
    %2083 = vmatprep.subr.mxu0 0.0
    %2084 = vmatpush2.xpose.msra.mxu0 0.0
    %2085 = vmatprep.subr.mxu0 0.0
    %2086 = vmatpush2.xpose.msra.mxu0 0.0
    %2087 = vmatprep.subr.mxu0 0.0
    %2088 = vmatpush2.xpose.msra.mxu0 0.0
    %2089 = vmatprep.subr.mxu0 0.0
    %2090 = vmatpush2.xpose.msra.mxu0 0.0
    %2091 = vmatprep.subr.mxu0 0.0
    %2092 = vmatpush2.xpose.msra.mxu0 0.0
    %2093 = vmatprep.subr.mxu0 0.0
    %2094 = vmatpush2.xpose.msra.mxu0 0.0
    %2095 = vmatprep.subr.mxu0 0.0
    %2096 = vmatpush2.xpose.msra.mxu0 0.0
    %2097 = vmatprep.subr.mxu0 0.0
    %2098 = vmatpush2.xpose.msra.mxu0 0.0
    %2099 = vmatprep.mubr.f32.mxu0 0.0
    %2100 = vmatmul.mubr.f32.gmra.mxu0 %v2009
    %v2101 = vpop.f32.mrf.mxu0
    %v2102 = vadd.f32 %v2006, %v2101
    %v2103 = vpop.f32.mrf.mxu0
    %2104 = vmatprep.mubr.f32.mxu0 0.0
    %2105 = vmatmul.mubr.f32.gmra.mxu0 %v2012
    %v2106 = vpop.f32.mrf.mxu0
    %v2107 = vadd.f32 %v2006, %v2106
    %v2108 = vpop.f32.mrf.mxu0
    %2109 = vmatprep.mubr.f32.mxu0 0.0
    %2110 = vmatmul.mubr.f32.gmra.mxu0 %v2015
    %v2111 = vpop.f32.mrf.mxu0
    %v2112 = vadd.f32 %v2006, %v2111
    %v2113 = vpop.f32.mrf.mxu0
    %2114 = vmatprep.mubr.f32.mxu0 0.0
    %2115 = vmatmul.mubr.f32.gmra.mxu0 %v2018
    %v2116 = vpop.f32.mrf.mxu0
    %v2117 = vadd.f32 %v2006, %v2116
    %v2118 = vpop.f32.mrf.mxu0
    %2119 = vmatprep.mubr.f32.mxu0 0.0
    %2120 = vmatmul.mubr.f32.gmra.mxu0 %v2021
    %v2121 = vpop.f32.mrf.mxu0
    %v2122 = vadd.f32 %v2006, %v2121
    %v2123 = vpop.f32.mrf.mxu0
    %2124 = vdwg.mxu0
    %v2125 = vadd.f32 %v1884, %v2102
    %v2126 = vadd.f32 %v1885, %v2107
    %v2127 = vadd.f32 %v1886, %v2112
    %v2128 = vadd.f32 %v1887, %v2117
    %v2129 = vadd.f32 %v1888, %v2122
    %v2130 = vsel %vm284, %v2125, 0.0
    %2131 = vadd.xlane.f32.xlu0 %v2130
    %v2132 = vpop.xlane.xlu0 %2131
    %v2133 = vsel %vm284, %v2126, 0.0
    %2134 = vadd.xlane.f32.xlu0 %v2133
    %v2135 = vpop.xlane.xlu0 %2134
    %v2136 = vsel %vm284, %v2127, 0.0
    %2137 = vadd.xlane.f32.xlu0 %v2136
    %v2138 = vpop.xlane.xlu0 %2137
    %v2139 = vsel %vm284, %v2128, 0.0
    %2140 = vadd.xlane.f32.xlu0 %v2139
    %v2141 = vpop.xlane.xlu0 %2140
    %v2142 = vsel %vm1816, %v2129, 0.0
    %2143 = vadd.xlane.f32.xlu0 %v2142
    %v2144 = vpop.xlane.xlu0 %2143
    %v2145 = vmul.f32 %v2132, %v1820
    %v2146 = vmul.f32 %v2135, %v1820
    %v2147 = vmul.f32 %v2138, %v1820
    %v2148 = vmul.f32 %v2141, %v1820
    %v2149 = vmul.f32 %v2144, %v1820
    %v2150 = vsub.f32 %v2125, %v2145
    %v2151 = vsub.f32 %v2126, %v2146
    %v2152 = vsub.f32 %v2127, %v2147
    %v2153 = vsub.f32 %v2128, %v2148
    %v2154 = vsub.f32 %v2129, %v2149
    %v2155 = vmul.f32 %v2150, %v2150
    %v2156 = vmul.f32 %v2151, %v2151
    %v2157 = vmul.f32 %v2152, %v2152
    %v2158 = vmul.f32 %v2153, %v2153
    %v2159 = vmul.f32 %v2154, %v2154
    %v2160 = vsel %vm284, %v2155, 0.0
    %2161 = vadd.xlane.f32.xlu0 %v2160
    %v2162 = vpop.xlane.xlu0 %2161
    %v2163 = vsel %vm284, %v2156, 0.0
    %2164 = vadd.xlane.f32.xlu0 %v2163
    %v2165 = vpop.xlane.xlu0 %2164
    %v2166 = vsel %vm284, %v2157, 0.0
    %2167 = vadd.xlane.f32.xlu0 %v2166
    %v2168 = vpop.xlane.xlu0 %2167
    %v2169 = vsel %vm284, %v2158, 0.0
    %2170 = vadd.xlane.f32.xlu0 %v2169
    %v2171 = vpop.xlane.xlu0 %2170
    %v2172 = vsel %vm1816, %v2159, 0.0
    %2173 = vadd.xlane.f32.xlu0 %v2172
    %v2174 = vpop.xlane.xlu0 %2173
    %v2175 = vmul.f32 %v2162, %v1820
    %v2176 = vmul.f32 %v2165, %v1820
    %v2177 = vmul.f32 %v2168, %v1820
    %v2178 = vmul.f32 %v2171, %v1820
    %v2179 = vmul.f32 %v2174, %v1820
    %v2180 = vadd.f32 %v2175, 1e-05
    %v2181 = vadd.f32 %v2176, 1e-05
    %v2182 = vadd.f32 %v2177, 1e-05
    %v2183 = vadd.f32 %v2178, 1e-05
    %v2184 = vadd.f32 %v2179, 1e-05
    %v2185 = vrsqrt.pop %v2180
    %v2186 = vrsqrt.pop %v2181
    %v2187 = vrsqrt.pop %v2182
    %v2188 = vrsqrt.pop %v2183
    %v2189 = vrsqrt.pop %v2184
    %v2190 = vmul.f32 %v2150, %v2185
    %v2191 = vmul.f32 %v2151, %v2186
    %v2192 = vmul.f32 %v2152, %v2187
    %v2193 = vmul.f32 %v2153, %v2188
    %v2194 = vmul.f32 %v2154, %v2189
    %v2195 = vlaneseq
    %v2196 = vshrl.u32 %v2195, 7
    %v2197 = vsub.s32 6, %v2196
    %v2198 = vrot.slane %v261, %v2197
    %v2199 = vmul.f32 %v2190, %v2198
    %v2200 = vmul.f32 %v2191, %v2198
    %v2201 = vmul.f32 %v2192, %v2198
    %v2202 = vmul.f32 %v2193, %v2198
    %v2203 = vmul.f32 %v2194, %v2198
    %v2204 = vlaneseq
    %v2205 = vshrl.u32 %v2204, 7
    %v2206 = vsub.s32 7, %v2205
    %v2207 = vrot.slane %v261, %v2206
    %v2208 = vadd.f32 %v2199, %v2207
    %v2209 = vadd.f32 %v2200, %v2207
    %v2210 = vadd.f32 %v2201, %v2207
    %v2211 = vadd.f32 %v2202, %v2207
    %v2212 = vadd.f32 %v2203, %v2207
    %v2213 = vld [vmem:[#allocation2 + $0x20] sm:$0xff]
    %v2214 = vld [vmem:[#allocation2 + $0x68] sm:$0xff]
    %v2215 = vld [vmem:[#allocation2 + $0xb0] sm:$0xff]
    %v2216 = vld [vmem:[#allocation2 + $0xf8] sm:$0xff]
    %v2217 = vld [vmem:[#allocation2 + $0x28] sm:$0xff]
    %v2218 = vld [vmem:[#allocation2 + $0x70] sm:$0xff]
    %v2219 = vld [vmem:[#allocation2 + $0xb8] sm:$0xff]
    %v2220 = vld [vmem:[#allocation2 + $0x100] sm:$0xff]
    %v2221 = vld [vmem:[#allocation2 + $0x30] sm:$0xff]
    %v2222 = vld [vmem:[#allocation2 + $0x78] sm:$0xff]
    %v2223 = vld [vmem:[#allocation2 + $0xc0] sm:$0xff]
    %v2224 = vld [vmem:[#allocation2 + $0x108] sm:$0xff]
    %v2225 = vld [vmem:[#allocation2 + $0x38] sm:$0xff]
    %v2226 = vld [vmem:[#allocation2 + $0x80] sm:$0xff]
    %v2227 = vld [vmem:[#allocation2 + $0xc8] sm:$0xff]
    %v2228 = vld [vmem:[#allocation2 + $0x110] sm:$0xff]
    %v2229 = vlaneseq
    %v2230 = vshrl.u32 %v2229, 7
    %v2231 = vsub.s32 0, %v2230
    %v2232 = vrot.slane %v262, %v2231
    %v2234 = vsel %vm284, %v2208, 0
    %v2237 = vsel %vm284, %v2209, 0
    %v2240 = vsel %vm284, %v2210, 0
    %v2243 = vsel %vm284, %v2211, 0
    %v2246 = vsel %vm284, %v2212, 0
    %2248 = vmatprep.subr.mxu0 0.0
    %2249 = vmatpush1.msra.mxu0 0.0
    %2250 = vmatprep.subr.mxu0 0.0
    %2251 = vmatpush1.msra.mxu0 0.0
    %2252 = vmatprep.subr.mxu0 0.0
    %2253 = vmatpush1.msra.mxu0 0.0
    %2254 = vmatprep.subr.mxu0 0.0
    %2255 = vmatpush1.msra.mxu0 0.0
    %2256 = vmatprep.subr.mxu0 0.0
    %2257 = vmatpush1.msra.mxu0 0.0
    %2258 = vmatprep.subr.mxu0 0.0
    %2259 = vmatpush1.msra.mxu0 0.0
    %2260 = vmatprep.subr.mxu0 0.0
    %2261 = vmatpush1.msra.mxu0 0.0
    %2262 = vmatprep.subr.mxu0 0.0
    %2263 = vmatpush1.msra.mxu0 0.0
    %2264 = vmatprep.subr.mxu0 0.0
    %2265 = vmatpush1.msra.mxu0 0.0
    %2266 = vmatprep.subr.mxu0 0.0
    %2267 = vmatpush1.msra.mxu0 0.0
    %2268 = vmatprep.subr.mxu0 0.0
    %2269 = vmatpush1.msra.mxu0 0.0
    %2270 = vmatprep.subr.mxu0 0.0
    %2271 = vmatpush1.msra.mxu0 0.0
    %2272 = vmatprep.subr.mxu0 0.0
    %2273 = vmatpush1.msra.mxu0 %v2216
    %2274 = vmatprep.subr.mxu0 0.0
    %2275 = vmatpush1.msra.mxu0 %v2215
    %2276 = vmatprep.subr.mxu0 0.0
    %2277 = vmatpush1.msra.mxu0 %v2214
    %2278 = vmatprep.subr.mxu0 0.0
    %2279 = vmatpush1.msra.mxu0 %v2213
    %2280 = vmatprep.subr.mxu0 0.0
    %2281 = vmatpush2.msra.mxu0 0.0
    %2282 = vmatprep.subr.mxu0 0.0
    %2283 = vmatpush2.msra.mxu0 0.0
    %2284 = vmatprep.subr.mxu0 0.0
    %2285 = vmatpush2.msra.mxu0 0.0
    %2286 = vmatprep.subr.mxu0 0.0
    %2287 = vmatpush2.msra.mxu0 0.0
    %2288 = vmatprep.subr.mxu0 0.0
    %2289 = vmatpush2.msra.mxu0 0.0
    %2290 = vmatprep.subr.mxu0 0.0
    %2291 = vmatpush2.msra.mxu0 0.0
    %2292 = vmatprep.subr.mxu0 0.0
    %2293 = vmatpush2.msra.mxu0 0.0
    %2294 = vmatprep.subr.mxu0 0.0
    %2295 = vmatpush2.msra.mxu0 0.0
    %2296 = vmatprep.subr.mxu0 0.0
    %2297 = vmatpush2.msra.mxu0 0.0
    %2298 = vmatprep.subr.mxu0 0.0
    %2299 = vmatpush2.msra.mxu0 0.0
    %2300 = vmatprep.subr.mxu0 0.0
    %2301 = vmatpush2.msra.mxu0 0.0
    %2302 = vmatprep.subr.mxu0 0.0
    %2303 = vmatpush2.msra.mxu0 0.0
    %2304 = vmatprep.subr.mxu0 0.0
    %2305 = vmatpush2.msra.mxu0 0.0
    %2306 = vmatprep.subr.mxu0 0.0
    %2307 = vmatpush2.msra.mxu0 0.0
    %2308 = vmatprep.subr.mxu0 0.0
    %2309 = vmatpush2.msra.mxu0 0.0
    %2310 = vmatprep.subr.mxu0 0.0
    %2311 = vmatpush2.msra.mxu0 0.0
    %2312 = vmatprep.mubr.f32.mxu0 0.0
    %2313 = vmatmul.mubr.f32.gmra.mxu0 %v2234
    %v2314 = vpop.f32.mrf.mxu0
    %v2315 = vadd.f32 %v2232, %v2314
    %v2316 = vpop.f32.mrf.mxu0
    %2317 = vmatprep.mubr.f32.mxu0 0.0
    %2318 = vmatmul.mubr.f32.gmra.mxu0 %v2237
    %v2319 = vpop.f32.mrf.mxu0
    %v2320 = vadd.f32 %v2232, %v2319
    %v2321 = vpop.f32.mrf.mxu0
    %2322 = vmatprep.mubr.f32.mxu0 0.0
    %2323 = vmatmul.mubr.f32.gmra.mxu0 %v2240
    %v2324 = vpop.f32.mrf.mxu0
    %v2325 = vadd.f32 %v2232, %v2324
    %v2326 = vpop.f32.mrf.mxu0
    %2327 = vmatprep.mubr.f32.mxu0 0.0
    %2328 = vmatmul.mubr.f32.gmra.mxu0 %v2243
    %v2329 = vpop.f32.mrf.mxu0
    %v2330 = vadd.f32 %v2232, %v2329
    %v2331 = vpop.f32.mrf.mxu0
    %2332 = vmatprep.mubr.f32.mxu0 0.0
    %2333 = vmatmul.mubr.f32.gmra.mxu0 %v2246
    %v2334 = vpop.f32.mrf.mxu0
    %v2335 = vadd.f32 %v2232, %v2334
    %v2336 = vpop.f32.mrf.mxu0
    %2337 = vdwg.mxu0
    %2343 = vrot.lane.b32.xlu0 %v2315, 96
    %v2344 = vpop.permute.xlu0 %2343
    %2345 = vrot.lane.b32.xlu0 %v2320, 96
    %v2346 = vpop.permute.xlu0 %2345
    %2347 = vrot.lane.b32.xlu0 %v2325, 96
    %v2348 = vpop.permute.xlu0 %2347
    %2349 = vrot.lane.b32.xlu0 %v2330, 96
    %v2350 = vpop.permute.xlu0 %2349
    %2351 = vrot.lane.b32.xlu0 %v2335, 96
    %v2352 = vpop.permute.xlu0 %2351
    %v2353 = vsel %vm405, %v2315, 0
    %v2355 = vsel %vm405, %v2320, 0
    %v2357 = vsel %vm405, %v2325, 0
    %v2359 = vsel %vm405, %v2330, 0
    %v2361 = vsel %vm405, %v2335, 0
    %v2363 = vsel %vm405, %v2344, 0
    %v2365 = vsel %vm405, %v2346, 0
    %v2367 = vsel %vm405, %v2348, 0
    %v2369 = vsel %vm405, %v2350, 0
    %v2371 = vsel %vm405, %v2352, 0
    %2373 = vmatprep.subr.mxu0 0.0
    %2374 = vmatpush1.xpose.msra.mxu0 0.0
    %2375 = vmatprep.subr.mxu0 0.0
    %2376 = vmatpush1.xpose.msra.mxu0 0.0
    %2377 = vmatprep.subr.mxu0 0.0
    %2378 = vmatpush1.xpose.msra.mxu0 0.0
    %2379 = vmatprep.subr.mxu0 0.0
    %2380 = vmatpush1.xpose.msra.mxu0 0.0
    %2381 = vmatprep.subr.mxu0 0.0
    %2382 = vmatpush1.xpose.msra.mxu0 0.0
    %2383 = vmatprep.subr.mxu0 0.0
    %2384 = vmatpush1.xpose.msra.mxu0 0.0
    %2385 = vmatprep.subr.mxu0 0.0
    %2386 = vmatpush1.xpose.msra.mxu0 0.0
    %2387 = vmatprep.subr.mxu0 0.0
    %2388 = vmatpush1.xpose.msra.mxu0 0.0
    %2389 = vmatprep.subr.mxu0 0.0
    %2390 = vmatpush1.xpose.msra.mxu0 0.0
    %2391 = vmatprep.subr.mxu0 0.0
    %2392 = vmatpush1.xpose.msra.mxu0 0.0
    %2393 = vmatprep.subr.mxu0 0.0
    %2394 = vmatpush1.xpose.msra.mxu0 0.0
    %2395 = vmatprep.subr.mxu0 0.0
    %2396 = vmatpush1.xpose.msra.mxu0 %v2371
    %2397 = vmatprep.subr.mxu0 0.0
    %2398 = vmatpush1.xpose.msra.mxu0 %v2369
    %2399 = vmatprep.subr.mxu0 0.0
    %2400 = vmatpush1.xpose.msra.mxu0 %v2367
    %2401 = vmatprep.subr.mxu0 0.0
    %2402 = vmatpush1.xpose.msra.mxu0 %v2365
    %2403 = vmatprep.subr.mxu0 0.0
    %2404 = vmatpush1.xpose.msra.mxu0 %v2363
    %2405 = vmatprep.subr.mxu0 0.0
    %2406 = vmatpush2.xpose.msra.mxu0 0.0
    %2407 = vmatprep.subr.mxu0 0.0
    %2408 = vmatpush2.xpose.msra.mxu0 0.0
    %2409 = vmatprep.subr.mxu0 0.0
    %2410 = vmatpush2.xpose.msra.mxu0 0.0
    %2411 = vmatprep.subr.mxu0 0.0
    %2412 = vmatpush2.xpose.msra.mxu0 0.0
    %2413 = vmatprep.subr.mxu0 0.0
    %2414 = vmatpush2.xpose.msra.mxu0 0.0
    %2415 = vmatprep.subr.mxu0 0.0
    %2416 = vmatpush2.xpose.msra.mxu0 0.0
    %2417 = vmatprep.subr.mxu0 0.0
    %2418 = vmatpush2.xpose.msra.mxu0 0.0
    %2419 = vmatprep.subr.mxu0 0.0
    %2420 = vmatpush2.xpose.msra.mxu0 0.0
    %2421 = vmatprep.subr.mxu0 0.0
    %2422 = vmatpush2.xpose.msra.mxu0 0.0
    %2423 = vmatprep.subr.mxu0 0.0
    %2424 = vmatpush2.xpose.msra.mxu0 0.0
    %2425 = vmatprep.subr.mxu0 0.0
    %2426 = vmatpush2.xpose.msra.mxu0 0.0
    %2427 = vmatprep.subr.mxu0 0.0
    %2428 = vmatpush2.xpose.msra.mxu0 0.0
    %2429 = vmatprep.subr.mxu0 0.0
    %2430 = vmatpush2.xpose.msra.mxu0 0.0
    %2431 = vmatprep.subr.mxu0 0.0
    %2432 = vmatpush2.xpose.msra.mxu0 0.0
    %2433 = vmatprep.subr.mxu0 0.0
    %2434 = vmatpush2.xpose.msra.mxu0 0.0
    %2435 = vmatprep.subr.mxu0 0.0
    %2436 = vmatpush2.xpose.msra.mxu0 0.0
    %2437 = vmatprep.mubr.f32.mxu0 0.0
    %2438 = vmatmul.mubr.f32.gmra.mxu0 %v2353
    %v2439 = vpop.f32.mrf.mxu0
    %v2440 = vadd.f32 %v256, %v2439
    %v2441 = vpop.f32.mrf.mxu0
    %2442 = vmatprep.mubr.f32.mxu0 0.0
    %2443 = vmatmul.mubr.f32.gmra.mxu0 %v2355
    %v2444 = vpop.f32.mrf.mxu0
    %v2445 = vadd.f32 %v257, %v2444
    %v2446 = vpop.f32.mrf.mxu0
    %2447 = vmatprep.mubr.f32.mxu0 0.0
    %2448 = vmatmul.mubr.f32.gmra.mxu0 %v2357
    %v2449 = vpop.f32.mrf.mxu0
    %v2450 = vadd.f32 %v258, %v2449
    %v2451 = vpop.f32.mrf.mxu0
    %2452 = vmatprep.mubr.f32.mxu0 0.0
    %2453 = vmatmul.mubr.f32.gmra.mxu0 %v2359
    %v2454 = vpop.f32.mrf.mxu0
    %v2455 = vadd.f32 %v259, %v2454
    %v2456 = vpop.f32.mrf.mxu0
    %2457 = vmatprep.mubr.f32.mxu0 0.0
    %2458 = vmatmul.mubr.f32.gmra.mxu0 %v2361
    %v2459 = vpop.f32.mrf.mxu0
    %v2460 = vadd.f32 %v260, %v2459
    %v2461 = vpop.f32.mrf.mxu0
    %2462 = vdwg.mxu0
    %v2463 = vsel %vm516, %v2440, -inf
    %2464 = vmax.xlane.f32.xlu0 %v2463
    %v2465 = vpop.xlane.xlu0 %2464
    %v2466 = vsel %vm516, %v2445, -inf
    %2467 = vmax.xlane.f32.xlu0 %v2466
    %v2468 = vpop.xlane.xlu0 %2467
    %v2469 = vsel %vm516, %v2450, -inf
    %2470 = vmax.xlane.f32.xlu0 %v2469
    %v2471 = vpop.xlane.xlu0 %2470
    %v2472 = vsel %vm516, %v2455, -inf
    %2473 = vmax.xlane.f32.xlu0 %v2472
    %v2474 = vpop.xlane.xlu0 %2473
    %v2475 = vsel %vm529, %v2460, -inf
    %2476 = vmax.xlane.f32.xlu0 %v2475
    %v2477 = vpop.xlane.xlu0 %2476
    %v2478 = vsub.f32 %v2440, %v2465
    %v2479 = vsub.f32 %v2445, %v2468
    %v2480 = vsub.f32 %v2450, %v2471
    %v2481 = vsub.f32 %v2455, %v2474
    %v2482 = vsub.f32 %v2460, %v2477
    %v2483 = vmul.f32 %v2478, 1.442695
    %v2484 = vpow.pop %v2483
    %v2485 = vmul.f32 %v2479, 1.442695
    %v2486 = vpow.pop %v2485
    %v2487 = vmul.f32 %v2480, 1.442695
    %v2488 = vpow.pop %v2487
    %v2489 = vmul.f32 %v2481, 1.442695
    %v2490 = vpow.pop %v2489
    %v2491 = vmul.f32 %v2482, 1.442695
    %v2492 = vpow.pop %v2491
    %v2493 = vsel %vm516, %v2484, 0.0
    %2494 = vadd.xlane.f32.xlu0 %v2493
    %v2495 = vpop.xlane.xlu0 %2494
    %v2496 = vsel %vm516, %v2486, 0.0
    %2497 = vadd.xlane.f32.xlu0 %v2496
    %v2498 = vpop.xlane.xlu0 %2497
    %v2499 = vsel %vm516, %v2488, 0.0
    %2500 = vadd.xlane.f32.xlu0 %v2499
    %v2501 = vpop.xlane.xlu0 %2500
    %v2502 = vsel %vm516, %v2490, 0.0
    %2503 = vadd.xlane.f32.xlu0 %v2502
    %v2504 = vpop.xlane.xlu0 %2503
    %v2505 = vsel %vm529, %v2492, 0.0
    %2506 = vadd.xlane.f32.xlu0 %v2505
    %v2507 = vpop.xlane.xlu0 %2506
    %v2508 = vrcp.pop %v2495
    %v2509 = vrcp.pop %v2498
    %v2510 = vrcp.pop %v2501
    %v2511 = vrcp.pop %v2504
    %v2512 = vrcp.pop %v2507
    %v2513 = vmul.f32 %v2484, %v2508
    %v2514 = vmul.f32 %v2486, %v2509
    %v2515 = vmul.f32 %v2488, %v2510
    %v2516 = vmul.f32 %v2490, %v2511
    %v2517 = vmul.f32 %v2492, %v2512
    %2518 = vrot.lane.b32.xlu0 %v2315, 64
    %v2519 = vpop.permute.xlu0 %2518
    %2520 = vrot.lane.b32.xlu0 %v2320, 64
    %v2521 = vpop.permute.xlu0 %2520
    %2522 = vrot.lane.b32.xlu0 %v2325, 64
    %v2523 = vpop.permute.xlu0 %2522
    %2524 = vrot.lane.b32.xlu0 %v2330, 64
    %v2525 = vpop.permute.xlu0 %2524
    %2526 = vrot.lane.b32.xlu0 %v2335, 64
    %v2527 = vpop.permute.xlu0 %2526
    %v2533 = vsel %vm516, %v2513, 0
    %v2536 = vsel %vm516, %v2514, 0
    %v2539 = vsel %vm516, %v2515, 0
    %v2542 = vsel %vm516, %v2516, 0
    %v2545 = vsel %vm516, %v2517, 0
    %v2547 = vsel %vm602, %v2527, 0
    %2549 = vmatprep.subr.mxu0 0.0
    %2550 = vmatpush1.msra.mxu0 0.0
    %2551 = vmatprep.subr.mxu0 0.0
    %2552 = vmatpush1.msra.mxu0 0.0
    %2553 = vmatprep.subr.mxu0 0.0
    %2554 = vmatpush1.msra.mxu0 0.0
    %2555 = vmatprep.subr.mxu0 0.0
    %2556 = vmatpush1.msra.mxu0 0.0
    %2557 = vmatprep.subr.mxu0 0.0
    %2558 = vmatpush1.msra.mxu0 0.0
    %2559 = vmatprep.subr.mxu0 0.0
    %2560 = vmatpush1.msra.mxu0 0.0
    %2561 = vmatprep.subr.mxu0 0.0
    %2562 = vmatpush1.msra.mxu0 0.0
    %2563 = vmatprep.subr.mxu0 0.0
    %2564 = vmatpush1.msra.mxu0 0.0
    %2565 = vmatprep.subr.mxu0 0.0
    %2566 = vmatpush1.msra.mxu0 0.0
    %2567 = vmatprep.subr.mxu0 0.0
    %2568 = vmatpush1.msra.mxu0 0.0
    %2569 = vmatprep.subr.mxu0 0.0
    %2570 = vmatpush1.msra.mxu0 0.0
    %2571 = vmatprep.subr.mxu0 0.0
    %2572 = vmatpush1.msra.mxu0 %v2547
    %2573 = vmatprep.subr.mxu0 0.0
    %2574 = vmatpush1.msra.mxu0 %v2525
    %2575 = vmatprep.subr.mxu0 0.0
    %2576 = vmatpush1.msra.mxu0 %v2523
    %2577 = vmatprep.subr.mxu0 0.0
    %2578 = vmatpush1.msra.mxu0 %v2521
    %2579 = vmatprep.subr.mxu0 0.0
    %2580 = vmatpush1.msra.mxu0 %v2519
    %2581 = vmatprep.subr.mxu0 0.0
    %2582 = vmatpush2.msra.mxu0 0.0
    %2583 = vmatprep.subr.mxu0 0.0
    %2584 = vmatpush2.msra.mxu0 0.0
    %2585 = vmatprep.subr.mxu0 0.0
    %2586 = vmatpush2.msra.mxu0 0.0
    %2587 = vmatprep.subr.mxu0 0.0
    %2588 = vmatpush2.msra.mxu0 0.0
    %2589 = vmatprep.subr.mxu0 0.0
    %2590 = vmatpush2.msra.mxu0 0.0
    %2591 = vmatprep.subr.mxu0 0.0
    %2592 = vmatpush2.msra.mxu0 0.0
    %2593 = vmatprep.subr.mxu0 0.0
    %2594 = vmatpush2.msra.mxu0 0.0
    %2595 = vmatprep.subr.mxu0 0.0
    %2596 = vmatpush2.msra.mxu0 0.0
    %2597 = vmatprep.subr.mxu0 0.0
    %2598 = vmatpush2.msra.mxu0 0.0
    %2599 = vmatprep.subr.mxu0 0.0
    %2600 = vmatpush2.msra.mxu0 0.0
    %2601 = vmatprep.subr.mxu0 0.0
    %2602 = vmatpush2.msra.mxu0 0.0
    %2603 = vmatprep.subr.mxu0 0.0
    %2604 = vmatpush2.msra.mxu0 0.0
    %2605 = vmatprep.subr.mxu0 0.0
    %2606 = vmatpush2.msra.mxu0 0.0
    %2607 = vmatprep.subr.mxu0 0.0
    %2608 = vmatpush2.msra.mxu0 0.0
    %2609 = vmatprep.subr.mxu0 0.0
    %2610 = vmatpush2.msra.mxu0 0.0
    %2611 = vmatprep.subr.mxu0 0.0
    %2612 = vmatpush2.msra.mxu0 0.0
    %2613 = vmatprep.mubr.f32.mxu0 0.0
    %2614 = vmatmul.mubr.f32.gmra.mxu0 %v2533
    %v2615 = vpop.f32.mrf.mxu0
    %v2616 = vadd.f32 0.0, %v2615
    %v2617 = vpop.f32.mrf.mxu0
    %2618 = vmatprep.mubr.f32.mxu0 0.0
    %2619 = vmatmul.mubr.f32.gmra.mxu0 %v2536
    %v2620 = vpop.f32.mrf.mxu0
    %v2621 = vadd.f32 0.0, %v2620
    %v2622 = vpop.f32.mrf.mxu0
    %2623 = vmatprep.mubr.f32.mxu0 0.0
    %2624 = vmatmul.mubr.f32.gmra.mxu0 %v2539
    %v2625 = vpop.f32.mrf.mxu0
    %v2626 = vadd.f32 0.0, %v2625
    %v2627 = vpop.f32.mrf.mxu0
    %2628 = vmatprep.mubr.f32.mxu0 0.0
    %2629 = vmatmul.mubr.f32.gmra.mxu0 %v2542
    %v2630 = vpop.f32.mrf.mxu0
    %v2631 = vadd.f32 0.0, %v2630
    %v2632 = vpop.f32.mrf.mxu0
    %2633 = vmatprep.mubr.f32.mxu0 0.0
    %2634 = vmatmul.mubr.f32.gmra.mxu0 %v2545
    %v2635 = vpop.f32.mrf.mxu0
    %v2636 = vadd.f32 0.0, %v2635
    %v2637 = vpop.f32.mrf.mxu0
    %2638 = vdwg.mxu0
    %2639 = vrot.lane.b32.xlu0 %v2315, 120
    %v2640 = vpop.permute.xlu0 %2639
    %2641 = vrot.lane.b32.xlu0 %v2320, 120
    %v2642 = vpop.permute.xlu0 %2641
    %2643 = vrot.lane.b32.xlu0 %v2325, 120
    %v2644 = vpop.permute.xlu0 %2643
    %2645 = vrot.lane.b32.xlu0 %v2330, 120
    %v2646 = vpop.permute.xlu0 %2645
    %2647 = vrot.lane.b32.xlu0 %v2335, 120
    %v2648 = vpop.permute.xlu0 %2647
    %2649 = vrot.lane.b32.xlu0 %v2315, 88
    %v2650 = vpop.permute.xlu0 %2649
    %2651 = vrot.lane.b32.xlu0 %v2320, 88
    %v2652 = vpop.permute.xlu0 %2651
    %2653 = vrot.lane.b32.xlu0 %v2325, 88
    %v2654 = vpop.permute.xlu0 %2653
    %2655 = vrot.lane.b32.xlu0 %v2330, 88
    %v2656 = vpop.permute.xlu0 %2655
    %2657 = vrot.lane.b32.xlu0 %v2335, 88
    %v2658 = vpop.permute.xlu0 %2657
    %v2659 = vsel %vm405, %v2640, 0
    %v2661 = vsel %vm405, %v2642, 0
    %v2663 = vsel %vm405, %v2644, 0
    %v2665 = vsel %vm405, %v2646, 0
    %v2667 = vsel %vm405, %v2648, 0
    %v2669 = vsel %vm405, %v2650, 0
    %v2671 = vsel %vm405, %v2652, 0
    %v2673 = vsel %vm405, %v2654, 0
    %v2675 = vsel %vm405, %v2656, 0
    %v2677 = vsel %vm405, %v2658, 0
    %2679 = vmatprep.subr.mxu0 0.0
    %2680 = vmatpush1.xpose.msra.mxu0 0.0
    %2681 = vmatprep.subr.mxu0 0.0
    %2682 = vmatpush1.xpose.msra.mxu0 0.0
    %2683 = vmatprep.subr.mxu0 0.0
    %2684 = vmatpush1.xpose.msra.mxu0 0.0
    %2685 = vmatprep.subr.mxu0 0.0
    %2686 = vmatpush1.xpose.msra.mxu0 0.0
    %2687 = vmatprep.subr.mxu0 0.0
    %2688 = vmatpush1.xpose.msra.mxu0 0.0
    %2689 = vmatprep.subr.mxu0 0.0
    %2690 = vmatpush1.xpose.msra.mxu0 0.0
    %2691 = vmatprep.subr.mxu0 0.0
    %2692 = vmatpush1.xpose.msra.mxu0 0.0
    %2693 = vmatprep.subr.mxu0 0.0
    %2694 = vmatpush1.xpose.msra.mxu0 0.0
    %2695 = vmatprep.subr.mxu0 0.0
    %2696 = vmatpush1.xpose.msra.mxu0 0.0
    %2697 = vmatprep.subr.mxu0 0.0
    %2698 = vmatpush1.xpose.msra.mxu0 0.0
    %2699 = vmatprep.subr.mxu0 0.0
    %2700 = vmatpush1.xpose.msra.mxu0 0.0
    %2701 = vmatprep.subr.mxu0 0.0
    %2702 = vmatpush1.xpose.msra.mxu0 %v2677
    %2703 = vmatprep.subr.mxu0 0.0
    %2704 = vmatpush1.xpose.msra.mxu0 %v2675
    %2705 = vmatprep.subr.mxu0 0.0
    %2706 = vmatpush1.xpose.msra.mxu0 %v2673
    %2707 = vmatprep.subr.mxu0 0.0
    %2708 = vmatpush1.xpose.msra.mxu0 %v2671
    %2709 = vmatprep.subr.mxu0 0.0
    %2710 = vmatpush1.xpose.msra.mxu0 %v2669
    %2711 = vmatprep.subr.mxu0 0.0
    %2712 = vmatpush2.xpose.msra.mxu0 0.0
    %2713 = vmatprep.subr.mxu0 0.0
    %2714 = vmatpush2.xpose.msra.mxu0 0.0
    %2715 = vmatprep.subr.mxu0 0.0
    %2716 = vmatpush2.xpose.msra.mxu0 0.0
    %2717 = vmatprep.subr.mxu0 0.0
    %2718 = vmatpush2.xpose.msra.mxu0 0.0
    %2719 = vmatprep.subr.mxu0 0.0
    %2720 = vmatpush2.xpose.msra.mxu0 0.0
    %2721 = vmatprep.subr.mxu0 0.0
    %2722 = vmatpush2.xpose.msra.mxu0 0.0
    %2723 = vmatprep.subr.mxu0 0.0
    %2724 = vmatpush2.xpose.msra.mxu0 0.0
    %2725 = vmatprep.subr.mxu0 0.0
    %2726 = vmatpush2.xpose.msra.mxu0 0.0
    %2727 = vmatprep.subr.mxu0 0.0
    %2728 = vmatpush2.xpose.msra.mxu0 0.0
    %2729 = vmatprep.subr.mxu0 0.0
    %2730 = vmatpush2.xpose.msra.mxu0 0.0
    %2731 = vmatprep.subr.mxu0 0.0
    %2732 = vmatpush2.xpose.msra.mxu0 0.0
    %2733 = vmatprep.subr.mxu0 0.0
    %2734 = vmatpush2.xpose.msra.mxu0 0.0
    %2735 = vmatprep.subr.mxu0 0.0
    %2736 = vmatpush2.xpose.msra.mxu0 0.0
    %2737 = vmatprep.subr.mxu0 0.0
    %2738 = vmatpush2.xpose.msra.mxu0 0.0
    %2739 = vmatprep.subr.mxu0 0.0
    %2740 = vmatpush2.xpose.msra.mxu0 0.0
    %2741 = vmatprep.subr.mxu0 0.0
    %2742 = vmatpush2.xpose.msra.mxu0 0.0
    %2743 = vmatprep.mubr.f32.mxu0 0.0
    %2744 = vmatmul.mubr.f32.gmra.mxu0 %v2659
    %v2745 = vpop.f32.mrf.mxu0
    %v2746 = vadd.f32 %v256, %v2745
    %v2747 = vpop.f32.mrf.mxu0
    %2748 = vmatprep.mubr.f32.mxu0 0.0
    %2749 = vmatmul.mubr.f32.gmra.mxu0 %v2661
    %v2750 = vpop.f32.mrf.mxu0
    %v2751 = vadd.f32 %v257, %v2750
    %v2752 = vpop.f32.mrf.mxu0
    %2753 = vmatprep.mubr.f32.mxu0 0.0
    %2754 = vmatmul.mubr.f32.gmra.mxu0 %v2663
    %v2755 = vpop.f32.mrf.mxu0
    %v2756 = vadd.f32 %v258, %v2755
    %v2757 = vpop.f32.mrf.mxu0
    %2758 = vmatprep.mubr.f32.mxu0 0.0
    %2759 = vmatmul.mubr.f32.gmra.mxu0 %v2665
    %v2760 = vpop.f32.mrf.mxu0
    %v2761 = vadd.f32 %v259, %v2760
    %v2762 = vpop.f32.mrf.mxu0
    %2763 = vmatprep.mubr.f32.mxu0 0.0
    %2764 = vmatmul.mubr.f32.gmra.mxu0 %v2667
    %v2765 = vpop.f32.mrf.mxu0
    %v2766 = vadd.f32 %v260, %v2765
    %v2767 = vpop.f32.mrf.mxu0
    %2768 = vdwg.mxu0
    %v2769 = vsel %vm516, %v2746, -inf
    %2770 = vmax.xlane.f32.xlu0 %v2769
    %v2771 = vpop.xlane.xlu0 %2770
    %v2772 = vsel %vm516, %v2751, -inf
    %2773 = vmax.xlane.f32.xlu0 %v2772
    %v2774 = vpop.xlane.xlu0 %2773
    %v2775 = vsel %vm516, %v2756, -inf
    %2776 = vmax.xlane.f32.xlu0 %v2775
    %v2777 = vpop.xlane.xlu0 %2776
    %v2778 = vsel %vm516, %v2761, -inf
    %2779 = vmax.xlane.f32.xlu0 %v2778
    %v2780 = vpop.xlane.xlu0 %2779
    %v2781 = vsel %vm529, %v2766, -inf
    %2782 = vmax.xlane.f32.xlu0 %v2781
    %v2783 = vpop.xlane.xlu0 %2782
    %v2784 = vsub.f32 %v2746, %v2771
    %v2785 = vsub.f32 %v2751, %v2774
    %v2786 = vsub.f32 %v2756, %v2777
    %v2787 = vsub.f32 %v2761, %v2780
    %v2788 = vsub.f32 %v2766, %v2783
    %v2789 = vmul.f32 %v2784, 1.442695
    %v2790 = vpow.pop %v2789
    %v2791 = vmul.f32 %v2785, 1.442695
    %v2792 = vpow.pop %v2791
    %v2793 = vmul.f32 %v2786, 1.442695
    %v2794 = vpow.pop %v2793
    %v2795 = vmul.f32 %v2787, 1.442695
    %v2796 = vpow.pop %v2795
    %v2797 = vmul.f32 %v2788, 1.442695
    %v2798 = vpow.pop %v2797
    %v2799 = vsel %vm516, %v2790, 0.0
    %2800 = vadd.xlane.f32.xlu0 %v2799
    %v2801 = vpop.xlane.xlu0 %2800
    %v2802 = vsel %vm516, %v2792, 0.0
    %2803 = vadd.xlane.f32.xlu0 %v2802
    %v2804 = vpop.xlane.xlu0 %2803
    %v2805 = vsel %vm516, %v2794, 0.0
    %2806 = vadd.xlane.f32.xlu0 %v2805
    %v2807 = vpop.xlane.xlu0 %2806
    %v2808 = vsel %vm516, %v2796, 0.0
    %2809 = vadd.xlane.f32.xlu0 %v2808
    %v2810 = vpop.xlane.xlu0 %2809
    %v2811 = vsel %vm529, %v2798, 0.0
    %2812 = vadd.xlane.f32.xlu0 %v2811
    %v2813 = vpop.xlane.xlu0 %2812
    %v2814 = vrcp.pop %v2801
    %v2815 = vrcp.pop %v2804
    %v2816 = vrcp.pop %v2807
    %v2817 = vrcp.pop %v2810
    %v2818 = vrcp.pop %v2813
    %v2819 = vmul.f32 %v2790, %v2814
    %v2820 = vmul.f32 %v2792, %v2815
    %v2821 = vmul.f32 %v2794, %v2816
    %v2822 = vmul.f32 %v2796, %v2817
    %v2823 = vmul.f32 %v2798, %v2818
    %2824 = vrot.lane.b32.xlu0 %v2315, 56
    %v2825 = vpop.permute.xlu0 %2824
    %2826 = vrot.lane.b32.xlu0 %v2320, 56
    %v2827 = vpop.permute.xlu0 %2826
    %2828 = vrot.lane.b32.xlu0 %v2325, 56
    %v2829 = vpop.permute.xlu0 %2828
    %2830 = vrot.lane.b32.xlu0 %v2330, 56
    %v2831 = vpop.permute.xlu0 %2830
    %2832 = vrot.lane.b32.xlu0 %v2335, 56
    %v2833 = vpop.permute.xlu0 %2832
    %v2839 = vsel %vm516, %v2819, 0
    %v2842 = vsel %vm516, %v2820, 0
    %v2845 = vsel %vm516, %v2821, 0
    %v2848 = vsel %vm516, %v2822, 0
    %v2851 = vsel %vm516, %v2823, 0
    %v2853 = vsel %vm602, %v2833, 0
    %2855 = vmatprep.subr.mxu0 0.0
    %2856 = vmatpush1.msra.mxu0 0.0
    %2857 = vmatprep.subr.mxu0 0.0
    %2858 = vmatpush1.msra.mxu0 0.0
    %2859 = vmatprep.subr.mxu0 0.0
    %2860 = vmatpush1.msra.mxu0 0.0
    %2861 = vmatprep.subr.mxu0 0.0
    %2862 = vmatpush1.msra.mxu0 0.0
    %2863 = vmatprep.subr.mxu0 0.0
    %2864 = vmatpush1.msra.mxu0 0.0
    %2865 = vmatprep.subr.mxu0 0.0
    %2866 = vmatpush1.msra.mxu0 0.0
    %2867 = vmatprep.subr.mxu0 0.0
    %2868 = vmatpush1.msra.mxu0 0.0
    %2869 = vmatprep.subr.mxu0 0.0
    %2870 = vmatpush1.msra.mxu0 0.0
    %2871 = vmatprep.subr.mxu0 0.0
    %2872 = vmatpush1.msra.mxu0 0.0
    %2873 = vmatprep.subr.mxu0 0.0
    %2874 = vmatpush1.msra.mxu0 0.0
    %2875 = vmatprep.subr.mxu0 0.0
    %2876 = vmatpush1.msra.mxu0 0.0
    %2877 = vmatprep.subr.mxu0 0.0
    %2878 = vmatpush1.msra.mxu0 %v2853
    %2879 = vmatprep.subr.mxu0 0.0
    %2880 = vmatpush1.msra.mxu0 %v2831
    %2881 = vmatprep.subr.mxu0 0.0
    %2882 = vmatpush1.msra.mxu0 %v2829
    %2883 = vmatprep.subr.mxu0 0.0
    %2884 = vmatpush1.msra.mxu0 %v2827
    %2885 = vmatprep.subr.mxu0 0.0
    %2886 = vmatpush1.msra.mxu0 %v2825
    %2887 = vmatprep.subr.mxu0 0.0
    %2888 = vmatpush2.msra.mxu0 0.0
    %2889 = vmatprep.subr.mxu0 0.0
    %2890 = vmatpush2.msra.mxu0 0.0
    %2891 = vmatprep.subr.mxu0 0.0
    %2892 = vmatpush2.msra.mxu0 0.0
    %2893 = vmatprep.subr.mxu0 0.0
    %2894 = vmatpush2.msra.mxu0 0.0
    %2895 = vmatprep.subr.mxu0 0.0
    %2896 = vmatpush2.msra.mxu0 0.0
    %2897 = vmatprep.subr.mxu0 0.0
    %2898 = vmatpush2.msra.mxu0 0.0
    %2899 = vmatprep.subr.mxu0 0.0
    %2900 = vmatpush2.msra.mxu0 0.0
    %2901 = vmatprep.subr.mxu0 0.0
    %2902 = vmatpush2.msra.mxu0 0.0
    %2903 = vmatprep.subr.mxu0 0.0
    %2904 = vmatpush2.msra.mxu0 0.0
    %2905 = vmatprep.subr.mxu0 0.0
    %2906 = vmatpush2.msra.mxu0 0.0
    %2907 = vmatprep.subr.mxu0 0.0
    %2908 = vmatpush2.msra.mxu0 0.0
    %2909 = vmatprep.subr.mxu0 0.0
    %2910 = vmatpush2.msra.mxu0 0.0
    %2911 = vmatprep.subr.mxu0 0.0
    %2912 = vmatpush2.msra.mxu0 0.0
    %2913 = vmatprep.subr.mxu0 0.0
    %2914 = vmatpush2.msra.mxu0 0.0
    %2915 = vmatprep.subr.mxu0 0.0
    %2916 = vmatpush2.msra.mxu0 0.0
    %2917 = vmatprep.subr.mxu0 0.0
    %2918 = vmatpush2.msra.mxu0 0.0
    %2919 = vmatprep.mubr.f32.mxu0 0.0
    %2920 = vmatmul.mubr.f32.gmra.mxu0 %v2839
    %v2921 = vpop.f32.mrf.mxu0
    %v2922 = vadd.f32 0.0, %v2921
    %v2923 = vpop.f32.mrf.mxu0
    %2924 = vmatprep.mubr.f32.mxu0 0.0
    %2925 = vmatmul.mubr.f32.gmra.mxu0 %v2842
    %v2926 = vpop.f32.mrf.mxu0
    %v2927 = vadd.f32 0.0, %v2926
    %v2928 = vpop.f32.mrf.mxu0
    %2929 = vmatprep.mubr.f32.mxu0 0.0
    %2930 = vmatmul.mubr.f32.gmra.mxu0 %v2845
    %v2931 = vpop.f32.mrf.mxu0
    %v2932 = vadd.f32 0.0, %v2931
    %v2933 = vpop.f32.mrf.mxu0
    %2934 = vmatprep.mubr.f32.mxu0 0.0
    %2935 = vmatmul.mubr.f32.gmra.mxu0 %v2848
    %v2936 = vpop.f32.mrf.mxu0
    %v2937 = vadd.f32 0.0, %v2936
    %v2938 = vpop.f32.mrf.mxu0
    %2939 = vmatprep.mubr.f32.mxu0 0.0
    %2940 = vmatmul.mubr.f32.gmra.mxu0 %v2851
    %v2941 = vpop.f32.mrf.mxu0
    %v2942 = vadd.f32 0.0, %v2941
    %v2943 = vpop.f32.mrf.mxu0
    %2944 = vdwg.mxu0
    %2945 = vrot.lane.b32.xlu0 %v2315, 112
    %v2946 = vpop.permute.xlu0 %2945
    %2947 = vrot.lane.b32.xlu0 %v2320, 112
    %v2948 = vpop.permute.xlu0 %2947
    %2949 = vrot.lane.b32.xlu0 %v2325, 112
    %v2950 = vpop.permute.xlu0 %2949
    %2951 = vrot.lane.b32.xlu0 %v2330, 112
    %v2952 = vpop.permute.xlu0 %2951
    %2953 = vrot.lane.b32.xlu0 %v2335, 112
    %v2954 = vpop.permute.xlu0 %2953
    %2955 = vrot.lane.b32.xlu0 %v2315, 80
    %v2956 = vpop.permute.xlu0 %2955
    %2957 = vrot.lane.b32.xlu0 %v2320, 80
    %v2958 = vpop.permute.xlu0 %2957
    %2959 = vrot.lane.b32.xlu0 %v2325, 80
    %v2960 = vpop.permute.xlu0 %2959
    %2961 = vrot.lane.b32.xlu0 %v2330, 80
    %v2962 = vpop.permute.xlu0 %2961
    %2963 = vrot.lane.b32.xlu0 %v2335, 80
    %v2964 = vpop.permute.xlu0 %2963
    %v2965 = vsel %vm405, %v2946, 0
    %v2967 = vsel %vm405, %v2948, 0
    %v2969 = vsel %vm405, %v2950, 0
    %v2971 = vsel %vm405, %v2952, 0
    %v2973 = vsel %vm405, %v2954, 0
    %v2975 = vsel %vm405, %v2956, 0
    %v2977 = vsel %vm405, %v2958, 0
    %v2979 = vsel %vm405, %v2960, 0
    %v2981 = vsel %vm405, %v2962, 0
    %v2983 = vsel %vm405, %v2964, 0
    %2985 = vmatprep.subr.mxu0 0.0
    %2986 = vmatpush1.xpose.msra.mxu0 0.0
    %2987 = vmatprep.subr.mxu0 0.0
    %2988 = vmatpush1.xpose.msra.mxu0 0.0
    %2989 = vmatprep.subr.mxu0 0.0
    %2990 = vmatpush1.xpose.msra.mxu0 0.0
    %2991 = vmatprep.subr.mxu0 0.0
    %2992 = vmatpush1.xpose.msra.mxu0 0.0
    %2993 = vmatprep.subr.mxu0 0.0
    %2994 = vmatpush1.xpose.msra.mxu0 0.0
    %2995 = vmatprep.subr.mxu0 0.0
    %2996 = vmatpush1.xpose.msra.mxu0 0.0
    %2997 = vmatprep.subr.mxu0 0.0
    %2998 = vmatpush1.xpose.msra.mxu0 0.0
    %2999 = vmatprep.subr.mxu0 0.0
    %3000 = vmatpush1.xpose.msra.mxu0 0.0
    %3001 = vmatprep.subr.mxu0 0.0
    %3002 = vmatpush1.xpose.msra.mxu0 0.0
    %3003 = vmatprep.subr.mxu0 0.0
    %3004 = vmatpush1.xpose.msra.mxu0 0.0
    %3005 = vmatprep.subr.mxu0 0.0
    %3006 = vmatpush1.xpose.msra.mxu0 0.0
    %3007 = vmatprep.subr.mxu0 0.0
    %3008 = vmatpush1.xpose.msra.mxu0 %v2983
    %3009 = vmatprep.subr.mxu0 0.0
    %3010 = vmatpush1.xpose.msra.mxu0 %v2981
    %3011 = vmatprep.subr.mxu0 0.0
    %3012 = vmatpush1.xpose.msra.mxu0 %v2979
    %3013 = vmatprep.subr.mxu0 0.0
    %3014 = vmatpush1.xpose.msra.mxu0 %v2977
    %3015 = vmatprep.subr.mxu0 0.0
    %3016 = vmatpush1.xpose.msra.mxu0 %v2975
    %3017 = vmatprep.subr.mxu0 0.0
    %3018 = vmatpush2.xpose.msra.mxu0 0.0
    %3019 = vmatprep.subr.mxu0 0.0
    %3020 = vmatpush2.xpose.msra.mxu0 0.0
    %3021 = vmatprep.subr.mxu0 0.0
    %3022 = vmatpush2.xpose.msra.mxu0 0.0
    %3023 = vmatprep.subr.mxu0 0.0
    %3024 = vmatpush2.xpose.msra.mxu0 0.0
    %3025 = vmatprep.subr.mxu0 0.0
    %3026 = vmatpush2.xpose.msra.mxu0 0.0
    %3027 = vmatprep.subr.mxu0 0.0
    %3028 = vmatpush2.xpose.msra.mxu0 0.0
    %3029 = vmatprep.subr.mxu0 0.0
    %3030 = vmatpush2.xpose.msra.mxu0 0.0
    %3031 = vmatprep.subr.mxu0 0.0
    %3032 = vmatpush2.xpose.msra.mxu0 0.0
    %3033 = vmatprep.subr.mxu0 0.0
    %3034 = vmatpush2.xpose.msra.mxu0 0.0
    %3035 = vmatprep.subr.mxu0 0.0
    %3036 = vmatpush2.xpose.msra.mxu0 0.0
    %3037 = vmatprep.subr.mxu0 0.0
    %3038 = vmatpush2.xpose.msra.mxu0 0.0
    %3039 = vmatprep.subr.mxu0 0.0
    %3040 = vmatpush2.xpose.msra.mxu0 0.0
    %3041 = vmatprep.subr.mxu0 0.0
    %3042 = vmatpush2.xpose.msra.mxu0 0.0
    %3043 = vmatprep.subr.mxu0 0.0
    %3044 = vmatpush2.xpose.msra.mxu0 0.0
    %3045 = vmatprep.subr.mxu0 0.0
    %3046 = vmatpush2.xpose.msra.mxu0 0.0
    %3047 = vmatprep.subr.mxu0 0.0
    %3048 = vmatpush2.xpose.msra.mxu0 0.0
    %3049 = vmatprep.mubr.f32.mxu0 0.0
    %3050 = vmatmul.mubr.f32.gmra.mxu0 %v2965
    %v3051 = vpop.f32.mrf.mxu0
    %v3052 = vadd.f32 %v256, %v3051
    %v3053 = vpop.f32.mrf.mxu0
    %3054 = vmatprep.mubr.f32.mxu0 0.0
    %3055 = vmatmul.mubr.f32.gmra.mxu0 %v2967
    %v3056 = vpop.f32.mrf.mxu0
    %v3057 = vadd.f32 %v257, %v3056
    %v3058 = vpop.f32.mrf.mxu0
    %3059 = vmatprep.mubr.f32.mxu0 0.0
    %3060 = vmatmul.mubr.f32.gmra.mxu0 %v2969
    %v3061 = vpop.f32.mrf.mxu0
    %v3062 = vadd.f32 %v258, %v3061
    %v3063 = vpop.f32.mrf.mxu0
    %3064 = vmatprep.mubr.f32.mxu0 0.0
    %3065 = vmatmul.mubr.f32.gmra.mxu0 %v2971
    %v3066 = vpop.f32.mrf.mxu0
    %v3067 = vadd.f32 %v259, %v3066
    %v3068 = vpop.f32.mrf.mxu0
    %3069 = vmatprep.mubr.f32.mxu0 0.0
    %3070 = vmatmul.mubr.f32.gmra.mxu0 %v2973
    %v3071 = vpop.f32.mrf.mxu0
    %v3072 = vadd.f32 %v260, %v3071
    %v3073 = vpop.f32.mrf.mxu0
    %3074 = vdwg.mxu0
    %v3075 = vsel %vm516, %v3052, -inf
    %3076 = vmax.xlane.f32.xlu0 %v3075
    %v3077 = vpop.xlane.xlu0 %3076
    %v3078 = vsel %vm516, %v3057, -inf
    %3079 = vmax.xlane.f32.xlu0 %v3078
    %v3080 = vpop.xlane.xlu0 %3079
    %v3081 = vsel %vm516, %v3062, -inf
    %3082 = vmax.xlane.f32.xlu0 %v3081
    %v3083 = vpop.xlane.xlu0 %3082
    %v3084 = vsel %vm516, %v3067, -inf
    %3085 = vmax.xlane.f32.xlu0 %v3084
    %v3086 = vpop.xlane.xlu0 %3085
    %v3087 = vsel %vm529, %v3072, -inf
    %3088 = vmax.xlane.f32.xlu0 %v3087
    %v3089 = vpop.xlane.xlu0 %3088
    %v3090 = vsub.f32 %v3052, %v3077
    %v3091 = vsub.f32 %v3057, %v3080
    %v3092 = vsub.f32 %v3062, %v3083
    %v3093 = vsub.f32 %v3067, %v3086
    %v3094 = vsub.f32 %v3072, %v3089
    %v3095 = vmul.f32 %v3090, 1.442695
    %v3096 = vpow.pop %v3095
    %v3097 = vmul.f32 %v3091, 1.442695
    %v3098 = vpow.pop %v3097
    %v3099 = vmul.f32 %v3092, 1.442695
    %v3100 = vpow.pop %v3099
    %v3101 = vmul.f32 %v3093, 1.442695
    %v3102 = vpow.pop %v3101
    %v3103 = vmul.f32 %v3094, 1.442695
    %v3104 = vpow.pop %v3103
    %v3105 = vsel %vm516, %v3096, 0.0
    %3106 = vadd.xlane.f32.xlu0 %v3105
    %v3107 = vpop.xlane.xlu0 %3106
    %v3108 = vsel %vm516, %v3098, 0.0
    %3109 = vadd.xlane.f32.xlu0 %v3108
    %v3110 = vpop.xlane.xlu0 %3109
    %v3111 = vsel %vm516, %v3100, 0.0
    %3112 = vadd.xlane.f32.xlu0 %v3111
    %v3113 = vpop.xlane.xlu0 %3112
    %v3114 = vsel %vm516, %v3102, 0.0
    %3115 = vadd.xlane.f32.xlu0 %v3114
    %v3116 = vpop.xlane.xlu0 %3115
    %v3117 = vsel %vm529, %v3104, 0.0
    %3118 = vadd.xlane.f32.xlu0 %v3117
    %v3119 = vpop.xlane.xlu0 %3118
    %v3120 = vrcp.pop %v3107
    %v3121 = vrcp.pop %v3110
    %v3122 = vrcp.pop %v3113
    %v3123 = vrcp.pop %v3116
    %v3124 = vrcp.pop %v3119
    %v3125 = vmul.f32 %v3096, %v3120
    %v3126 = vmul.f32 %v3098, %v3121
    %v3127 = vmul.f32 %v3100, %v3122
    %v3128 = vmul.f32 %v3102, %v3123
    %v3129 = vmul.f32 %v3104, %v3124
    %3130 = vrot.lane.b32.xlu0 %v2315, 48
    %v3131 = vpop.permute.xlu0 %3130
    %3132 = vrot.lane.b32.xlu0 %v2320, 48
    %v3133 = vpop.permute.xlu0 %3132
    %3134 = vrot.lane.b32.xlu0 %v2325, 48
    %v3135 = vpop.permute.xlu0 %3134
    %3136 = vrot.lane.b32.xlu0 %v2330, 48
    %v3137 = vpop.permute.xlu0 %3136
    %3138 = vrot.lane.b32.xlu0 %v2335, 48
    %v3139 = vpop.permute.xlu0 %3138
    %v3145 = vsel %vm516, %v3125, 0
    %v3148 = vsel %vm516, %v3126, 0
    %v3151 = vsel %vm516, %v3127, 0
    %v3154 = vsel %vm516, %v3128, 0
    %v3157 = vsel %vm516, %v3129, 0
    %v3159 = vsel %vm602, %v3139, 0
    %3161 = vmatprep.subr.mxu0 0.0
    %3162 = vmatpush1.msra.mxu0 0.0
    %3163 = vmatprep.subr.mxu0 0.0
    %3164 = vmatpush1.msra.mxu0 0.0
    %3165 = vmatprep.subr.mxu0 0.0
    %3166 = vmatpush1.msra.mxu0 0.0
    %3167 = vmatprep.subr.mxu0 0.0
    %3168 = vmatpush1.msra.mxu0 0.0
    %3169 = vmatprep.subr.mxu0 0.0
    %3170 = vmatpush1.msra.mxu0 0.0
    %3171 = vmatprep.subr.mxu0 0.0
    %3172 = vmatpush1.msra.mxu0 0.0
    %3173 = vmatprep.subr.mxu0 0.0
    %3174 = vmatpush1.msra.mxu0 0.0
    %3175 = vmatprep.subr.mxu0 0.0
    %3176 = vmatpush1.msra.mxu0 0.0
    %3177 = vmatprep.subr.mxu0 0.0
    %3178 = vmatpush1.msra.mxu0 0.0
    %3179 = vmatprep.subr.mxu0 0.0
    %3180 = vmatpush1.msra.mxu0 0.0
    %3181 = vmatprep.subr.mxu0 0.0
    %3182 = vmatpush1.msra.mxu0 0.0
    %3183 = vmatprep.subr.mxu0 0.0
    %3184 = vmatpush1.msra.mxu0 %v3159
    %3185 = vmatprep.subr.mxu0 0.0
    %3186 = vmatpush1.msra.mxu0 %v3137
    %3187 = vmatprep.subr.mxu0 0.0
    %3188 = vmatpush1.msra.mxu0 %v3135
    %3189 = vmatprep.subr.mxu0 0.0
    %3190 = vmatpush1.msra.mxu0 %v3133
    %3191 = vmatprep.subr.mxu0 0.0
    %3192 = vmatpush1.msra.mxu0 %v3131
    %3193 = vmatprep.subr.mxu0 0.0
    %3194 = vmatpush2.msra.mxu0 0.0
    %3195 = vmatprep.subr.mxu0 0.0
    %3196 = vmatpush2.msra.mxu0 0.0
    %3197 = vmatprep.subr.mxu0 0.0
    %3198 = vmatpush2.msra.mxu0 0.0
    %3199 = vmatprep.subr.mxu0 0.0
    %3200 = vmatpush2.msra.mxu0 0.0
    %3201 = vmatprep.subr.mxu0 0.0
    %3202 = vmatpush2.msra.mxu0 0.0
    %3203 = vmatprep.subr.mxu0 0.0
    %3204 = vmatpush2.msra.mxu0 0.0
    %3205 = vmatprep.subr.mxu0 0.0
    %3206 = vmatpush2.msra.mxu0 0.0
    %3207 = vmatprep.subr.mxu0 0.0
    %3208 = vmatpush2.msra.mxu0 0.0
    %3209 = vmatprep.subr.mxu0 0.0
    %3210 = vmatpush2.msra.mxu0 0.0
    %3211 = vmatprep.subr.mxu0 0.0
    %3212 = vmatpush2.msra.mxu0 0.0
    %3213 = vmatprep.subr.mxu0 0.0
    %3214 = vmatpush2.msra.mxu0 0.0
    %3215 = vmatprep.subr.mxu0 0.0
    %3216 = vmatpush2.msra.mxu0 0.0
    %3217 = vmatprep.subr.mxu0 0.0
    %3218 = vmatpush2.msra.mxu0 0.0
    %3219 = vmatprep.subr.mxu0 0.0
    %3220 = vmatpush2.msra.mxu0 0.0
    %3221 = vmatprep.subr.mxu0 0.0
    %3222 = vmatpush2.msra.mxu0 0.0
    %3223 = vmatprep.subr.mxu0 0.0
    %3224 = vmatpush2.msra.mxu0 0.0
    %3225 = vmatprep.mubr.f32.mxu0 0.0
    %3226 = vmatmul.mubr.f32.gmra.mxu0 %v3145
    %v3227 = vpop.f32.mrf.mxu0
    %v3228 = vadd.f32 0.0, %v3227
    %v3229 = vpop.f32.mrf.mxu0
    %3230 = vmatprep.mubr.f32.mxu0 0.0
    %3231 = vmatmul.mubr.f32.gmra.mxu0 %v3148
    %v3232 = vpop.f32.mrf.mxu0
    %v3233 = vadd.f32 0.0, %v3232
    %v3234 = vpop.f32.mrf.mxu0
    %3235 = vmatprep.mubr.f32.mxu0 0.0
    %3236 = vmatmul.mubr.f32.gmra.mxu0 %v3151
    %v3237 = vpop.f32.mrf.mxu0
    %v3238 = vadd.f32 0.0, %v3237
    %v3239 = vpop.f32.mrf.mxu0
    %3240 = vmatprep.mubr.f32.mxu0 0.0
    %3241 = vmatmul.mubr.f32.gmra.mxu0 %v3154
    %v3242 = vpop.f32.mrf.mxu0
    %v3243 = vadd.f32 0.0, %v3242
    %v3244 = vpop.f32.mrf.mxu0
    %3245 = vmatprep.mubr.f32.mxu0 0.0
    %3246 = vmatmul.mubr.f32.gmra.mxu0 %v3157
    %v3247 = vpop.f32.mrf.mxu0
    %v3248 = vadd.f32 0.0, %v3247
    %v3249 = vpop.f32.mrf.mxu0
    %3250 = vdwg.mxu0
    %3251 = vrot.lane.b32.xlu0 %v2315, 104
    %v3252 = vpop.permute.xlu0 %3251
    %3253 = vrot.lane.b32.xlu0 %v2320, 104
    %v3254 = vpop.permute.xlu0 %3253
    %3255 = vrot.lane.b32.xlu0 %v2325, 104
    %v3256 = vpop.permute.xlu0 %3255
    %3257 = vrot.lane.b32.xlu0 %v2330, 104
    %v3258 = vpop.permute.xlu0 %3257
    %3259 = vrot.lane.b32.xlu0 %v2335, 104
    %v3260 = vpop.permute.xlu0 %3259
    %3261 = vrot.lane.b32.xlu0 %v2315, 72
    %v3262 = vpop.permute.xlu0 %3261
    %3263 = vrot.lane.b32.xlu0 %v2320, 72
    %v3264 = vpop.permute.xlu0 %3263
    %3265 = vrot.lane.b32.xlu0 %v2325, 72
    %v3266 = vpop.permute.xlu0 %3265
    %3267 = vrot.lane.b32.xlu0 %v2330, 72
    %v3268 = vpop.permute.xlu0 %3267
    %3269 = vrot.lane.b32.xlu0 %v2335, 72
    %v3270 = vpop.permute.xlu0 %3269
    %v3271 = vsel %vm405, %v3252, 0
    %v3273 = vsel %vm405, %v3254, 0
    %v3275 = vsel %vm405, %v3256, 0
    %v3277 = vsel %vm405, %v3258, 0
    %v3279 = vsel %vm405, %v3260, 0
    %v3281 = vsel %vm405, %v3262, 0
    %v3283 = vsel %vm405, %v3264, 0
    %v3285 = vsel %vm405, %v3266, 0
    %v3287 = vsel %vm405, %v3268, 0
    %v3289 = vsel %vm405, %v3270, 0
    %3291 = vmatprep.subr.mxu0 0.0
    %3292 = vmatpush1.xpose.msra.mxu0 0.0
    %3293 = vmatprep.subr.mxu0 0.0
    %3294 = vmatpush1.xpose.msra.mxu0 0.0
    %3295 = vmatprep.subr.mxu0 0.0
    %3296 = vmatpush1.xpose.msra.mxu0 0.0
    %3297 = vmatprep.subr.mxu0 0.0
    %3298 = vmatpush1.xpose.msra.mxu0 0.0
    %3299 = vmatprep.subr.mxu0 0.0
    %3300 = vmatpush1.xpose.msra.mxu0 0.0
    %3301 = vmatprep.subr.mxu0 0.0
    %3302 = vmatpush1.xpose.msra.mxu0 0.0
    %3303 = vmatprep.subr.mxu0 0.0
    %3304 = vmatpush1.xpose.msra.mxu0 0.0
    %3305 = vmatprep.subr.mxu0 0.0
    %3306 = vmatpush1.xpose.msra.mxu0 0.0
    %3307 = vmatprep.subr.mxu0 0.0
    %3308 = vmatpush1.xpose.msra.mxu0 0.0
    %3309 = vmatprep.subr.mxu0 0.0
    %3310 = vmatpush1.xpose.msra.mxu0 0.0
    %3311 = vmatprep.subr.mxu0 0.0
    %3312 = vmatpush1.xpose.msra.mxu0 0.0
    %3313 = vmatprep.subr.mxu0 0.0
    %3314 = vmatpush1.xpose.msra.mxu0 %v3289
    %3315 = vmatprep.subr.mxu0 0.0
    %3316 = vmatpush1.xpose.msra.mxu0 %v3287
    %3317 = vmatprep.subr.mxu0 0.0
    %3318 = vmatpush1.xpose.msra.mxu0 %v3285
    %3319 = vmatprep.subr.mxu0 0.0
    %3320 = vmatpush1.xpose.msra.mxu0 %v3283
    %3321 = vmatprep.subr.mxu0 0.0
    %3322 = vmatpush1.xpose.msra.mxu0 %v3281
    %3323 = vmatprep.subr.mxu0 0.0
    %3324 = vmatpush2.xpose.msra.mxu0 0.0
    %3325 = vmatprep.subr.mxu0 0.0
    %3326 = vmatpush2.xpose.msra.mxu0 0.0
    %3327 = vmatprep.subr.mxu0 0.0
    %3328 = vmatpush2.xpose.msra.mxu0 0.0
    %3329 = vmatprep.subr.mxu0 0.0
    %3330 = vmatpush2.xpose.msra.mxu0 0.0
    %3331 = vmatprep.subr.mxu0 0.0
    %3332 = vmatpush2.xpose.msra.mxu0 0.0
    %3333 = vmatprep.subr.mxu0 0.0
    %3334 = vmatpush2.xpose.msra.mxu0 0.0
    %3335 = vmatprep.subr.mxu0 0.0
    %3336 = vmatpush2.xpose.msra.mxu0 0.0
    %3337 = vmatprep.subr.mxu0 0.0
    %3338 = vmatpush2.xpose.msra.mxu0 0.0
    %3339 = vmatprep.subr.mxu0 0.0
    %3340 = vmatpush2.xpose.msra.mxu0 0.0
    %3341 = vmatprep.subr.mxu0 0.0
    %3342 = vmatpush2.xpose.msra.mxu0 0.0
    %3343 = vmatprep.subr.mxu0 0.0
    %3344 = vmatpush2.xpose.msra.mxu0 0.0
    %3345 = vmatprep.subr.mxu0 0.0
    %3346 = vmatpush2.xpose.msra.mxu0 0.0
    %3347 = vmatprep.subr.mxu0 0.0
    %3348 = vmatpush2.xpose.msra.mxu0 0.0
    %3349 = vmatprep.subr.mxu0 0.0
    %3350 = vmatpush2.xpose.msra.mxu0 0.0
    %3351 = vmatprep.subr.mxu0 0.0
    %3352 = vmatpush2.xpose.msra.mxu0 0.0
    %3353 = vmatprep.subr.mxu0 0.0
    %3354 = vmatpush2.xpose.msra.mxu0 0.0
    %3355 = vmatprep.mubr.f32.mxu0 0.0
    %3356 = vmatmul.mubr.f32.gmra.mxu0 %v3271
    %v3357 = vpop.f32.mrf.mxu0
    %v3358 = vadd.f32 %v256, %v3357
    %v3359 = vpop.f32.mrf.mxu0
    %3360 = vmatprep.mubr.f32.mxu0 0.0
    %3361 = vmatmul.mubr.f32.gmra.mxu0 %v3273
    %v3362 = vpop.f32.mrf.mxu0
    %v3363 = vadd.f32 %v257, %v3362
    %v3364 = vpop.f32.mrf.mxu0
    %3365 = vmatprep.mubr.f32.mxu0 0.0
    %3366 = vmatmul.mubr.f32.gmra.mxu0 %v3275
    %v3367 = vpop.f32.mrf.mxu0
    %v3368 = vadd.f32 %v258, %v3367
    %v3369 = vpop.f32.mrf.mxu0
    %3370 = vmatprep.mubr.f32.mxu0 0.0
    %3371 = vmatmul.mubr.f32.gmra.mxu0 %v3277
    %v3372 = vpop.f32.mrf.mxu0
    %v3373 = vadd.f32 %v259, %v3372
    %v3374 = vpop.f32.mrf.mxu0
    %3375 = vmatprep.mubr.f32.mxu0 0.0
    %3376 = vmatmul.mubr.f32.gmra.mxu0 %v3279
    %v3377 = vpop.f32.mrf.mxu0
    %v3378 = vadd.f32 %v260, %v3377
    %v3379 = vpop.f32.mrf.mxu0
    %3380 = vdwg.mxu0
    %v3381 = vsel %vm516, %v3358, -inf
    %3382 = vmax.xlane.f32.xlu0 %v3381
    %v3383 = vpop.xlane.xlu0 %3382
    %v3384 = vsel %vm516, %v3363, -inf
    %3385 = vmax.xlane.f32.xlu0 %v3384
    %v3386 = vpop.xlane.xlu0 %3385
    %v3387 = vsel %vm516, %v3368, -inf
    %3388 = vmax.xlane.f32.xlu0 %v3387
    %v3389 = vpop.xlane.xlu0 %3388
    %v3390 = vsel %vm516, %v3373, -inf
    %3391 = vmax.xlane.f32.xlu0 %v3390
    %v3392 = vpop.xlane.xlu0 %3391
    %v3393 = vsel %vm529, %v3378, -inf
    %3394 = vmax.xlane.f32.xlu0 %v3393
    %v3395 = vpop.xlane.xlu0 %3394
    %v3396 = vsub.f32 %v3358, %v3383
    %v3397 = vsub.f32 %v3363, %v3386
    %v3398 = vsub.f32 %v3368, %v3389
    %v3399 = vsub.f32 %v3373, %v3392
    %v3400 = vsub.f32 %v3378, %v3395
    %v3401 = vmul.f32 %v3396, 1.442695
    %v3402 = vpow.pop %v3401
    %v3403 = vmul.f32 %v3397, 1.442695
    %v3404 = vpow.pop %v3403
    %v3405 = vmul.f32 %v3398, 1.442695
    %v3406 = vpow.pop %v3405
    %v3407 = vmul.f32 %v3399, 1.442695
    %v3408 = vpow.pop %v3407
    %v3409 = vmul.f32 %v3400, 1.442695
    %v3410 = vpow.pop %v3409
    %v3411 = vsel %vm516, %v3402, 0.0
    %3412 = vadd.xlane.f32.xlu0 %v3411
    %v3413 = vpop.xlane.xlu0 %3412
    %v3414 = vsel %vm516, %v3404, 0.0
    %3415 = vadd.xlane.f32.xlu0 %v3414
    %v3416 = vpop.xlane.xlu0 %3415
    %v3417 = vsel %vm516, %v3406, 0.0
    %3418 = vadd.xlane.f32.xlu0 %v3417
    %v3419 = vpop.xlane.xlu0 %3418
    %v3420 = vsel %vm516, %v3408, 0.0
    %3421 = vadd.xlane.f32.xlu0 %v3420
    %v3422 = vpop.xlane.xlu0 %3421
    %v3423 = vsel %vm529, %v3410, 0.0
    %3424 = vadd.xlane.f32.xlu0 %v3423
    %v3425 = vpop.xlane.xlu0 %3424
    %v3426 = vrcp.pop %v3413
    %v3427 = vrcp.pop %v3416
    %v3428 = vrcp.pop %v3419
    %v3429 = vrcp.pop %v3422
    %v3430 = vrcp.pop %v3425
    %v3431 = vmul.f32 %v3402, %v3426
    %v3432 = vmul.f32 %v3404, %v3427
    %v3433 = vmul.f32 %v3406, %v3428
    %v3434 = vmul.f32 %v3408, %v3429
    %v3435 = vmul.f32 %v3410, %v3430
    %3436 = vrot.lane.b32.xlu0 %v2315, 40
    %v3437 = vpop.permute.xlu0 %3436
    %3438 = vrot.lane.b32.xlu0 %v2320, 40
    %v3439 = vpop.permute.xlu0 %3438
    %3440 = vrot.lane.b32.xlu0 %v2325, 40
    %v3441 = vpop.permute.xlu0 %3440
    %3442 = vrot.lane.b32.xlu0 %v2330, 40
    %v3443 = vpop.permute.xlu0 %3442
    %3444 = vrot.lane.b32.xlu0 %v2335, 40
    %v3445 = vpop.permute.xlu0 %3444
    %v3451 = vsel %vm516, %v3431, 0
    %v3454 = vsel %vm516, %v3432, 0
    %v3457 = vsel %vm516, %v3433, 0
    %v3460 = vsel %vm516, %v3434, 0
    %v3463 = vsel %vm516, %v3435, 0
    %v3465 = vsel %vm602, %v3445, 0
    %3467 = vmatprep.subr.mxu0 0.0
    %3468 = vmatpush1.msra.mxu0 0.0
    %3469 = vmatprep.subr.mxu0 0.0
    %3470 = vmatpush1.msra.mxu0 0.0
    %3471 = vmatprep.subr.mxu0 0.0
    %3472 = vmatpush1.msra.mxu0 0.0
    %3473 = vmatprep.subr.mxu0 0.0
    %3474 = vmatpush1.msra.mxu0 0.0
    %3475 = vmatprep.subr.mxu0 0.0
    %3476 = vmatpush1.msra.mxu0 0.0
    %3477 = vmatprep.subr.mxu0 0.0
    %3478 = vmatpush1.msra.mxu0 0.0
    %3479 = vmatprep.subr.mxu0 0.0
    %3480 = vmatpush1.msra.mxu0 0.0
    %3481 = vmatprep.subr.mxu0 0.0
    %3482 = vmatpush1.msra.mxu0 0.0
    %3483 = vmatprep.subr.mxu0 0.0
    %3484 = vmatpush1.msra.mxu0 0.0
    %3485 = vmatprep.subr.mxu0 0.0
    %3486 = vmatpush1.msra.mxu0 0.0
    %3487 = vmatprep.subr.mxu0 0.0
    %3488 = vmatpush1.msra.mxu0 0.0
    %3489 = vmatprep.subr.mxu0 0.0
    %3490 = vmatpush1.msra.mxu0 %v3465
    %3491 = vmatprep.subr.mxu0 0.0
    %3492 = vmatpush1.msra.mxu0 %v3443
    %3493 = vmatprep.subr.mxu0 0.0
    %3494 = vmatpush1.msra.mxu0 %v3441
    %3495 = vmatprep.subr.mxu0 0.0
    %3496 = vmatpush1.msra.mxu0 %v3439
    %3497 = vmatprep.subr.mxu0 0.0
    %3498 = vmatpush1.msra.mxu0 %v3437
    %3499 = vmatprep.subr.mxu0 0.0
    %3500 = vmatpush2.msra.mxu0 0.0
    %3501 = vmatprep.subr.mxu0 0.0
    %3502 = vmatpush2.msra.mxu0 0.0
    %3503 = vmatprep.subr.mxu0 0.0
    %3504 = vmatpush2.msra.mxu0 0.0
    %3505 = vmatprep.subr.mxu0 0.0
    %3506 = vmatpush2.msra.mxu0 0.0
    %3507 = vmatprep.subr.mxu0 0.0
    %3508 = vmatpush2.msra.mxu0 0.0
    %3509 = vmatprep.subr.mxu0 0.0
    %3510 = vmatpush2.msra.mxu0 0.0
    %3511 = vmatprep.subr.mxu0 0.0
    %3512 = vmatpush2.msra.mxu0 0.0
    %3513 = vmatprep.subr.mxu0 0.0
    %3514 = vmatpush2.msra.mxu0 0.0
    %3515 = vmatprep.subr.mxu0 0.0
    %3516 = vmatpush2.msra.mxu0 0.0
    %3517 = vmatprep.subr.mxu0 0.0
    %3518 = vmatpush2.msra.mxu0 0.0
    %3519 = vmatprep.subr.mxu0 0.0
    %3520 = vmatpush2.msra.mxu0 0.0
    %3521 = vmatprep.subr.mxu0 0.0
    %3522 = vmatpush2.msra.mxu0 0.0
    %3523 = vmatprep.subr.mxu0 0.0
    %3524 = vmatpush2.msra.mxu0 0.0
    %3525 = vmatprep.subr.mxu0 0.0
    %3526 = vmatpush2.msra.mxu0 0.0
    %3527 = vmatprep.subr.mxu0 0.0
    %3528 = vmatpush2.msra.mxu0 0.0
    %3529 = vmatprep.subr.mxu0 0.0
    %3530 = vmatpush2.msra.mxu0 0.0
    %3531 = vmatprep.mubr.f32.mxu0 0.0
    %3532 = vmatmul.mubr.f32.gmra.mxu0 %v3451
    %v3533 = vpop.f32.mrf.mxu0
    %v3534 = vadd.f32 0.0, %v3533
    %v3535 = vpop.f32.mrf.mxu0
    %3536 = vmatprep.mubr.f32.mxu0 0.0
    %3537 = vmatmul.mubr.f32.gmra.mxu0 %v3454
    %v3538 = vpop.f32.mrf.mxu0
    %v3539 = vadd.f32 0.0, %v3538
    %v3540 = vpop.f32.mrf.mxu0
    %3541 = vmatprep.mubr.f32.mxu0 0.0
    %3542 = vmatmul.mubr.f32.gmra.mxu0 %v3457
    %v3543 = vpop.f32.mrf.mxu0
    %v3544 = vadd.f32 0.0, %v3543
    %v3545 = vpop.f32.mrf.mxu0
    %3546 = vmatprep.mubr.f32.mxu0 0.0
    %3547 = vmatmul.mubr.f32.gmra.mxu0 %v3460
    %v3548 = vpop.f32.mrf.mxu0
    %v3549 = vadd.f32 0.0, %v3548
    %v3550 = vpop.f32.mrf.mxu0
    %3551 = vmatprep.mubr.f32.mxu0 0.0
    %3552 = vmatmul.mubr.f32.gmra.mxu0 %v3463
    %v3553 = vpop.f32.mrf.mxu0
    %v3554 = vadd.f32 0.0, %v3553
    %v3555 = vpop.f32.mrf.mxu0
    %3556 = vdwg.mxu0
    %3562 = vrot.lane.b32.xlu0 %v2922, 8
    %v3563 = vpop.permute.xlu0 %3562
    %3564 = vrot.lane.b32.xlu0 %v2927, 8
    %v3565 = vpop.permute.xlu0 %3564
    %3566 = vrot.lane.b32.xlu0 %v2932, 8
    %v3567 = vpop.permute.xlu0 %3566
    %3568 = vrot.lane.b32.xlu0 %v2937, 8
    %v3569 = vpop.permute.xlu0 %3568
    %3570 = vrot.lane.b32.xlu0 %v2942, 8
    %v3571 = vpop.permute.xlu0 %3570
    %3582 = vrot.lane.b32.xlu0 %v3228, 16
    %v3583 = vpop.permute.xlu0 %3582
    %3584 = vrot.lane.b32.xlu0 %v3233, 16
    %v3585 = vpop.permute.xlu0 %3584
    %3586 = vrot.lane.b32.xlu0 %v3238, 16
    %v3587 = vpop.permute.xlu0 %3586
    %3588 = vrot.lane.b32.xlu0 %v3243, 16
    %v3589 = vpop.permute.xlu0 %3588
    %3590 = vrot.lane.b32.xlu0 %v3248, 16
    %v3591 = vpop.permute.xlu0 %3590
    %3602 = vrot.lane.b32.xlu0 %v3534, 24
    %v3603 = vpop.permute.xlu0 %3602
    %3604 = vrot.lane.b32.xlu0 %v3539, 24
    %v3605 = vpop.permute.xlu0 %3604
    %3606 = vrot.lane.b32.xlu0 %v3544, 24
    %v3607 = vpop.permute.xlu0 %3606
    %3608 = vrot.lane.b32.xlu0 %v3549, 24
    %v3609 = vpop.permute.xlu0 %3608
    %3610 = vrot.lane.b32.xlu0 %v3554, 24
    %v3611 = vpop.permute.xlu0 %3610
    %v3617 = vsel %vm405, %v2616, %v3563
    %v3618 = vsel %vm405, %v2621, %v3565
    %v3619 = vsel %vm405, %v2626, %v3567
    %v3620 = vsel %vm405, %v2631, %v3569
    %v3621 = vsel %vm405, %v2636, %v3571
    %v3622 = vsel %vm1678, %v3617, %v3583
    %v3623 = vsel %vm1678, %v3618, %v3585
    %v3624 = vsel %vm1678, %v3619, %v3587
    %v3625 = vsel %vm1678, %v3620, %v3589
    %v3626 = vsel %vm1678, %v3621, %v3591
    %v3627 = vsel %vm1684, %v3622, %v3603
    %v3628 = vsel %vm1684, %v3623, %v3605
    %v3629 = vsel %vm1684, %v3624, %v3607
    %v3630 = vsel %vm1684, %v3625, %v3609
    %v3631 = vsel %vm1684, %v3626, %v3611
    %v3632 = vlaneseq
    %v3633 = vshrl.u32 %v3632, 7
    %v3634 = vsub.s32 1, %v3633
    %v3635 = vrot.slane %v262, %v3634
    %v3637 = vsel %vm284, %v3627, 0
    %v3640 = vsel %vm284, %v3628, 0
    %v3643 = vsel %vm284, %v3629, 0
    %v3646 = vsel %vm284, %v3630, 0
    %v3649 = vsel %vm284, %v3631, 0
    %3651 = vmatprep.subr.mxu0 0.0
    %3652 = vmatpush1.msra.mxu0 0.0
    %3653 = vmatprep.subr.mxu0 0.0
    %3654 = vmatpush1.msra.mxu0 0.0
    %3655 = vmatprep.subr.mxu0 0.0
    %3656 = vmatpush1.msra.mxu0 0.0
    %3657 = vmatprep.subr.mxu0 0.0
    %3658 = vmatpush1.msra.mxu0 0.0
    %3659 = vmatprep.subr.mxu0 0.0
    %3660 = vmatpush1.msra.mxu0 0.0
    %3661 = vmatprep.subr.mxu0 0.0
    %3662 = vmatpush1.msra.mxu0 0.0
    %3663 = vmatprep.subr.mxu0 0.0
    %3664 = vmatpush1.msra.mxu0 0.0
    %3665 = vmatprep.subr.mxu0 0.0
    %3666 = vmatpush1.msra.mxu0 0.0
    %3667 = vmatprep.subr.mxu0 0.0
    %3668 = vmatpush1.msra.mxu0 0.0
    %3669 = vmatprep.subr.mxu0 0.0
    %3670 = vmatpush1.msra.mxu0 0.0
    %3671 = vmatprep.subr.mxu0 0.0
    %3672 = vmatpush1.msra.mxu0 0.0
    %3673 = vmatprep.subr.mxu0 0.0
    %3674 = vmatpush1.msra.mxu0 0.0
    %3675 = vmatprep.subr.mxu0 0.0
    %3676 = vmatpush1.msra.mxu0 %v2220
    %3677 = vmatprep.subr.mxu0 0.0
    %3678 = vmatpush1.msra.mxu0 %v2219
    %3679 = vmatprep.subr.mxu0 0.0
    %3680 = vmatpush1.msra.mxu0 %v2218
    %3681 = vmatprep.subr.mxu0 0.0
    %3682 = vmatpush1.msra.mxu0 %v2217
    %3683 = vmatprep.subr.mxu0 0.0
    %3684 = vmatpush2.msra.mxu0 0.0
    %3685 = vmatprep.subr.mxu0 0.0
    %3686 = vmatpush2.msra.mxu0 0.0
    %3687 = vmatprep.subr.mxu0 0.0
    %3688 = vmatpush2.msra.mxu0 0.0
    %3689 = vmatprep.subr.mxu0 0.0
    %3690 = vmatpush2.msra.mxu0 0.0
    %3691 = vmatprep.subr.mxu0 0.0
    %3692 = vmatpush2.msra.mxu0 0.0
    %3693 = vmatprep.subr.mxu0 0.0
    %3694 = vmatpush2.msra.mxu0 0.0
    %3695 = vmatprep.subr.mxu0 0.0
    %3696 = vmatpush2.msra.mxu0 0.0
    %3697 = vmatprep.subr.mxu0 0.0
    %3698 = vmatpush2.msra.mxu0 0.0
    %3699 = vmatprep.subr.mxu0 0.0
    %3700 = vmatpush2.msra.mxu0 0.0
    %3701 = vmatprep.subr.mxu0 0.0
    %3702 = vmatpush2.msra.mxu0 0.0
    %3703 = vmatprep.subr.mxu0 0.0
    %3704 = vmatpush2.msra.mxu0 0.0
    %3705 = vmatprep.subr.mxu0 0.0
    %3706 = vmatpush2.msra.mxu0 0.0
    %3707 = vmatprep.subr.mxu0 0.0
    %3708 = vmatpush2.msra.mxu0 0.0
    %3709 = vmatprep.subr.mxu0 0.0
    %3710 = vmatpush2.msra.mxu0 0.0
    %3711 = vmatprep.subr.mxu0 0.0
    %3712 = vmatpush2.msra.mxu0 0.0
    %3713 = vmatprep.subr.mxu0 0.0
    %3714 = vmatpush2.msra.mxu0 0.0
    %3715 = vmatprep.mubr.f32.mxu0 0.0
    %3716 = vmatmul.mubr.f32.gmra.mxu0 %v3637
    %v3717 = vpop.f32.mrf.mxu0
    %v3718 = vadd.f32 %v3635, %v3717
    %v3719 = vpop.f32.mrf.mxu0
    %3720 = vmatprep.mubr.f32.mxu0 0.0
    %3721 = vmatmul.mubr.f32.gmra.mxu0 %v3640
    %v3722 = vpop.f32.mrf.mxu0
    %v3723 = vadd.f32 %v3635, %v3722
    %v3724 = vpop.f32.mrf.mxu0
    %3725 = vmatprep.mubr.f32.mxu0 0.0
    %3726 = vmatmul.mubr.f32.gmra.mxu0 %v3643
    %v3727 = vpop.f32.mrf.mxu0
    %v3728 = vadd.f32 %v3635, %v3727
    %v3729 = vpop.f32.mrf.mxu0
    %3730 = vmatprep.mubr.f32.mxu0 0.0
    %3731 = vmatmul.mubr.f32.gmra.mxu0 %v3646
    %v3732 = vpop.f32.mrf.mxu0
    %v3733 = vadd.f32 %v3635, %v3732
    %v3734 = vpop.f32.mrf.mxu0
    %3735 = vmatprep.mubr.f32.mxu0 0.0
    %3736 = vmatmul.mubr.f32.gmra.mxu0 %v3649
    %v3737 = vpop.f32.mrf.mxu0
    %v3738 = vadd.f32 %v3635, %v3737
    %v3739 = vpop.f32.mrf.mxu0
    %3740 = vdwg.mxu0
    %v3741 = vadd.f32 %v2208, %v3718
    %v3742 = vadd.f32 %v2209, %v3723
    %v3743 = vadd.f32 %v2210, %v3728
    %v3744 = vadd.f32 %v2211, %v3733
    %v3745 = vadd.f32 %v2212, %v3738
    %v3746 = vsel %vm284, %v3741, 0.0
    %3747 = vadd.xlane.f32.xlu0 %v3746
    %v3748 = vpop.xlane.xlu0 %3747
    %v3749 = vsel %vm284, %v3742, 0.0
    %3750 = vadd.xlane.f32.xlu0 %v3749
    %v3751 = vpop.xlane.xlu0 %3750
    %v3752 = vsel %vm284, %v3743, 0.0
    %3753 = vadd.xlane.f32.xlu0 %v3752
    %v3754 = vpop.xlane.xlu0 %3753
    %v3755 = vsel %vm284, %v3744, 0.0
    %3756 = vadd.xlane.f32.xlu0 %v3755
    %v3757 = vpop.xlane.xlu0 %3756
    %v3758 = vsel %vm1816, %v3745, 0.0
    %3759 = vadd.xlane.f32.xlu0 %v3758
    %v3760 = vpop.xlane.xlu0 %3759
    %v3761 = vmul.f32 %v3748, %v1820
    %v3762 = vmul.f32 %v3751, %v1820
    %v3763 = vmul.f32 %v3754, %v1820
    %v3764 = vmul.f32 %v3757, %v1820
    %v3765 = vmul.f32 %v3760, %v1820
    %v3766 = vsub.f32 %v3741, %v3761
    %v3767 = vsub.f32 %v3742, %v3762
    %v3768 = vsub.f32 %v3743, %v3763
    %v3769 = vsub.f32 %v3744, %v3764
    %v3770 = vsub.f32 %v3745, %v3765
    %v3771 = vmul.f32 %v3766, %v3766
    %v3772 = vmul.f32 %v3767, %v3767
    %v3773 = vmul.f32 %v3768, %v3768
    %v3774 = vmul.f32 %v3769, %v3769
    %v3775 = vmul.f32 %v3770, %v3770
    %v3776 = vsel %vm284, %v3771, 0.0
    %3777 = vadd.xlane.f32.xlu0 %v3776
    %v3778 = vpop.xlane.xlu0 %3777
    %v3779 = vsel %vm284, %v3772, 0.0
    %3780 = vadd.xlane.f32.xlu0 %v3779
    %v3781 = vpop.xlane.xlu0 %3780
    %v3782 = vsel %vm284, %v3773, 0.0
    %3783 = vadd.xlane.f32.xlu0 %v3782
    %v3784 = vpop.xlane.xlu0 %3783
    %v3785 = vsel %vm284, %v3774, 0.0
    %3786 = vadd.xlane.f32.xlu0 %v3785
    %v3787 = vpop.xlane.xlu0 %3786
    %v3788 = vsel %vm1816, %v3775, 0.0
    %3789 = vadd.xlane.f32.xlu0 %v3788
    %v3790 = vpop.xlane.xlu0 %3789
    %v3791 = vmul.f32 %v3778, %v1820
    %v3792 = vmul.f32 %v3781, %v1820
    %v3793 = vmul.f32 %v3784, %v1820
    %v3794 = vmul.f32 %v3787, %v1820
    %v3795 = vmul.f32 %v3790, %v1820
    %v3796 = vadd.f32 %v3791, 1e-05
    %v3797 = vadd.f32 %v3792, 1e-05
    %v3798 = vadd.f32 %v3793, 1e-05
    %v3799 = vadd.f32 %v3794, 1e-05
    %v3800 = vadd.f32 %v3795, 1e-05
    %v3801 = vrsqrt.pop %v3796
    %v3802 = vrsqrt.pop %v3797
    %v3803 = vrsqrt.pop %v3798
    %v3804 = vrsqrt.pop %v3799
    %v3805 = vrsqrt.pop %v3800
    %v3806 = vmul.f32 %v3766, %v3801
    %v3807 = vmul.f32 %v3767, %v3802
    %v3808 = vmul.f32 %v3768, %v3803
    %v3809 = vmul.f32 %v3769, %v3804
    %v3810 = vmul.f32 %v3770, %v3805
    %v3811 = vlaneseq
    %v3812 = vshrl.u32 %v3811, 7
    %v3813 = vsub.s32 2, %v3812
    %v3814 = vrot.slane %v262, %v3813
    %v3815 = vmul.f32 %v3806, %v3814
    %v3816 = vmul.f32 %v3807, %v3814
    %v3817 = vmul.f32 %v3808, %v3814
    %v3818 = vmul.f32 %v3809, %v3814
    %v3819 = vmul.f32 %v3810, %v3814
    %v3820 = vlaneseq
    %v3821 = vshrl.u32 %v3820, 7
    %v3822 = vsub.s32 3, %v3821
    %v3823 = vrot.slane %v262, %v3822
    %v3824 = vadd.f32 %v3815, %v3823
    %v3825 = vadd.f32 %v3816, %v3823
    %v3826 = vadd.f32 %v3817, %v3823
    %v3827 = vadd.f32 %v3818, %v3823
    %v3828 = vadd.f32 %v3819, %v3823
    %v3829 = vlaneseq
    %v3830 = vshrl.u32 %v3829, 7
    %v3831 = vsub.s32 4, %v3830
    %v3832 = vrot.slane %v262, %v3831
    %v3834 = vsel %vm284, %v3824, 0
    %v3837 = vsel %vm284, %v3825, 0
    %v3840 = vsel %vm284, %v3826, 0
    %v3843 = vsel %vm284, %v3827, 0
    %v3846 = vsel %vm284, %v3828, 0
    %3848 = vmatprep.subr.mxu0 0.0
    %3849 = vmatpush1.msra.mxu0 0.0
    %3850 = vmatprep.subr.mxu0 0.0
    %3851 = vmatpush1.msra.mxu0 0.0
    %3852 = vmatprep.subr.mxu0 0.0
    %3853 = vmatpush1.msra.mxu0 0.0
    %3854 = vmatprep.subr.mxu0 0.0
    %3855 = vmatpush1.msra.mxu0 0.0
    %3856 = vmatprep.subr.mxu0 0.0
    %3857 = vmatpush1.msra.mxu0 0.0
    %3858 = vmatprep.subr.mxu0 0.0
    %3859 = vmatpush1.msra.mxu0 0.0
    %3860 = vmatprep.subr.mxu0 0.0
    %3861 = vmatpush1.msra.mxu0 0.0
    %3862 = vmatprep.subr.mxu0 0.0
    %3863 = vmatpush1.msra.mxu0 0.0
    %3864 = vmatprep.subr.mxu0 0.0
    %3865 = vmatpush1.msra.mxu0 0.0
    %3866 = vmatprep.subr.mxu0 0.0
    %3867 = vmatpush1.msra.mxu0 0.0
    %3868 = vmatprep.subr.mxu0 0.0
    %3869 = vmatpush1.msra.mxu0 0.0
    %3870 = vmatprep.subr.mxu0 0.0
    %3871 = vmatpush1.msra.mxu0 0.0
    %3872 = vmatprep.subr.mxu0 0.0
    %3873 = vmatpush1.msra.mxu0 %v2224
    %3874 = vmatprep.subr.mxu0 0.0
    %3875 = vmatpush1.msra.mxu0 %v2223
    %3876 = vmatprep.subr.mxu0 0.0
    %3877 = vmatpush1.msra.mxu0 %v2222
    %3878 = vmatprep.subr.mxu0 0.0
    %3879 = vmatpush1.msra.mxu0 %v2221
    %3880 = vmatprep.subr.mxu0 0.0
    %3881 = vmatpush2.msra.mxu0 0.0
    %3882 = vmatprep.subr.mxu0 0.0
    %3883 = vmatpush2.msra.mxu0 0.0
    %3884 = vmatprep.subr.mxu0 0.0
    %3885 = vmatpush2.msra.mxu0 0.0
    %3886 = vmatprep.subr.mxu0 0.0
    %3887 = vmatpush2.msra.mxu0 0.0
    %3888 = vmatprep.subr.mxu0 0.0
    %3889 = vmatpush2.msra.mxu0 0.0
    %3890 = vmatprep.subr.mxu0 0.0
    %3891 = vmatpush2.msra.mxu0 0.0
    %3892 = vmatprep.subr.mxu0 0.0
    %3893 = vmatpush2.msra.mxu0 0.0
    %3894 = vmatprep.subr.mxu0 0.0
    %3895 = vmatpush2.msra.mxu0 0.0
    %3896 = vmatprep.subr.mxu0 0.0
    %3897 = vmatpush2.msra.mxu0 0.0
    %3898 = vmatprep.subr.mxu0 0.0
    %3899 = vmatpush2.msra.mxu0 0.0
    %3900 = vmatprep.subr.mxu0 0.0
    %3901 = vmatpush2.msra.mxu0 0.0
    %3902 = vmatprep.subr.mxu0 0.0
    %3903 = vmatpush2.msra.mxu0 0.0
    %3904 = vmatprep.subr.mxu0 0.0
    %3905 = vmatpush2.msra.mxu0 0.0
    %3906 = vmatprep.subr.mxu0 0.0
    %3907 = vmatpush2.msra.mxu0 0.0
    %3908 = vmatprep.subr.mxu0 0.0
    %3909 = vmatpush2.msra.mxu0 0.0
    %3910 = vmatprep.subr.mxu0 0.0
    %3911 = vmatpush2.msra.mxu0 0.0
    %3912 = vmatprep.mubr.f32.mxu0 0.0
    %3913 = vmatmul.mubr.f32.gmra.mxu0 %v3834
    %v3914 = vpop.f32.mrf.mxu0
    %v3915 = vadd.f32 %v3832, %v3914
    %v3916 = vpop.f32.mrf.mxu0
    %3917 = vmatprep.mubr.f32.mxu0 0.0
    %3918 = vmatmul.mubr.f32.gmra.mxu0 %v3837
    %v3919 = vpop.f32.mrf.mxu0
    %v3920 = vadd.f32 %v3832, %v3919
    %v3921 = vpop.f32.mrf.mxu0
    %3922 = vmatprep.mubr.f32.mxu0 0.0
    %3923 = vmatmul.mubr.f32.gmra.mxu0 %v3840
    %v3924 = vpop.f32.mrf.mxu0
    %v3925 = vadd.f32 %v3832, %v3924
    %v3926 = vpop.f32.mrf.mxu0
    %3927 = vmatprep.mubr.f32.mxu0 0.0
    %3928 = vmatmul.mubr.f32.gmra.mxu0 %v3843
    %v3929 = vpop.f32.mrf.mxu0
    %v3930 = vadd.f32 %v3832, %v3929
    %v3931 = vpop.f32.mrf.mxu0
    %3932 = vmatprep.mubr.f32.mxu0 0.0
    %3933 = vmatmul.mubr.f32.gmra.mxu0 %v3846
    %v3934 = vpop.f32.mrf.mxu0
    %v3935 = vadd.f32 %v3832, %v3934
    %v3936 = vpop.f32.mrf.mxu0
    %3937 = vdwg.mxu0
    %v3938 = vmax.f32 %v3915, 0.0
    %v3939 = vmax.f32 %v3920, 0.0
    %v3940 = vmax.f32 %v3925, 0.0
    %v3941 = vmax.f32 %v3930, 0.0
    %v3942 = vmax.f32 %v3935, 0.0
    %v3943 = vlaneseq
    %v3944 = vshrl.u32 %v3943, 7
    %v3945 = vsub.s32 5, %v3944
    %v3946 = vrot.slane %v262, %v3945
    %v3948 = vsel %vm2007, %v3938, 0
    %v3951 = vsel %vm2007, %v3939, 0
    %v3954 = vsel %vm2007, %v3940, 0
    %v3957 = vsel %vm2007, %v3941, 0
    %v3960 = vsel %vm2007, %v3942, 0
    %v3963 = vsel %vm2007, %v2225, 0
    %v3966 = vsel %vm2007, %v2226, 0
    %v3969 = vsel %vm2007, %v2227, 0
    %v3972 = vsel %vm2007, %v2228, 0
    %3974 = vmatprep.subr.mxu0 0.0
    %3975 = vmatpush1.xpose.msra.mxu0 0.0
    %3976 = vmatprep.subr.mxu0 0.0
    %3977 = vmatpush1.xpose.msra.mxu0 0.0
    %3978 = vmatprep.subr.mxu0 0.0
    %3979 = vmatpush1.xpose.msra.mxu0 0.0
    %3980 = vmatprep.subr.mxu0 0.0
    %3981 = vmatpush1.xpose.msra.mxu0 0.0
    %3982 = vmatprep.subr.mxu0 0.0
    %3983 = vmatpush1.xpose.msra.mxu0 0.0
    %3984 = vmatprep.subr.mxu0 0.0
    %3985 = vmatpush1.xpose.msra.mxu0 0.0
    %3986 = vmatprep.subr.mxu0 0.0
    %3987 = vmatpush1.xpose.msra.mxu0 0.0
    %3988 = vmatprep.subr.mxu0 0.0
    %3989 = vmatpush1.xpose.msra.mxu0 0.0
    %3990 = vmatprep.subr.mxu0 0.0
    %3991 = vmatpush1.xpose.msra.mxu0 0.0
    %3992 = vmatprep.subr.mxu0 0.0
    %3993 = vmatpush1.xpose.msra.mxu0 0.0
    %3994 = vmatprep.subr.mxu0 0.0
    %3995 = vmatpush1.xpose.msra.mxu0 0.0
    %3996 = vmatprep.subr.mxu0 0.0
    %3997 = vmatpush1.xpose.msra.mxu0 0.0
    %3998 = vmatprep.subr.mxu0 0.0
    %3999 = vmatpush1.xpose.msra.mxu0 %v3972
    %4000 = vmatprep.subr.mxu0 0.0
    %4001 = vmatpush1.xpose.msra.mxu0 %v3969
    %4002 = vmatprep.subr.mxu0 0.0
    %4003 = vmatpush1.xpose.msra.mxu0 %v3966
    %4004 = vmatprep.subr.mxu0 0.0
    %4005 = vmatpush1.xpose.msra.mxu0 %v3963
    %4006 = vmatprep.subr.mxu0 0.0
    %4007 = vmatpush2.xpose.msra.mxu0 0.0
    %4008 = vmatprep.subr.mxu0 0.0
    %4009 = vmatpush2.xpose.msra.mxu0 0.0
    %4010 = vmatprep.subr.mxu0 0.0
    %4011 = vmatpush2.xpose.msra.mxu0 0.0
    %4012 = vmatprep.subr.mxu0 0.0
    %4013 = vmatpush2.xpose.msra.mxu0 0.0
    %4014 = vmatprep.subr.mxu0 0.0
    %4015 = vmatpush2.xpose.msra.mxu0 0.0
    %4016 = vmatprep.subr.mxu0 0.0
    %4017 = vmatpush2.xpose.msra.mxu0 0.0
    %4018 = vmatprep.subr.mxu0 0.0
    %4019 = vmatpush2.xpose.msra.mxu0 0.0
    %4020 = vmatprep.subr.mxu0 0.0
    %4021 = vmatpush2.xpose.msra.mxu0 0.0
    %4022 = vmatprep.subr.mxu0 0.0
    %4023 = vmatpush2.xpose.msra.mxu0 0.0
    %4024 = vmatprep.subr.mxu0 0.0
    %4025 = vmatpush2.xpose.msra.mxu0 0.0
    %4026 = vmatprep.subr.mxu0 0.0
    %4027 = vmatpush2.xpose.msra.mxu0 0.0
    %4028 = vmatprep.subr.mxu0 0.0
    %4029 = vmatpush2.xpose.msra.mxu0 0.0
    %4030 = vmatprep.subr.mxu0 0.0
    %4031 = vmatpush2.xpose.msra.mxu0 0.0
    %4032 = vmatprep.subr.mxu0 0.0
    %4033 = vmatpush2.xpose.msra.mxu0 0.0
    %4034 = vmatprep.subr.mxu0 0.0
    %4035 = vmatpush2.xpose.msra.mxu0 0.0
    %4036 = vmatprep.subr.mxu0 0.0
    %4037 = vmatpush2.xpose.msra.mxu0 0.0
    %4038 = vmatprep.mubr.f32.mxu0 0.0
    %4039 = vmatmul.mubr.f32.gmra.mxu0 %v3948
    %v4040 = vpop.f32.mrf.mxu0
    %v4041 = vadd.f32 %v3946, %v4040
    %v4042 = vpop.f32.mrf.mxu0
    %4043 = vmatprep.mubr.f32.mxu0 0.0
    %4044 = vmatmul.mubr.f32.gmra.mxu0 %v3951
    %v4045 = vpop.f32.mrf.mxu0
    %v4046 = vpop.f32.mrf.mxu0
    %4047 = vmatprep.mubr.f32.mxu0 0.0
    %4048 = vmatmul.mubr.f32.gmra.mxu0 %v3954
    %v4049 = vpop.f32.mrf.mxu0
    %v4050 = vadd.f32 %v3946, %v4049
    %v4051 = vpop.f32.mrf.mxu0
    %4052 = vmatprep.mubr.f32.mxu0 0.0
    %4053 = vmatmul.mubr.f32.gmra.mxu0 %v3957
    %v4054 = vpop.f32.mrf.mxu0
    %v4055 = vadd.f32 %v3946, %v4054
    %v4056 = vpop.f32.mrf.mxu0
    %4057 = vmatprep.mubr.f32.mxu0 0.0
    %4058 = vmatmul.mubr.f32.gmra.mxu0 %v3960
    %v4059 = vpop.f32.mrf.mxu0
    %v4060 = vpop.f32.mrf.mxu0
    %4061 = vdwg.mxu0
    %v4062 = vadd.f32 %v3824, %v4041
    %v4063 = vadd.f32 %v3826, %v4050
    %v4064 = vadd.f32 %v3827, %v4055
    %v4065 = vsel %vm284, %v4062, 0.0
    %4066 = vadd.xlane.f32.xlu0 %v4065
    %v4067 = vpop.xlane.xlu0 %4066
    %v4068 = vsel %vm284, %v4063, 0.0
    %4069 = vadd.xlane.f32.xlu0 %v4068
    %v4070 = vpop.xlane.xlu0 %4069
    %v4071 = vsel %vm284, %v4064, 0.0
    %4072 = vadd.xlane.f32.xlu0 %v4071
    %v4073 = vpop.xlane.xlu0 %4072
    %v4074 = vmul.f32 %v4067, %v1820
    %v4075 = vmul.f32 %v4070, %v1820
    %v4076 = vmul.f32 %v4073, %v1820
    %v4077 = vsub.f32 %v4062, %v4074
    %v4078 = vsub.f32 %v4063, %v4075
    %v4079 = vsub.f32 %v4064, %v4076
    %v4080 = vmul.f32 %v4077, %v4077
    %v4081 = vmul.f32 %v4078, %v4078
    %v4082 = vmul.f32 %v4079, %v4079
    %v4083 = vsel %vm284, %v4080, 0.0
    %4084 = vadd.xlane.f32.xlu0 %v4083
    %v4085 = vpop.xlane.xlu0 %4084
    %v4086 = vsel %vm284, %v4081, 0.0
    %4087 = vadd.xlane.f32.xlu0 %v4086
    %v4088 = vpop.xlane.xlu0 %4087
    %v4089 = vsel %vm284, %v4082, 0.0
    %4090 = vadd.xlane.f32.xlu0 %v4089
    %v4091 = vpop.xlane.xlu0 %4090
    %v4092 = vmul.f32 %v4085, %v1820
    %v4093 = vmul.f32 %v4088, %v1820
    %v4094 = vmul.f32 %v4091, %v1820
    %v4095 = vadd.f32 %v4092, 1e-05
    %v4096 = vadd.f32 %v4093, 1e-05
    %v4097 = vadd.f32 %v4094, 1e-05
    %v4098 = vrsqrt.pop %v4095
    %v4099 = vrsqrt.pop %v4096
    %v4100 = vrsqrt.pop %v4097
    %v4101 = vmul.f32 %v4077, %v4098
    %v4102 = vmul.f32 %v4078, %v4099
    %v4103 = vmul.f32 %v4079, %v4100
    %v4104 = vlaneseq
    %v4105 = vshrl.u32 %v4104, 7
    %v4106 = vsub.s32 6, %v4105
    %v4107 = vrot.slane %v262, %v4106
    %v4108 = vmul.f32 %v4101, %v4107
    %v4109 = vmul.f32 %v4102, %v4107
    %v4110 = vmul.f32 %v4103, %v4107
    %v4111 = vlaneseq
    %v4112 = vshrl.u32 %v4111, 7
    %v4113 = vsub.s32 7, %v4112
    %v4114 = vrot.slane %v262, %v4113
    %v4115 = vadd.f32 %v4108, %v4114
    %v4116 = vadd.f32 %v4109, %v4114
    %v4117 = vadd.f32 %v4110, %v4114
    %v4118 = vld [vmem:[#allocation2 + $0x40] sm:$0xff]
    %v4119 = vld [vmem:[#allocation2 + $0x88] sm:$0xff]
    %v4120 = vld [vmem:[#allocation2 + $0xd0] sm:$0xff]
    %v4121 = vld [vmem:[#allocation2 + $0x118] sm:$0xff]
    %vm4124 = vcmask 1046528
    %v4125 = vrot.slane %v4116, 1
    %v4126 = vrot.slane %v4117, 1
    %v4127 = vsel %vm4124, %v4125, %v4126
    %v4128 = vlaneseq
    %v4129 = vshrl.u32 %v4128, 7
    %v4130 = vsub.s32 0, %v4129
    %v4131 = vrot.slane %v263, %v4130
    %v4133 = vsel %vm284, %v4115, 0
    %v4135 = vsel %vm284, %v4127, 0
    %4137 = vmatprep.subr.mxu0 0.0
    %4138 = vmatpush1.msra.mxu0 0.0
    %4139 = vmatprep.subr.mxu0 0.0
    %4140 = vmatpush1.msra.mxu0 0.0
    %4141 = vmatprep.subr.mxu0 0.0
    %4142 = vmatpush1.msra.mxu0 0.0
    %4143 = vmatprep.subr.mxu0 0.0
    %4144 = vmatpush1.msra.mxu0 0.0
    %4145 = vmatprep.subr.mxu0 0.0
    %4146 = vmatpush1.msra.mxu0 0.0
    %4147 = vmatprep.subr.mxu0 0.0
    %4148 = vmatpush1.msra.mxu0 0.0
    %4149 = vmatprep.subr.mxu0 0.0
    %4150 = vmatpush1.msra.mxu0 0.0
    %4151 = vmatprep.subr.mxu0 0.0
    %4152 = vmatpush1.msra.mxu0 0.0
    %4153 = vmatprep.subr.mxu0 0.0
    %4154 = vmatpush1.msra.mxu0 0.0
    %4155 = vmatprep.subr.mxu0 0.0
    %4156 = vmatpush1.msra.mxu0 0.0
    %4157 = vmatprep.subr.mxu0 0.0
    %4158 = vmatpush1.msra.mxu0 0.0
    %4159 = vmatprep.subr.mxu0 0.0
    %4160 = vmatpush1.msra.mxu0 0.0
    %4161 = vmatprep.subr.mxu0 0.0
    %4162 = vmatpush1.msra.mxu0 %v4121
    %4163 = vmatprep.subr.mxu0 0.0
    %4164 = vmatpush1.msra.mxu0 %v4120
    %4165 = vmatprep.subr.mxu0 0.0
    %4166 = vmatpush1.msra.mxu0 %v4119
    %4167 = vmatprep.subr.mxu0 0.0
    %4168 = vmatpush1.msra.mxu0 %v4118
    %4169 = vmatprep.subr.mxu0 0.0
    %4170 = vmatpush2.msra.mxu0 0.0
    %4171 = vmatprep.subr.mxu0 0.0
    %4172 = vmatpush2.msra.mxu0 0.0
    %4173 = vmatprep.subr.mxu0 0.0
    %4174 = vmatpush2.msra.mxu0 0.0
    %4175 = vmatprep.subr.mxu0 0.0
    %4176 = vmatpush2.msra.mxu0 0.0
    %4177 = vmatprep.subr.mxu0 0.0
    %4178 = vmatpush2.msra.mxu0 0.0
    %4179 = vmatprep.subr.mxu0 0.0
    %4180 = vmatpush2.msra.mxu0 0.0
    %4181 = vmatprep.subr.mxu0 0.0
    %4182 = vmatpush2.msra.mxu0 0.0
    %4183 = vmatprep.subr.mxu0 0.0
    %4184 = vmatpush2.msra.mxu0 0.0
    %4185 = vmatprep.subr.mxu0 0.0
    %4186 = vmatpush2.msra.mxu0 0.0
    %4187 = vmatprep.subr.mxu0 0.0
    %4188 = vmatpush2.msra.mxu0 0.0
    %4189 = vmatprep.subr.mxu0 0.0
    %4190 = vmatpush2.msra.mxu0 0.0
    %4191 = vmatprep.subr.mxu0 0.0
    %4192 = vmatpush2.msra.mxu0 0.0
    %4193 = vmatprep.subr.mxu0 0.0
    %4194 = vmatpush2.msra.mxu0 0.0
    %4195 = vmatprep.subr.mxu0 0.0
    %4196 = vmatpush2.msra.mxu0 0.0
    %4197 = vmatprep.subr.mxu0 0.0
    %4198 = vmatpush2.msra.mxu0 0.0
    %4199 = vmatprep.subr.mxu0 0.0
    %4200 = vmatpush2.msra.mxu0 0.0
    %4201 = vmatprep.mubr.f32.mxu0 0.0
    %4202 = vmatmul.mubr.f32.gmra.mxu0 %v4133
    %v4203 = vpop.f32.mrf.mxu0
    %v4204 = vadd.f32 %v4131, %v4203
    %v4205 = vpop.f32.mrf.mxu0
    %4206 = vmatprep.mubr.f32.mxu0 0.0
    %4207 = vmatmul.mubr.f32.gmra.mxu0 %v4135
    %v4208 = vpop.f32.mrf.mxu0
    %v4209 = vadd.f32 %v4131, %v4208
    %v4210 = vpop.f32.mrf.mxu0
    %4211 = vdwg.mxu0
    %4212 = vst [vmem:[#allocation5] sm:$0xff] %v4204
    %4213 = vst [vmem:[#allocation5 + $0x8] sm:$0xff] %v4209
    // Predicated region
    $region26: #{hangman_forward.1} parent=1 // pred_check
      _
    $region27: #{hangman_forward.1} parent=1 // pred_check_branch
      %4215 = sbr.rel (0) target = $region29
    $region28: #{hangman_forward.1} parent=1 // pred_region
      %s4217 = ssub.s32 256, 256
      %4218 = vsyncadd [#allocation4], %s4217
      %s4219 = sshll.u32 [#allocation5], 4
      %s4220 = int_to_ptr.vmem [resolvable:$true] %s4219
      %4225 = dma.vmem_to_hbm [thread:$0]  %s4220, 256, %s5, [#allocation4], 128, 128, 8
    $region29: #{hangman_forward.1} parent=1 // pred_fallthru
      _
    // Predicated region
    $region30: #{hangman_forward.1} parent=1 // pred_check
      _
    $region31: #{hangman_forward.1} parent=1 // pred_check_branch
      %4227 = sbr.rel (0) target = $region33
    $region32: #{hangman_forward.1} parent=1 // pred_region
      %4228 = dma.done [#allocation4], 256
    $region33: #{hangman_forward.1} parent=1 // pred_fallthru
      _
    %4229 = vsyncpa [#allocation3], 1
    %4230 = vsyncpa [#allocation4], 1

</llo_original>
